<compile_context>
chip_gen: v7x
topology: tpu7x:2x2x1
jax: 0.10.0
libtpu: 0.0.40
codegen_flags: <defaults>
</compile_context>

<pallas_src>
import functools

import jax
import jax.numpy as jnp
from jax.experimental import pallas as pl
from jax.experimental.pallas import tpu as pltpu

EPS = 1e-5
LANE = 128  # pad all channel dims to a multiple of the 128-lane vreg width


# ----------------------------------------------------------------------------
# Fused SEBottleneck kernel (one grid step == `Nb` batch samples)
# ----------------------------------------------------------------------------
def _se_bottleneck_kernel(*refs, H, W, Hout, Wout, stride, compute_dtype,
                          has_downsample):
    if has_downsample:
        (x_ref, w1_ref, b1_ref, w2_ref, b2_ref, w3_ref, b3_ref,
         wd_ref, bd_ref, wf1_ref, bf1_ref, wf2_ref, bf2_ref,
         o_ref, zpad_ref) = refs
    else:
        (x_ref, w1_ref, b1_ref, w2_ref, b2_ref, w3_ref, b3_ref,
         wf1_ref, bf1_ref, wf2_ref, bf2_ref, o_ref, zpad_ref) = refs
        wd_ref = bd_ref = None

    f32 = jnp.float32
    cd = compute_dtype
    Nb, _, _, Cin = x_ref.shape
    Pp = w1_ref.shape[-1]          # padded `planes`
    Op = w3_ref.shape[-1]          # padded `out_planes`
    M1 = Nb * H * W
    M2 = Hout * Wout
    Mo = Nb * M2
    zdt = zpad_ref.dtype

    def sds(start, size):          # conv-stride slice helper
        if stride == 1:
            return pl.ds(start, size)
        return pl.ds(start, size, stride=stride)

    # ---- conv_bn1 : 1x1 conv (BN folded into weights) + ReLU ----------------
    x4 = x_ref[...]                                        # (Nb, H, W, Cin) f32
    x2d = x4.reshape(M1, Cin).astype(cd)
    z1 = jnp.dot(x2d, w1_ref[...], preferred_element_type=f32) + b1_ref[...]
    z1 = jnp.maximum(z1, 0.0)                              # (M1, Pp) f32

    # spatially zero-padded copy of z1 for the 3x3 conv: zero ONLY the 1-pixel
    # halo (interior is fully overwritten every step); scratch is in `cd`.
    zpad_ref[:, pl.ds(0, 1), :, :] = jnp.zeros((Nb, 1, W + 2, Pp), zdt)
    zpad_ref[:, pl.ds(H + 1, 1), :, :] = jnp.zeros((Nb, 1, W + 2, Pp), zdt)
    zpad_ref[:, :, pl.ds(0, 1), :] = jnp.zeros((Nb, H + 2, 1, Pp), zdt)
    zpad_ref[:, :, pl.ds(W + 1, 1), :] = jnp.zeros((Nb, H + 2, 1, Pp), zdt)
    zpad_ref[:, pl.ds(1, H), pl.ds(1, W), :] = (
        z1.reshape(Nb, H, W, Pp).astype(zdt))

    # ---- conv_bn2 : 3x3 stride-s conv as ONE K=9*Pp im2col matmul + ReLU ----
    taps = []
    for kh in range(3):
        for kw in range(3):
            t = zpad_ref[:, sds(kh, Hout), sds(kw, Wout), :]  # (Nb,Hout,Wout,Pp)
            taps.append(t.reshape(Mo, Pp))
    im2col = jnp.concatenate(taps, axis=-1)                   # (Mo, 9*Pp)
    z2 = jnp.dot(im2col, w2_ref[...], preferred_element_type=f32) + b2_ref[...]
    z2 = jnp.maximum(z2, 0.0).astype(cd)                      # (Mo, Pp)

    # ---- conv_bn3 : 1x1 conv + folded BN (no ReLU) --------------------------
    z3 = jnp.dot(z2, w3_ref[...], preferred_element_type=f32) + b3_ref[...]

    # ---- residual branch ----------------------------------------------------
    if has_downsample:
        if stride == 1:
            xr = x2d
        else:                       # strided read straight from the x block
            xr = x_ref[:, sds(0, Hout), sds(0, Wout), :]
            xr = xr.reshape(Mo, Cin).astype(cd)
        res = jnp.dot(xr, wd_ref[...], preferred_element_type=f32) + bd_ref[...]
    else:
        # identity residual: no matmul; lane-pad x to Op if needed
        res = x4.reshape(Mo, Cin)                              # f32
        if Cin < Op:
            res = jnp.concatenate(
                [res, jnp.zeros((Mo, Op - Cin), f32)], axis=-1)

    # ---- per-sample SE (avg pool -> fc1 -> ReLU -> fc2 -> sigmoid),
    #      channel rescale, residual add, final ReLU --------------------------
    for n in range(Nb):
        sl = slice(n * M2, (n + 1) * M2)
        z3_n = z3[sl]                                          # (M2, Op) f32
        pooled = jnp.mean(z3_n, axis=0, keepdims=True)         # (1, Op)
        h = jnp.dot(pooled.astype(cd), wf1_ref[...],
                    preferred_element_type=f32) + bf1_ref[...]
        h = jnp.maximum(h, 0.0)
        g = jnp.dot(h.astype(cd), wf2_ref[...],
                    preferred_element_type=f32) + bf2_ref[...]
        g = jax.nn.sigmoid(g)                                  # (1, Op)
        o_ref[n] = jnp.maximum(z3_n * g + res[sl], 0.0).astype(o_ref.dtype)


# ----------------------------------------------------------------------------
# Wrapper: fold BN, pad channels to lane width, launch the fused kernel
# ----------------------------------------------------------------------------
def _round_up(v, m):
    return ((v + m - 1) // m) * m


def _fold_bn(w, bn):
    gamma, beta, mean, var = bn
    s = gamma * jax.lax.rsqrt(var + EPS)
    return w * s, beta - mean * s           # s broadcasts over output channels


def _pad2(a, rows, cols):
    return jnp.pad(a, ((0, rows - a.shape[0]), (0, cols - a.shape[1])))


def se_bottleneck_forward_nhwc(x, p, stride, is_downsample,
                               compute_dtype=jnp.bfloat16, out_dtype=None,
                               batch_block=None):
    """x: (N, H, W, Cin) float; returns (N, Hout, Wout, Cout)."""
    x = x.astype(jnp.float32)
    N, H, W, Cin = x.shape
    planes = p["w1"].shape[-1]
    Cout = p["w3"].shape[-1]
    red = p["wf1"].shape[-1]
    Hout = (H + 2 - 3) // stride + 1
    Wout = (W + 2 - 3) // stride + 1
    HW, M2 = H * W, Hout * Wout

    Pp = _round_up(planes, LANE)
    Op = _round_up(Cout, LANE)
    Rp = _round_up(red, LANE)
    cd = compute_dtype
    out_dtype = x.dtype if out_dtype is None else out_dtype

    # batch packing: raise matmul M toward ~512 rows for small spatial extents
    if batch_block is None:
        target = max(1, -(-512 // HW))          # ceil(512 / HW)
        nb = min(N, target)
        while N % nb:                           # largest divisor of N <= target
            nb -= 1
        batch_block = nb
    Nb = batch_block
    assert N % Nb == 0, "batch_block must divide the batch size"

    # --- one-time weight transforms: fold BN scale, pad channels, cast ------
    w1, b1 = _fold_bn(p["w1"].reshape(Cin, planes), p["bn1"])
    w1 = _pad2(w1, Cin, Pp).astype(cd)
    b1 = _pad2(b1.reshape(1, planes), 1, Pp)

    w2, b2 = _fold_bn(p["w2"].reshape(9, planes, planes), p["bn2"])
    w2 = jnp.pad(w2, ((0, 0), (0, Pp - planes), (0, Pp - planes)))
    w2 = w2.reshape(9 * Pp, Pp).astype(cd)      # row order = (kh*3+kw)*Pp + cin
    b2 = _pad2(b2.reshape(1, planes), 1, Pp)

    w3, b3 = _fold_bn(p["w3"].reshape(planes, Cout), p["bn3"])
    w3 = _pad2(w3, Pp, Op).astype(cd)
    b3 = _pad2(b3.reshape(1, Cout), 1, Op)

    wf1 = _pad2(p["wf1"], Op, Rp).astype(cd)
    bf1 = _pad2(p["bf1"].reshape(1, red), 1, Rp)
    wf2 = _pad2(p["wf2"], Rp, Op).astype(cd)
    bf2 = _pad2(p["bf2"].reshape(1, Cout), 1, Op)

    in_arrays = [x, w1, b1, w2, b2, w3, b3]
    in_specs = [
        pl.BlockSpec((Nb, H, W, Cin), lambda b: (b, 0, 0, 0)),
        pl.BlockSpec((Cin, Pp), lambda b: (0, 0)),
        pl.BlockSpec((1, Pp), lambda b: (0, 0)),
        pl.BlockSpec((9 * Pp, Pp), lambda b: (0, 0)),
        pl.BlockSpec((1, Pp), lambda b: (0, 0)),
        pl.BlockSpec((Pp, Op), lambda b: (0, 0)),
        pl.BlockSpec((1, Op), lambda b: (0, 0)),
    ]
    if is_downsample:
        wd, bd = _fold_bn(p["wd"].reshape(Cin, Cout), p["bnd"])
        wd = _pad2(wd, Cin, Op).astype(cd)
        bd = _pad2(bd.reshape(1, Cout), 1, Op)
        in_arrays += [wd, bd]
        in_specs += [pl.BlockSpec((Cin, Op), lambda b: (0, 0)),
                     pl.BlockSpec((1, Op), lambda b: (0, 0))]
    else:
        assert stride == 1 and Cin == Cout, \
            "identity residual requires stride == 1 and in_planes == out_planes"
    in_arrays += [wf1, bf1, wf2, bf2]
    in_specs += [
        pl.BlockSpec((Op, Rp), lambda b: (0, 0)),
        pl.BlockSpec((1, Rp), lambda b: (0, 0)),
        pl.BlockSpec((Rp, Op), lambda b: (0, 0)),
        pl.BlockSpec((1, Op), lambda b: (0, 0)),
    ]

    kernel = functools.partial(
        _se_bottleneck_kernel, H=H, W=W, Hout=Hout, Wout=Wout, stride=stride,
        compute_dtype=cd, has_downsample=is_downsample)

    out = pl.pallas_call(
        kernel,
        out_shape=jax.ShapeDtypeStruct((N, M2, Op), out_dtype),
        grid_spec=pltpu.PrefetchScalarGridSpec(
            num_scalar_prefetch=0,
            grid=(N // Nb,),                  # batch-block axis ("parallel")
            in_specs=in_specs,
            out_specs=pl.BlockSpec((Nb, M2, Op), lambda b: (b, 0, 0)),
            scratch_shapes=[pltpu.VMEM((Nb, H + 2, W + 2, Pp), cd)],
        ),
        compiler_params=pltpu.CompilerParams(
            dimension_semantics=("parallel",),
            vmem_limit_bytes=32 * 1024 * 1024,
        ),
    )(*in_arrays)

    out = out.reshape(N, Hout, Wout, Op)
    if Op != Cout:                            # skipped when Cout is lane-aligned
        out = out[..., :Cout]
    return out


def se_bottleneck_forward(x_nchw, p, stride, is_downsample,
                          compute_dtype=jnp.bfloat16, out_dtype=None,
                          batch_block=None):
    y = se_bottleneck_forward_nhwc(
        jnp.transpose(x_nchw, (0, 2, 3, 1)), p, stride, is_downsample,
        compute_dtype=compute_dtype, out_dtype=out_dtype,
        batch_block=batch_block)
    return jnp.transpose(y, (0, 3, 1, 2))                      # NHWC -> NCHW


# ----------------------------------------------------------------------------
# Pure-JAX reference (correctness check)
# ----------------------------------------------------------------------------
def ref_forward(x_nchw, p, stride, is_downsample):
    x = jnp.transpose(x_nchw, (0, 2, 3, 1)).astype(jnp.float32)

    def convbn(inp, w, bn, strd, pad):
        y = jax.lax.conv_general_dilated(
            inp, w, (strd, strd), [(pad, pad), (pad, pad)],
            dimension_numbers=("NHWC", "HWIO", "NHWC"))
        g, b, m, v = bn
        return (y - m) / jnp.sqrt(v + EPS) * g + b

    z = jax.nn.relu(convbn(x, p["w1"], p["bn1"], 1, 0))
    z = jax.nn.relu(convbn(z, p["w2"], p["bn2"], stride, 1))
    z = convbn(z, p["w3"], p["bn3"], 1, 0)
    pooled = jnp.mean(z, axis=(1, 2))
    h = jax.nn.relu(pooled @ p["wf1"] + p["bf1"])
    s = jax.nn.sigmoid(h @ p["wf2"] + p["bf2"])
    z = z * s[:, None, None, :]
    res = convbn(x, p["wd"], p["bnd"], stride, 0) if is_downsample else x
    return jnp.transpose(jax.nn.relu(z + res), (0, 3, 1, 2))


# ----------------------------------------------------------------------------
# Deterministic parameters & run
# ----------------------------------------------------------------------------
def bn_params(k, c):
    k1, k2, k3, k4 = jax.random.split(k, 4)
    gamma = 1.0 + 0.1 * jax.random.normal(k1, (c,), jnp.float32)
    beta = 0.1 * jax.random.normal(k2, (c,), jnp.float32)
    mean = 0.1 * jax.random.normal(k3, (c,), jnp.float32)
    var = jax.random.uniform(k4, (c,), jnp.float32, minval=0.5, maxval=1.5)
    return (gamma, beta, mean, var)


def make_params(key, in_planes, planes, out_planes, reduction, is_downsample):
    keys = jax.random.split(key, 12)
    p = {
        "w1": 0.1 * jax.random.normal(keys[0], (1, 1, in_planes, planes), jnp.float32),
        "bn1": bn_params(keys[1], planes),
        "w2": 0.1 * jax.random.normal(keys[2], (3, 3, planes, planes), jnp.float32),
        "bn2": bn_params(keys[3], planes),
        "w3": 0.1 * jax.random.normal(keys[4], (1, 1, planes, out_planes), jnp.float32),
        "bn3": bn_params(keys[5], out_planes),
        "wf1": 0.1 * jax.random.normal(keys[6], (out_planes, reduction), jnp.float32),
        "bf1": 0.1 * jax.random.normal(keys[7], (reduction,), jnp.float32),
        "wf2": 0.1 * jax.random.normal(keys[8], (reduction, out_planes), jnp.float32),
        "bf2": 0.1 * jax.random.normal(keys[9], (out_planes,), jnp.float32),
    }
    if is_downsample:
        p["wd"] = 0.1 * jax.random.normal(keys[10], (1, 1, in_planes, out_planes), jnp.float32)
        p["bnd"] = bn_params(keys[11], out_planes)
    return p


if __name__ == "__main__":
    kA, kB, kx1, kx2 = jax.random.split(jax.random.PRNGKey(0), 4)

    # Config A: downsampling bottleneck (stride 2, 1x1 downsample branch)
    pA = make_params(kA, 32, 16, 64, 8, True)
    xA = jax.random.normal(kx1, (2, 32, 16, 16), jnp.float32)
    refA = ref_forward(xA, pA, stride=2, is_downsample=True)

    outA32 = jax.block_until_ready(
        se_bottleneck_forward(xA, pA, 2, True, compute_dtype=jnp.float32))
    assert outA32.shape == refA.shape
    assert jnp.allclose(outA32, refA, atol=2e-3, rtol=2e-3), \
        float(jnp.max(jnp.abs(outA32 - refA)))

    outAbf = jax.block_until_ready(
        se_bottleneck_forward(xA, pA, 2, True, compute_dtype=jnp.bfloat16))
    assert jnp.allclose(outAbf, refA, atol=5e-2, rtol=5e-2), \
        float(jnp.max(jnp.abs(outAbf - refA)))

    # Config B: identity-residual bottleneck (stride 1, no downsample)
    pB = make_params(kB, 64, 16, 64, 8, False)
    xB = jax.random.normal(kx2, (2, 64, 8, 8), jnp.float32)
    refB = ref_forward(xB, pB, stride=1, is_downsample=False)

    outB32 = jax.block_until_ready(
        se_bottleneck_forward(xB, pB, 1, False, compute_dtype=jnp.float32))
    assert jnp.allclose(outB32, refB, atol=2e-3, rtol=2e-3), \
        float(jnp.max(jnp.abs(outB32 - refB)))

    outBbf = jax.block_until_ready(
        se_bottleneck_forward(xB, pB, 1, False, compute_dtype=jnp.bfloat16))
    assert jnp.allclose(outBbf, refB, atol=5e-2, rtol=5e-2), \
        float(jnp.max(jnp.abs(outBbf - refB)))

    print("KERNEL_OK")
</pallas_src>

<mosaic_0001>
module attributes {stable_mosaic.version = 11 : i64} {
  func.func @_se_bottleneck_kernel(%arg0: i32, %arg1: memref<2x16x16x32xf32, #tpu.memory_space<vmem>>, %arg2: memref<32x128xf32, #tpu.memory_space<vmem>>, %arg3: memref<1x128xf32, #tpu.memory_space<vmem>>, %arg4: memref<1152x128xf32, #tpu.memory_space<vmem>>, %arg5: memref<1x128xf32, #tpu.memory_space<vmem>>, %arg6: memref<128x128xf32, #tpu.memory_space<vmem>>, %arg7: memref<1x128xf32, #tpu.memory_space<vmem>>, %arg8: memref<32x128xf32, #tpu.memory_space<vmem>>, %arg9: memref<1x128xf32, #tpu.memory_space<vmem>>, %arg10: memref<128x128xf32, #tpu.memory_space<vmem>>, %arg11: memref<1x128xf32, #tpu.memory_space<vmem>>, %arg12: memref<128x128xf32, #tpu.memory_space<vmem>>, %arg13: memref<1x128xf32, #tpu.memory_space<vmem>>, %arg14: memref<2x64x128xf32, #tpu.memory_space<vmem>>, %arg15: memref<2x18x18x128xf32, #tpu.memory_space<vmem>>) attributes {dimension_semantics = [#tpu.dimension_semantics<parallel>], iteration_bounds = array<i64: 1>, scalar_prefetch = 0 : i64, scratch_operands = 1 : i64, tpu.core_type = #tpu.core_type<tc>, window_params = [{transform_indices = @transform_0, window_bounds = array<i64: 2, 16, 16, 32>}, {pipeline_mode = #tpu.pipeline_mode<synchronous>, transform_indices = @transform_1, window_bounds = array<i64: 32, 128>}, {pipeline_mode = #tpu.pipeline_mode<synchronous>, transform_indices = @transform_2, window_bounds = array<i64: 1, 128>}, {pipeline_mode = #tpu.pipeline_mode<synchronous>, transform_indices = @transform_3, window_bounds = array<i64: 1152, 128>}, {pipeline_mode = #tpu.pipeline_mode<synchronous>, transform_indices = @transform_4, window_bounds = array<i64: 1, 128>}, {pipeline_mode = #tpu.pipeline_mode<synchronous>, transform_indices = @transform_5, window_bounds = array<i64: 128, 128>}, {pipeline_mode = #tpu.pipeline_mode<synchronous>, transform_indices = @transform_6, window_bounds = array<i64: 1, 128>}, {pipeline_mode = #tpu.pipeline_mode<synchronous>, transform_indices = @transform_7, window_bounds = array<i64: 32, 128>}, {pipeline_mode = #tpu.pipeline_mode<synchronous>, transform_indices = @transform_8, window_bounds = array<i64: 1, 128>}, {pipeline_mode = #tpu.pipeline_mode<synchronous>, transform_indices = @transform_9, window_bounds = array<i64: 128, 128>}, {pipeline_mode = #tpu.pipeline_mode<synchronous>, transform_indices = @transform_10, window_bounds = array<i64: 1, 128>}, {pipeline_mode = #tpu.pipeline_mode<synchronous>, transform_indices = @transform_11, window_bounds = array<i64: 128, 128>}, {pipeline_mode = #tpu.pipeline_mode<synchronous>, transform_indices = @transform_12, window_bounds = array<i64: 1, 128>}, {transform_indices = @transform_13, window_bounds = array<i64: 2, 64, 128>}]} {
    %c0 = arith.constant 0 : index
    %c0_0 = arith.constant 0 : index
    %c0_1 = arith.constant 0 : index
    %c0_2 = arith.constant 0 : index
    %0 = vector.load %arg1[%c0, %c0_0, %c0_1, %c0_2] : memref<2x16x16x32xf32, #tpu.memory_space<vmem>>, vector<2x16x16x32xf32>
    %1 = vector.shape_cast %0 : vector<2x16x16x32xf32> to vector<512x32xf32>
    %c0_3 = arith.constant 0 : index
    %c0_4 = arith.constant 0 : index
    %2 = vector.load %arg2[%c0_3, %c0_4] : memref<32x128xf32, #tpu.memory_space<vmem>>, vector<32x128xf32>
    %cst = arith.constant dense<0.000000e+00> : vector<512x128xf32>
    %3 = tpu.matmul %1, %2, %cst {dimension_numbers = #tpu.dot_dimension_numbers<[1], [0], [0], [1], [0, 0, 1, 1], [], []>} : vector<512x32xf32>, vector<32x128xf32>, vector<512x128xf32> -> vector<512x128xf32>
    %c0_5 = arith.constant 0 : index
    %c0_6 = arith.constant 0 : index
    %4 = vector.load %arg3[%c0_5, %c0_6] : memref<1x128xf32, #tpu.memory_space<vmem>>, vector<1x128xf32>
    %5 = vector.broadcast %4 : vector<1x128xf32> to vector<512x128xf32>
    %6 = arith.addf %3, %5 : vector<512x128xf32>
    %cst_7 = arith.constant 0.000000e+00 : f32
    %7 = vector.broadcast %cst_7 : f32 to vector<512x128xf32>
    %8 = arith.maximumf %6, %7 : vector<512x128xf32>
    %cst_8 = arith.constant 0.000000e+00 : f32
    %9 = vector.broadcast %cst_8 : f32 to vector<2x1x18x128xf32>
    %c0_9 = arith.constant 0 : index
    %c0_10 = arith.constant 0 : index
    %c0_11 = arith.constant 0 : index
    %c0_12 = arith.constant 0 : index
    %10 = vector.load %arg15[%c0_9, %c0_10, %c0_11, %c0_12] : memref<2x18x18x128xf32, #tpu.memory_space<vmem>>, vector<2x1x18x128xf32>
    tpu.vector_store %arg15[%c0_9, %c0_10, %c0_11, %c0_12], %9 {strides = array<i32>} : memref<2x18x18x128xf32, #tpu.memory_space<vmem>>, vector<2x1x18x128xf32>,
    %cst_13 = arith.constant 0.000000e+00 : f32
    %11 = vector.broadcast %cst_13 : f32 to vector<2x1x18x128xf32>
    %c0_14 = arith.constant 0 : index
    %c17 = arith.constant 17 : index
    %c0_15 = arith.constant 0 : index
    %c0_16 = arith.constant 0 : index
    %12 = vector.load %arg15[%c0_14, %c17, %c0_15, %c0_16] : memref<2x18x18x128xf32, #tpu.memory_space<vmem>>, vector<2x1x18x128xf32>
    tpu.vector_store %arg15[%c0_14, %c17, %c0_15, %c0_16], %11 {strides = array<i32>} : memref<2x18x18x128xf32, #tpu.memory_space<vmem>>, vector<2x1x18x128xf32>,
    %cst_17 = arith.constant 0.000000e+00 : f32
    %13 = vector.broadcast %cst_17 : f32 to vector<2x18x1x128xf32>
    %c0_18 = arith.constant 0 : index
    %c0_19 = arith.constant 0 : index
    %c0_20 = arith.constant 0 : index
    %c0_21 = arith.constant 0 : index
    %14 = vector.load %arg15[%c0_18, %c0_19, %c0_20, %c0_21] : memref<2x18x18x128xf32, #tpu.memory_space<vmem>>, vector<2x18x1x128xf32>
    tpu.vector_store %arg15[%c0_18, %c0_19, %c0_20, %c0_21], %13 {strides = array<i32>} : memref<2x18x18x128xf32, #tpu.memory_space<vmem>>, vector<2x18x1x128xf32>,
    %cst_22 = arith.constant 0.000000e+00 : f32
    %15 = vector.broadcast %cst_22 : f32 to vector<2x18x1x128xf32>
    %c0_23 = arith.constant 0 : index
    %c0_24 = arith.constant 0 : index
    %c17_25 = arith.constant 17 : index
    %c0_26 = arith.constant 0 : index
    %16 = vector.load %arg15[%c0_23, %c0_24, %c17_25, %c0_26] : memref<2x18x18x128xf32, #tpu.memory_space<vmem>>, vector<2x18x1x128xf32>
    tpu.vector_store %arg15[%c0_23, %c0_24, %c17_25, %c0_26], %15 {strides = array<i32>} : memref<2x18x18x128xf32, #tpu.memory_space<vmem>>, vector<2x18x1x128xf32>,
    %17 = vector.shape_cast %8 : vector<512x128xf32> to vector<2x16x16x128xf32>
    %c0_27 = arith.constant 0 : index
    %c1 = arith.constant 1 : index
    %c1_28 = arith.constant 1 : index
    %c0_29 = arith.constant 0 : index
    %18 = vector.load %arg15[%c0_27, %c1, %c1_28, %c0_29] : memref<2x18x18x128xf32, #tpu.memory_space<vmem>>, vector<2x16x16x128xf32>
    tpu.vector_store %arg15[%c0_27, %c1, %c1_28, %c0_29], %17 {strides = array<i32>} : memref<2x18x18x128xf32, #tpu.memory_space<vmem>>, vector<2x16x16x128xf32>,
    %c0_30 = arith.constant 0 : index
    %c0_31 = arith.constant 0 : index
    %c0_32 = arith.constant 0 : index
    %c0_33 = arith.constant 0 : index
    %19 = tpu.strided_load %arg15[%c0_30, %c0_31, %c0_32, %c0_33] {strides = array<i32: 1, 2, 2, 1>} : memref<2x18x18x128xf32, #tpu.memory_space<vmem>>, vector<2x8x8x128xf32>
    %20 = vector.shape_cast %19 : vector<2x8x8x128xf32> to vector<128x128xf32>
    %c0_34 = arith.constant 0 : index
    %c0_35 = arith.constant 0 : index
    %c1_36 = arith.constant 1 : index
    %c0_37 = arith.constant 0 : index
    %21 = tpu.strided_load %arg15[%c0_34, %c0_35, %c1_36, %c0_37] {strides = array<i32: 1, 2, 2, 1>} : memref<2x18x18x128xf32, #tpu.memory_space<vmem>>, vector<2x8x8x128xf32>
    %22 = vector.shape_cast %21 : vector<2x8x8x128xf32> to vector<128x128xf32>
    %c0_38 = arith.constant 0 : index
    %c0_39 = arith.constant 0 : index
    %c2 = arith.constant 2 : index
    %c0_40 = arith.constant 0 : index
    %23 = tpu.strided_load %arg15[%c0_38, %c0_39, %c2, %c0_40] {strides = array<i32: 1, 2, 2, 1>} : memref<2x18x18x128xf32, #tpu.memory_space<vmem>>, vector<2x8x8x128xf32>
    %24 = vector.shape_cast %23 : vector<2x8x8x128xf32> to vector<128x128xf32>
    %c0_41 = arith.constant 0 : index
    %c1_42 = arith.constant 1 : index
    %c0_43 = arith.constant 0 : index
    %c0_44 = arith.constant 0 : index
    %25 = tpu.strided_load %arg15[%c0_41, %c1_42, %c0_43, %c0_44] {strides = array<i32: 1, 2, 2, 1>} : memref<2x18x18x128xf32, #tpu.memory_space<vmem>>, vector<2x8x8x128xf32>
    %26 = vector.shape_cast %25 : vector<2x8x8x128xf32> to vector<128x128xf32>
    %c0_45 = arith.constant 0 : index
    %c1_46 = arith.constant 1 : index
    %c1_47 = arith.constant 1 : index
    %c0_48 = arith.constant 0 : index
    %27 = tpu.strided_load %arg15[%c0_45, %c1_46, %c1_47, %c0_48] {strides = array<i32: 1, 2, 2, 1>} : memref<2x18x18x128xf32, #tpu.memory_space<vmem>>, vector<2x8x8x128xf32>
    %28 = vector.shape_cast %27 : vector<2x8x8x128xf32> to vector<128x128xf32>
    %c0_49 = arith.constant 0 : index
    %c1_50 = arith.constant 1 : index
    %c2_51 = arith.constant 2 : index
    %c0_52 = arith.constant 0 : index
    %29 = tpu.strided_load %arg15[%c0_49, %c1_50, %c2_51, %c0_52] {strides = array<i32: 1, 2, 2, 1>} : memref<2x18x18x128xf32, #tpu.memory_space<vmem>>, vector<2x8x8x128xf32>
    %30 = vector.shape_cast %29 : vector<2x8x8x128xf32> to vector<128x128xf32>
    %c0_53 = arith.constant 0 : index
    %c2_54 = arith.constant 2 : index
    %c0_55 = arith.constant 0 : index
    %c0_56 = arith.constant 0 : index
    %31 = tpu.strided_load %arg15[%c0_53, %c2_54, %c0_55, %c0_56] {strides = array<i32: 1, 2, 2, 1>} : memref<2x18x18x128xf32, #tpu.memory_space<vmem>>, vector<2x8x8x128xf32>
    %32 = vector.shape_cast %31 : vector<2x8x8x128xf32> to vector<128x128xf32>
    %c0_57 = arith.constant 0 : index
    %c2_58 = arith.constant 2 : index
    %c1_59 = arith.constant 1 : index
    %c0_60 = arith.constant 0 : index
    %33 = tpu.strided_load %arg15[%c0_57, %c2_58, %c1_59, %c0_60] {strides = array<i32: 1, 2, 2, 1>} : memref<2x18x18x128xf32, #tpu.memory_space<vmem>>, vector<2x8x8x128xf32>
    %34 = vector.shape_cast %33 : vector<2x8x8x128xf32> to vector<128x128xf32>
    %c0_61 = arith.constant 0 : index
    %c2_62 = arith.constant 2 : index
    %c2_63 = arith.constant 2 : index
    %c0_64 = arith.constant 0 : index
    %35 = tpu.strided_load %arg15[%c0_61, %c2_62, %c2_63, %c0_64] {strides = array<i32: 1, 2, 2, 1>} : memref<2x18x18x128xf32, #tpu.memory_space<vmem>>, vector<2x8x8x128xf32>
    %36 = vector.shape_cast %35 : vector<2x8x8x128xf32> to vector<128x128xf32>
    %37 = tpu.concatenate %20, %22, %24, %26, %28, %30, %32, %34, %36 in 1 : vector<128x128xf32>, vector<128x128xf32>, vector<128x128xf32>, vector<128x128xf32>, vector<128x128xf32>, vector<128x128xf32>, vector<128x128xf32>, vector<128x128xf32>, vector<128x128xf32> -> vector<128x1152xf32>
    %c0_65 = arith.constant 0 : index
    %c0_66 = arith.constant 0 : index
    %38 = vector.load %arg4[%c0_65, %c0_66] : memref<1152x128xf32, #tpu.memory_space<vmem>>, vector<1152x128xf32>
    %cst_67 = arith.constant dense<0.000000e+00> : vector<128x128xf32>
    %39 = tpu.matmul %37, %38, %cst_67 {dimension_numbers = #tpu.dot_dimension_numbers<[1], [0], [0], [1], [0, 0, 1, 1], [], []>} : vector<128x1152xf32>, vector<1152x128xf32>, vector<128x128xf32> -> vector<128x128xf32>
    %c0_68 = arith.constant 0 : index
    %c0_69 = arith.constant 0 : index
    %40 = vector.load %arg5[%c0_68, %c0_69] : memref<1x128xf32, #tpu.memory_space<vmem>>, vector<1x128xf32>
    %41 = vector.broadcast %40 : vector<1x128xf32> to vector<128x128xf32>
    %42 = arith.addf %39, %41 : vector<128x128xf32>
    %cst_70 = arith.constant 0.000000e+00 : f32
    %43 = vector.broadcast %cst_70 : f32 to vector<128x128xf32>
    %44 = arith.maximumf %42, %43 : vector<128x128xf32>
    %c0_71 = arith.constant 0 : index
    %c0_72 = arith.constant 0 : index
    %45 = vector.load %arg6[%c0_71, %c0_72] : memref<128x128xf32, #tpu.memory_space<vmem>>, vector<128x128xf32>
    %cst_73 = arith.constant dense<0.000000e+00> : vector<128x128xf32>
    %46 = tpu.matmul %44, %45, %cst_73 {dimension_numbers = #tpu.dot_dimension_numbers<[1], [0], [0], [1], [0, 0, 1, 1], [], []>} : vector<128x128xf32>, vector<128x128xf32>, vector<128x128xf32> -> vector<128x128xf32>
    %c0_74 = arith.constant 0 : index
    %c0_75 = arith.constant 0 : index
    %47 = vector.load %arg7[%c0_74, %c0_75] : memref<1x128xf32, #tpu.memory_space<vmem>>, vector<1x128xf32>
    %48 = vector.broadcast %47 : vector<1x128xf32> to vector<128x128xf32>
    %49 = arith.addf %46, %48 : vector<128x128xf32>
    %c0_76 = arith.constant 0 : index
    %c0_77 = arith.constant 0 : index
    %c0_78 = arith.constant 0 : index
    %c0_79 = arith.constant 0 : index
    %50 = tpu.strided_load %arg1[%c0_76, %c0_77, %c0_78, %c0_79] {strides = array<i32: 1, 2, 2, 1>} : memref<2x16x16x32xf32, #tpu.memory_space<vmem>>, vector<2x8x8x32xf32>
    %51 = vector.shape_cast %50 : vector<2x8x8x32xf32> to vector<128x32xf32>
    %c0_80 = arith.constant 0 : index
    %c0_81 = arith.constant 0 : index
    %52 = vector.load %arg8[%c0_80, %c0_81] : memref<32x128xf32, #tpu.memory_space<vmem>>, vector<32x128xf32>
    %cst_82 = arith.constant dense<0.000000e+00> : vector<128x128xf32>
    %53 = tpu.matmul %51, %52, %cst_82 {dimension_numbers = #tpu.dot_dimension_numbers<[1], [0], [0], [1], [0, 0, 1, 1], [], []>} : vector<128x32xf32>, vector<32x128xf32>, vector<128x128xf32> -> vector<128x128xf32>
    %c0_83 = arith.constant 0 : index
    %c0_84 = arith.constant 0 : index
    %54 = vector.load %arg9[%c0_83, %c0_84] : memref<1x128xf32, #tpu.memory_space<vmem>>, vector<1x128xf32>
    %55 = vector.broadcast %54 : vector<1x128xf32> to vector<128x128xf32>
    %56 = arith.addf %53, %55 : vector<128x128xf32>
    %57 = vector.extract_strided_slice %49 {offsets = [0, 0], sizes = [64, 128], strides = [1, 1]} : vector<128x128xf32> to vector<64x128xf32>
    %cst_85 = arith.constant dense<0.000000e+00> : vector<128xf32>
    %58 = vector.multi_reduction <add>, %57, %cst_85 [0] : vector<64x128xf32> to vector<128xf32>
    %59 = vector.shape_cast %58 : vector<128xf32> to vector<1x128xf32>
    %cst_86 = arith.constant 6.400000e+01 : f32
    %60 = vector.broadcast %cst_86 : f32 to vector<1x128xf32>
    %61 = arith.divf %59, %60 : vector<1x128xf32>
    %c0_87 = arith.constant 0 : index
    %c0_88 = arith.constant 0 : index
    %62 = vector.load %arg10[%c0_87, %c0_88] : memref<128x128xf32, #tpu.memory_space<vmem>>, vector<128x128xf32>
    %cst_89 = arith.constant dense<0.000000e+00> : vector<1x128xf32>
    %63 = tpu.matmul %61, %62, %cst_89 {dimension_numbers = #tpu.dot_dimension_numbers<[1], [0], [0], [1], [0, 0, 1, 1], [], []>} : vector<1x128xf32>, vector<128x128xf32>, vector<1x128xf32> -> vector<1x128xf32>
    %c0_90 = arith.constant 0 : index
    %c0_91 = arith.constant 0 : index
    %64 = vector.load %arg11[%c0_90, %c0_91] : memref<1x128xf32, #tpu.memory_space<vmem>>, vector<1x128xf32>
    %65 = arith.addf %63, %64 : vector<1x128xf32>
    %cst_92 = arith.constant 0.000000e+00 : f32
    %66 = vector.broadcast %cst_92 : f32 to vector<1x128xf32>
    %67 = arith.maximumf %65, %66 : vector<1x128xf32>
    %c0_93 = arith.constant 0 : index
    %c0_94 = arith.constant 0 : index
    %68 = vector.load %arg12[%c0_93, %c0_94] : memref<128x128xf32, #tpu.memory_space<vmem>>, vector<128x128xf32>
    %cst_95 = arith.constant dense<0.000000e+00> : vector<1x128xf32>
    %69 = tpu.matmul %67, %68, %cst_95 {dimension_numbers = #tpu.dot_dimension_numbers<[1], [0], [0], [1], [0, 0, 1, 1], [], []>} : vector<1x128xf32>, vector<128x128xf32>, vector<1x128xf32> -> vector<1x128xf32>
    %c0_96 = arith.constant 0 : index
    %c0_97 = arith.constant 0 : index
    %70 = vector.load %arg13[%c0_96, %c0_97] : memref<1x128xf32, #tpu.memory_space<vmem>>, vector<1x128xf32>
    %71 = arith.addf %69, %70 : vector<1x128xf32>
    %72 = arith.negf %71 : vector<1x128xf32>
    %73 = math.exp %72 : vector<1x128xf32>
    %cst_98 = arith.constant 1.000000e+00 : f32
    %74 = vector.broadcast %cst_98 : f32 to vector<1x128xf32>
    %75 = arith.addf %74, %73 : vector<1x128xf32>
    %76 = arith.divf %74, %75 : vector<1x128xf32>
    %77 = vector.broadcast %76 : vector<1x128xf32> to vector<64x128xf32>
    %78 = arith.mulf %57, %77 : vector<64x128xf32>
    %79 = vector.extract_strided_slice %56 {offsets = [0, 0], sizes = [64, 128], strides = [1, 1]} : vector<128x128xf32> to vector<64x128xf32>
    %80 = arith.addf %78, %79 : vector<64x128xf32>
    %cst_99 = arith.constant 0.000000e+00 : f32
    %81 = vector.broadcast %cst_99 : f32 to vector<64x128xf32>
    %82 = arith.maximumf %80, %81 : vector<64x128xf32>
    %c0_100 = arith.constant 0 : index
    %c0_101 = arith.constant 0 : index
    %c0_102 = arith.constant 0 : index
    %83 = vector.load %arg14[%c0_100, %c0_101, %c0_102] : memref<2x64x128xf32, #tpu.memory_space<vmem>>, vector<1x64x128xf32>
    %84 = vector.shape_cast %83 : vector<1x64x128xf32> to vector<64x128xf32>
    %85 = vector.shape_cast %82 : vector<64x128xf32> to vector<1x64x128xf32>
    tpu.vector_store %arg14[%c0_100, %c0_101, %c0_102], %85 {strides = array<i32>} : memref<2x64x128xf32, #tpu.memory_space<vmem>>, vector<1x64x128xf32>,
    %86 = vector.extract_strided_slice %49 {offsets = [64, 0], sizes = [64, 128], strides = [1, 1]} : vector<128x128xf32> to vector<64x128xf32>
    %cst_103 = arith.constant dense<0.000000e+00> : vector<128xf32>
    %87 = vector.multi_reduction <add>, %86, %cst_103 [0] : vector<64x128xf32> to vector<128xf32>
    %88 = vector.shape_cast %87 : vector<128xf32> to vector<1x128xf32>
    %cst_104 = arith.constant 6.400000e+01 : f32
    %89 = vector.broadcast %cst_104 : f32 to vector<1x128xf32>
    %90 = arith.divf %88, %89 : vector<1x128xf32>
    %c0_105 = arith.constant 0 : index
    %c0_106 = arith.constant 0 : index
    %91 = vector.load %arg10[%c0_105, %c0_106] : memref<128x128xf32, #tpu.memory_space<vmem>>, vector<128x128xf32>
    %cst_107 = arith.constant dense<0.000000e+00> : vector<1x128xf32>
    %92 = tpu.matmul %90, %91, %cst_107 {dimension_numbers = #tpu.dot_dimension_numbers<[1], [0], [0], [1], [0, 0, 1, 1], [], []>} : vector<1x128xf32>, vector<128x128xf32>, vector<1x128xf32> -> vector<1x128xf32>
    %c0_108 = arith.constant 0 : index
    %c0_109 = arith.constant 0 : index
    %93 = vector.load %arg11[%c0_108, %c0_109] : memref<1x128xf32, #tpu.memory_space<vmem>>, vector<1x128xf32>
    %94 = arith.addf %92, %93 : vector<1x128xf32>
    %cst_110 = arith.constant 0.000000e+00 : f32
    %95 = vector.broadcast %cst_110 : f32 to vector<1x128xf32>
    %96 = arith.maximumf %94, %95 : vector<1x128xf32>
    %c0_111 = arith.constant 0 : index
    %c0_112 = arith.constant 0 : index
    %97 = vector.load %arg12[%c0_111, %c0_112] : memref<128x128xf32, #tpu.memory_space<vmem>>, vector<128x128xf32>
    %cst_113 = arith.constant dense<0.000000e+00> : vector<1x128xf32>
    %98 = tpu.matmul %96, %97, %cst_113 {dimension_numbers = #tpu.dot_dimension_numbers<[1], [0], [0], [1], [0, 0, 1, 1], [], []>} : vector<1x128xf32>, vector<128x128xf32>, vector<1x128xf32> -> vector<1x128xf32>
    %c0_114 = arith.constant 0 : index
    %c0_115 = arith.constant 0 : index
    %99 = vector.load %arg13[%c0_114, %c0_115] : memref<1x128xf32, #tpu.memory_space<vmem>>, vector<1x128xf32>
    %100 = arith.addf %98, %99 : vector<1x128xf32>
    %101 = arith.negf %100 : vector<1x128xf32>
    %102 = math.exp %101 : vector<1x128xf32>
    %cst_116 = arith.constant 1.000000e+00 : f32
    %103 = vector.broadcast %cst_116 : f32 to vector<1x128xf32>
    %104 = arith.addf %103, %102 : vector<1x128xf32>
    %105 = arith.divf %103, %104 : vector<1x128xf32>
    %106 = vector.broadcast %105 : vector<1x128xf32> to vector<64x128xf32>
    %107 = arith.mulf %86, %106 : vector<64x128xf32>
    %108 = vector.extract_strided_slice %56 {offsets = [64, 0], sizes = [64, 128], strides = [1, 1]} : vector<128x128xf32> to vector<64x128xf32>
    %109 = arith.addf %107, %108 : vector<64x128xf32>
    %cst_117 = arith.constant 0.000000e+00 : f32
    %110 = vector.broadcast %cst_117 : f32 to vector<64x128xf32>
    %111 = arith.maximumf %109, %110 : vector<64x128xf32>
    %c1_118 = arith.constant 1 : index
    %c0_119 = arith.constant 0 : index
    %c0_120 = arith.constant 0 : index
    %112 = vector.load %arg14[%c1_118, %c0_119, %c0_120] : memref<2x64x128xf32, #tpu.memory_space<vmem>>, vector<1x64x128xf32>
    %113 = vector.shape_cast %112 : vector<1x64x128xf32> to vector<64x128xf32>
    %114 = vector.shape_cast %111 : vector<64x128xf32> to vector<1x64x128xf32>
    tpu.vector_store %arg14[%c1_118, %c0_119, %c0_120], %114 {strides = array<i32>} : memref<2x64x128xf32, #tpu.memory_space<vmem>>, vector<1x64x128xf32>,
    return
  }
  func.func @transform_0(%arg0: i32) -> (i32, i32, i32, i32) {
    %c0_i32 = arith.constant 0 : i32
    %c0_i32_0 = arith.constant 0 : i32
    %c0_i32_1 = arith.constant 0 : i32
    %c0_i32_2 = arith.constant 0 : i32
    return %arg0, %c0_i32, %c0_i32_0, %c0_i32_1 : i32, i32, i32, i32
  }
  func.func @transform_1(%arg0: i32) -> (i32, i32) {
    %c0_i32 = arith.constant 0 : i32
    %c0_i32_0 = arith.constant 0 : i32
    %c0_i32_1 = arith.constant 0 : i32
    return %c0_i32, %c0_i32_0 : i32, i32
  }
  func.func @transform_2(%arg0: i32) -> (i32, i32) {
    %c0_i32 = arith.constant 0 : i32
    %c0_i32_0 = arith.constant 0 : i32
    %c0_i32_1 = arith.constant 0 : i32
    return %c0_i32, %c0_i32_0 : i32, i32
  }
  func.func @transform_3(%arg0: i32) -> (i32, i32) {
    %c0_i32 = arith.constant 0 : i32
    %c0_i32_0 = arith.constant 0 : i32
    %c0_i32_1 = arith.constant 0 : i32
    return %c0_i32, %c0_i32_0 : i32, i32
  }
  func.func @transform_4(%arg0: i32) -> (i32, i32) {
    %c0_i32 = arith.constant 0 : i32
    %c0_i32_0 = arith.constant 0 : i32
    %c0_i32_1 = arith.constant 0 : i32
    return %c0_i32, %c0_i32_0 : i32, i32
  }
  func.func @transform_5(%arg0: i32) -> (i32, i32) {
    %c0_i32 = arith.constant 0 : i32
    %c0_i32_0 = arith.constant 0 : i32
    %c0_i32_1 = arith.constant 0 : i32
    return %c0_i32, %c0_i32_0 : i32, i32
  }
  func.func @transform_6(%arg0: i32) -> (i32, i32) {
    %c0_i32 = arith.constant 0 : i32
    %c0_i32_0 = arith.constant 0 : i32
    %c0_i32_1 = arith.constant 0 : i32
    return %c0_i32, %c0_i32_0 : i32, i32
  }
  func.func @transform_7(%arg0: i32) -> (i32, i32) {
    %c0_i32 = arith.constant 0 : i32
    %c0_i32_0 = arith.constant 0 : i32
    %c0_i32_1 = arith.constant 0 : i32
    return %c0_i32, %c0_i32_0 : i32, i32
  }
  func.func @transform_8(%arg0: i32) -> (i32, i32) {
    %c0_i32 = arith.constant 0 : i32
    %c0_i32_0 = arith.constant 0 : i32
    %c0_i32_1 = arith.constant 0 : i32
    return %c0_i32, %c0_i32_0 : i32, i32
  }
  func.func @transform_9(%arg0: i32) -> (i32, i32) {
    %c0_i32 = arith.constant 0 : i32
    %c0_i32_0 = arith.constant 0 : i32
    %c0_i32_1 = arith.constant 0 : i32
    return %c0_i32, %c0_i32_0 : i32, i32
  }
  func.func @transform_10(%arg0: i32) -> (i32, i32) {
    %c0_i32 = arith.constant 0 : i32
    %c0_i32_0 = arith.constant 0 : i32
    %c0_i32_1 = arith.constant 0 : i32
    return %c0_i32, %c0_i32_0 : i32, i32
  }
  func.func @transform_11(%arg0: i32) -> (i32, i32) {
    %c0_i32 = arith.constant 0 : i32
    %c0_i32_0 = arith.constant 0 : i32
    %c0_i32_1 = arith.constant 0 : i32
    return %c0_i32, %c0_i32_0 : i32, i32
  }
  func.func @transform_12(%arg0: i32) -> (i32, i32) {
    %c0_i32 = arith.constant 0 : i32
    %c0_i32_0 = arith.constant 0 : i32
    %c0_i32_1 = arith.constant 0 : i32
    return %c0_i32, %c0_i32_0 : i32, i32
  }
  func.func @transform_13(%arg0: i32) -> (i32, i32, i32) {
    %c0_i32 = arith.constant 0 : i32
    %c0_i32_0 = arith.constant 0 : i32
    %c0_i32_1 = arith.constant 0 : i32
    return %arg0, %c0_i32, %c0_i32_0 : i32, i32, i32
  }
}

</mosaic_0001>

<llo_original>
// kernel: tpu_custom_call.1
$region0: #{tpu_custom_call.1}
  #allocation0 [shape = 'u32[]', space=smem, size = 0x4, offset = 0x4, fixed_abs, tag = 'smem constant byte address 0x4 - core index']
  #allocation1 [shape = 'u32[144,128]{1,0:T(1,128)}', space=vmem, size = 0x12000, scoped, tag = 'internal scratch']
  #allocation2 [shape = 'f32[2,18,18,128]{3,2,1,0:T(8,128)}', space=vmem, size = 0x6c000, scoped, tag = 'scratch operand']
  %s0 = inlined_call_operand.hbm [shape: f32[2,16,16,32], index: 0, kind: input, shape index: {}]
  %s1 = inlined_call_operand.hbm [shape: f32[32,128], index: 1, kind: input, shape index: {}]
  %s2 = inlined_call_operand.vmem [shape: f32[1,128], index: 2, kind: input, shape index: {}]
  %s3 = inlined_call_operand.hbm [shape: f32[1152,128], index: 3, kind: input, shape index: {}]
  %s4 = inlined_call_operand.vmem [shape: f32[1,128], index: 4, kind: input, shape index: {}]
  %s5 = inlined_call_operand.hbm [shape: f32[128,128], index: 5, kind: input, shape index: {}]
  %s6 = inlined_call_operand.vmem [shape: f32[1,128], index: 6, kind: input, shape index: {}]
  %s7 = inlined_call_operand.hbm [shape: f32[32,128], index: 7, kind: input, shape index: {}]
  %s8 = inlined_call_operand.vmem [shape: f32[1,128], index: 8, kind: input, shape index: {}]
  %s9 = inlined_call_operand.hbm [shape: f32[128,128], index: 9, kind: input, shape index: {}]
  %s10 = inlined_call_operand.vmem [shape: f32[1,128], index: 10, kind: input, shape index: {}]
  %s11 = inlined_call_operand.hbm [shape: f32[128,128], index: 11, kind: input, shape index: {}]
  %s12 = inlined_call_operand.vmem [shape: f32[1,128], index: 12, kind: input, shape index: {}]
  %s13 = inlined_call_operand.hbm [shape: f32[2,64,128], index: 13, kind: output, shape index: {}]
  %s14 = sld [smem:[#allocation0]]
  $region90: #{tpu_custom_call.1} parent=0
    _
  %s16 = ssub.s32 1, %s14
  %s17 = scalar_select 0, %s16, %s14
  $region1: #{tpu_custom_call.1} parent=0
    #allocation3 [shape = 'u8[262144]{0}', space=vmem, size = 0x40000, scoped, tag = 'input window, operand 0, single buffered']
    #allocation4 [shape = 's32[1]{0}', space=sflag, size = 0x4, scoped, tag = 'scoped memory for tpu_custom_call.1']
    #allocation5 [shape = 's32[1]{0}', space=sflag, size = 0x4, scoped, tag = 'scoped memory for tpu_custom_call.1']
    #allocation6 [shape = 'u8[16384]{0}', space=vmem, size = 0x4000, scoped, tag = 'input window, operand 1, single buffered']
    #allocation7 [shape = 's32[1]{0}', space=sflag, size = 0x4, scoped, tag = 'scoped memory for tpu_custom_call.1']
    #allocation8 [shape = 'u8[589824]{0}', space=vmem, size = 0x90000, scoped, tag = 'input window, operand 3, single buffered']
    #allocation9 [shape = 'u8[65536]{0}', space=vmem, size = 0x10000, scoped, tag = 'input window, operand 5, single buffered']
    #allocation10 [shape = 's32[1]{0}', space=sflag, size = 0x4, scoped, tag = 'scoped memory for tpu_custom_call.1']
    #allocation11 [shape = 'u8[16384]{0}', space=vmem, size = 0x4000, scoped, tag = 'input window, operand 7, single buffered']
    #allocation12 [shape = 'u8[65536]{0}', space=vmem, size = 0x10000, scoped, tag = 'input window, operand 9, single buffered']
    #allocation13 [shape = 's32[1]{0}', space=sflag, size = 0x4, scoped, tag = 'scoped memory for tpu_custom_call.1']
    #allocation14 [shape = 'u8[65536]{0}', space=vmem, size = 0x10000, scoped, tag = 'input window, operand 11, single buffered']
    #allocation15 [shape = 'u8[65536]{0}', space=vmem, size = 0x10000, scoped, tag = 'output window, operand 0, single buffered']
    %18 = vsyncpa [#allocation4], 0
    %19 = vsyncpa [#allocation7], 0
    %20 = vsyncpa [#allocation10], 0
    %21 = vsyncpa [#allocation13], 0
    %22 = vsyncpa [#allocation5], 0
    // Predicated region
    $region2: #{tpu_custom_call.1} parent=1 // pred_check
      _
    $region3: #{tpu_custom_call.1} parent=1 // pred_check_branch
      %24 = sbr.rel (0) target = $region5
    $region4: #{tpu_custom_call.1} parent=1 // pred_region
      %s26 = ssub.s32 8192, 8192
      %27 = vsyncadd [#allocation4], %s26
      %s28 = sshll.u32 [#allocation3], 4
      %s29 = int_to_ptr.vmem [resolvable:$true] %s28
      %34 = dma.hbm_to_vmem [thread:$0]  %s0, 8192, %s29, [#allocation4], 128, 128, 8
    $region5: #{tpu_custom_call.1} parent=1 // pred_fallthru
      _
    // Predicated region
    $region6: #{tpu_custom_call.1} parent=1 // pred_check
      _
    $region7: #{tpu_custom_call.1} parent=1 // pred_check_branch
      %36 = sbr.rel (0) target = $region9
    $region8: #{tpu_custom_call.1} parent=1 // pred_region
      %s38 = ssub.s32 512, 512
      %39 = vsyncadd [#allocation7], %s38
      %s40 = sshll.u32 [#allocation6], 4
      %s41 = int_to_ptr.vmem [resolvable:$true] %s40
      %46 = dma.hbm_to_vmem [thread:$0]  %s1, 512, %s41, [#allocation7], 128, 128, 8
    $region9: #{tpu_custom_call.1} parent=1 // pred_fallthru
      _
    // Predicated region
    $region10: #{tpu_custom_call.1} parent=1 // pred_check
      _
    $region11: #{tpu_custom_call.1} parent=1 // pred_check_branch
      %48 = sbr.rel (0) target = $region13
    $region12: #{tpu_custom_call.1} parent=1 // pred_region
      _
    $region13: #{tpu_custom_call.1} parent=1 // pred_fallthru
      _
    // Predicated region
    $region14: #{tpu_custom_call.1} parent=1 // pred_check
      _
    $region15: #{tpu_custom_call.1} parent=1 // pred_check_branch
      %50 = sbr.rel (0) target = $region17
    $region16: #{tpu_custom_call.1} parent=1 // pred_region
      %s52 = ssub.s32 18432, 18432
      %53 = vsyncadd [#allocation7], %s52
      %s54 = sshll.u32 [#allocation8], 4
      %s55 = int_to_ptr.vmem [resolvable:$true] %s54
      %60 = dma.hbm_to_vmem [thread:$0]  %s3, 18432, %s55, [#allocation7], 128, 128, 8
    $region17: #{tpu_custom_call.1} parent=1 // pred_fallthru
      _
    // Predicated region
    $region18: #{tpu_custom_call.1} parent=1 // pred_check
      _
    $region19: #{tpu_custom_call.1} parent=1 // pred_check_branch
      %62 = sbr.rel (0) target = $region21
    $region20: #{tpu_custom_call.1} parent=1 // pred_region
      _
    $region21: #{tpu_custom_call.1} parent=1 // pred_fallthru
      _
    // Predicated region
    $region22: #{tpu_custom_call.1} parent=1 // pred_check
      _
    $region23: #{tpu_custom_call.1} parent=1 // pred_check_branch
      %64 = sbr.rel (0) target = $region25
    $region24: #{tpu_custom_call.1} parent=1 // pred_region
      %s66 = ssub.s32 2048, 2048
      %67 = vsyncadd [#allocation10], %s66
      %s68 = sshll.u32 [#allocation9], 4
      %s69 = int_to_ptr.vmem [resolvable:$true] %s68
      %74 = dma.hbm_to_vmem [thread:$0]  %s5, 2048, %s69, [#allocation10], 128, 128, 8
    $region25: #{tpu_custom_call.1} parent=1 // pred_fallthru
      _
    // Predicated region
    $region26: #{tpu_custom_call.1} parent=1 // pred_check
      _
    $region27: #{tpu_custom_call.1} parent=1 // pred_check_branch
      %76 = sbr.rel (0) target = $region29
    $region28: #{tpu_custom_call.1} parent=1 // pred_region
      _
    $region29: #{tpu_custom_call.1} parent=1 // pred_fallthru
      _
    // Predicated region
    $region30: #{tpu_custom_call.1} parent=1 // pred_check
      _
    $region31: #{tpu_custom_call.1} parent=1 // pred_check_branch
      %78 = sbr.rel (0) target = $region33
    $region32: #{tpu_custom_call.1} parent=1 // pred_region
      %s80 = ssub.s32 512, 512
      %81 = vsyncadd [#allocation10], %s80
      %s82 = sshll.u32 [#allocation11], 4
      %s83 = int_to_ptr.vmem [resolvable:$true] %s82
      %88 = dma.hbm_to_vmem [thread:$0]  %s7, 512, %s83, [#allocation10], 128, 128, 8
    $region33: #{tpu_custom_call.1} parent=1 // pred_fallthru
      _
    // Predicated region
    $region34: #{tpu_custom_call.1} parent=1 // pred_check
      _
    $region35: #{tpu_custom_call.1} parent=1 // pred_check_branch
      %90 = sbr.rel (0) target = $region37
    $region36: #{tpu_custom_call.1} parent=1 // pred_region
      _
    $region37: #{tpu_custom_call.1} parent=1 // pred_fallthru
      _
    // Predicated region
    $region38: #{tpu_custom_call.1} parent=1 // pred_check
      _
    $region39: #{tpu_custom_call.1} parent=1 // pred_check_branch
      %92 = sbr.rel (0) target = $region41
    $region40: #{tpu_custom_call.1} parent=1 // pred_region
      %s94 = ssub.s32 2048, 2048
      %95 = vsyncadd [#allocation13], %s94
      %s96 = sshll.u32 [#allocation12], 4
      %s97 = int_to_ptr.vmem [resolvable:$true] %s96
      %102 = dma.hbm_to_vmem [thread:$0]  %s9, 2048, %s97, [#allocation13], 128, 128, 8
    $region41: #{tpu_custom_call.1} parent=1 // pred_fallthru
      _
    // Predicated region
    $region42: #{tpu_custom_call.1} parent=1 // pred_check
      _
    $region43: #{tpu_custom_call.1} parent=1 // pred_check_branch
      %104 = sbr.rel (0) target = $region45
    $region44: #{tpu_custom_call.1} parent=1 // pred_region
      _
    $region45: #{tpu_custom_call.1} parent=1 // pred_fallthru
      _
    // Predicated region
    $region46: #{tpu_custom_call.1} parent=1 // pred_check
      _
    $region47: #{tpu_custom_call.1} parent=1 // pred_check_branch
      %106 = sbr.rel (0) target = $region49
    $region48: #{tpu_custom_call.1} parent=1 // pred_region
      %s108 = ssub.s32 2048, 2048
      %109 = vsyncadd [#allocation13], %s108
      %s110 = sshll.u32 [#allocation14], 4
      %s111 = int_to_ptr.vmem [resolvable:$true] %s110
      %116 = dma.hbm_to_vmem [thread:$0]  %s11, 2048, %s111, [#allocation13], 128, 128, 8
    $region49: #{tpu_custom_call.1} parent=1 // pred_fallthru
      _
    // Predicated region
    $region50: #{tpu_custom_call.1} parent=1 // pred_check
      _
    $region51: #{tpu_custom_call.1} parent=1 // pred_check_branch
      %118 = sbr.rel (0) target = $region53
    $region52: #{tpu_custom_call.1} parent=1 // pred_region
      _
    $region53: #{tpu_custom_call.1} parent=1 // pred_fallthru
      _
    // Predicated region
    $region54: #{tpu_custom_call.1} parent=1 // pred_check
      _
    $region55: #{tpu_custom_call.1} parent=1 // pred_check_branch
      %120 = sbr.rel (0) target = $region57
    $region56: #{tpu_custom_call.1} parent=1 // pred_region
      %121 = dma.done [#allocation4], 8192
    $region57: #{tpu_custom_call.1} parent=1 // pred_fallthru
      _
    // Predicated region
    $region58: #{tpu_custom_call.1} parent=1 // pred_check
      _
    $region59: #{tpu_custom_call.1} parent=1 // pred_check_branch
      %123 = sbr.rel (0) target = $region61
    $region60: #{tpu_custom_call.1} parent=1 // pred_region
      %124 = dma.done [#allocation7], 512
    $region61: #{tpu_custom_call.1} parent=1 // pred_fallthru
      _
    // Predicated region
    $region62: #{tpu_custom_call.1} parent=1 // pred_check
      _
    $region63: #{tpu_custom_call.1} parent=1 // pred_check_branch
      %126 = sbr.rel (0) target = $region65
    $region64: #{tpu_custom_call.1} parent=1 // pred_region
      %127 = dma.done [#allocation7], 18432
    $region65: #{tpu_custom_call.1} parent=1 // pred_fallthru
      _
    // Predicated region
    $region66: #{tpu_custom_call.1} parent=1 // pred_check
      _
    $region67: #{tpu_custom_call.1} parent=1 // pred_check_branch
      %129 = sbr.rel (0) target = $region69
    $region68: #{tpu_custom_call.1} parent=1 // pred_region
      %130 = dma.done [#allocation10], 2048
    $region69: #{tpu_custom_call.1} parent=1 // pred_fallthru
      _
    // Predicated region
    $region70: #{tpu_custom_call.1} parent=1 // pred_check
      _
    $region71: #{tpu_custom_call.1} parent=1 // pred_check_branch
      %132 = sbr.rel (0) target = $region73
    $region72: #{tpu_custom_call.1} parent=1 // pred_region
      %133 = dma.done [#allocation10], 512
    $region73: #{tpu_custom_call.1} parent=1 // pred_fallthru
      _
    // Predicated region
    $region74: #{tpu_custom_call.1} parent=1 // pred_check
      _
    $region75: #{tpu_custom_call.1} parent=1 // pred_check_branch
      %135 = sbr.rel (0) target = $region77
    $region76: #{tpu_custom_call.1} parent=1 // pred_region
      %136 = dma.done [#allocation13], 2048
    $region77: #{tpu_custom_call.1} parent=1 // pred_fallthru
      _
    // Predicated region
    $region78: #{tpu_custom_call.1} parent=1 // pred_check
      _
    $region79: #{tpu_custom_call.1} parent=1 // pred_check_branch
      %138 = sbr.rel (0) target = $region81
    $region80: #{tpu_custom_call.1} parent=1 // pred_region
      %139 = dma.done [#allocation13], 2048
    $region81: #{tpu_custom_call.1} parent=1 // pred_fallthru
      _
    %v140 = vld [vmem:[#allocation3] sm:$0xff]
    %v141 = vld [vmem:[#allocation3 + $0x8] sm:$0xff]
    %v142 = vld [vmem:[#allocation3 + $0x10] sm:$0xff]
    %v143 = vld [vmem:[#allocation3 + $0x18] sm:$0xff]
    %v144 = vld [vmem:[#allocation3 + $0x20] sm:$0xff]
    %v145 = vld [vmem:[#allocation3 + $0x28] sm:$0xff]
    %v146 = vld [vmem:[#allocation3 + $0x30] sm:$0xff]
    %v147 = vld [vmem:[#allocation3 + $0x38] sm:$0xff]
    %v148 = vld [vmem:[#allocation3 + $0x40] sm:$0xff]
    %v149 = vld [vmem:[#allocation3 + $0x48] sm:$0xff]
    %v150 = vld [vmem:[#allocation3 + $0x50] sm:$0xff]
    %v151 = vld [vmem:[#allocation3 + $0x58] sm:$0xff]
    %v152 = vld [vmem:[#allocation3 + $0x60] sm:$0xff]
    %v153 = vld [vmem:[#allocation3 + $0x68] sm:$0xff]
    %v154 = vld [vmem:[#allocation3 + $0x70] sm:$0xff]
    %v155 = vld [vmem:[#allocation3 + $0x78] sm:$0xff]
    %v156 = vld [vmem:[#allocation3 + $0x80] sm:$0xff]
    %v157 = vld [vmem:[#allocation3 + $0x88] sm:$0xff]
    %v158 = vld [vmem:[#allocation3 + $0x90] sm:$0xff]
    %v159 = vld [vmem:[#allocation3 + $0x98] sm:$0xff]
    %v160 = vld [vmem:[#allocation3 + $0xa0] sm:$0xff]
    %v161 = vld [vmem:[#allocation3 + $0xa8] sm:$0xff]
    %v162 = vld [vmem:[#allocation3 + $0xb0] sm:$0xff]
    %v163 = vld [vmem:[#allocation3 + $0xb8] sm:$0xff]
    %v164 = vld [vmem:[#allocation3 + $0xc0] sm:$0xff]
    %v165 = vld [vmem:[#allocation3 + $0xc8] sm:$0xff]
    %v166 = vld [vmem:[#allocation3 + $0xd0] sm:$0xff]
    %v167 = vld [vmem:[#allocation3 + $0xd8] sm:$0xff]
    %v168 = vld [vmem:[#allocation3 + $0xe0] sm:$0xff]
    %v169 = vld [vmem:[#allocation3 + $0xe8] sm:$0xff]
    %v170 = vld [vmem:[#allocation3 + $0xf0] sm:$0xff]
    %v171 = vld [vmem:[#allocation3 + $0xf8] sm:$0xff]
    %v172 = vld [vmem:[#allocation3 + $0x100] sm:$0xff]
    %v173 = vld [vmem:[#allocation3 + $0x108] sm:$0xff]
    %v174 = vld [vmem:[#allocation3 + $0x110] sm:$0xff]
    %v175 = vld [vmem:[#allocation3 + $0x118] sm:$0xff]
    %v176 = vld [vmem:[#allocation3 + $0x120] sm:$0xff]
    %v177 = vld [vmem:[#allocation3 + $0x128] sm:$0xff]
    %v178 = vld [vmem:[#allocation3 + $0x130] sm:$0xff]
    %v179 = vld [vmem:[#allocation3 + $0x138] sm:$0xff]
    %v180 = vld [vmem:[#allocation3 + $0x140] sm:$0xff]
    %v181 = vld [vmem:[#allocation3 + $0x148] sm:$0xff]
    %v182 = vld [vmem:[#allocation3 + $0x150] sm:$0xff]
    %v183 = vld [vmem:[#allocation3 + $0x158] sm:$0xff]
    %v184 = vld [vmem:[#allocation3 + $0x160] sm:$0xff]
    %v185 = vld [vmem:[#allocation3 + $0x168] sm:$0xff]
    %v186 = vld [vmem:[#allocation3 + $0x170] sm:$0xff]
    %v187 = vld [vmem:[#allocation3 + $0x178] sm:$0xff]
    %v188 = vld [vmem:[#allocation3 + $0x180] sm:$0xff]
    %v189 = vld [vmem:[#allocation3 + $0x188] sm:$0xff]
    %v190 = vld [vmem:[#allocation3 + $0x190] sm:$0xff]
    %v191 = vld [vmem:[#allocation3 + $0x198] sm:$0xff]
    %v192 = vld [vmem:[#allocation3 + $0x1a0] sm:$0xff]
    %v193 = vld [vmem:[#allocation3 + $0x1a8] sm:$0xff]
    %v194 = vld [vmem:[#allocation3 + $0x1b0] sm:$0xff]
    %v195 = vld [vmem:[#allocation3 + $0x1b8] sm:$0xff]
    %v196 = vld [vmem:[#allocation3 + $0x1c0] sm:$0xff]
    %v197 = vld [vmem:[#allocation3 + $0x1c8] sm:$0xff]
    %v198 = vld [vmem:[#allocation3 + $0x1d0] sm:$0xff]
    %v199 = vld [vmem:[#allocation3 + $0x1d8] sm:$0xff]
    %v200 = vld [vmem:[#allocation3 + $0x1e0] sm:$0xff]
    %v201 = vld [vmem:[#allocation3 + $0x1e8] sm:$0xff]
    %v202 = vld [vmem:[#allocation3 + $0x1f0] sm:$0xff]
    %v203 = vld [vmem:[#allocation3 + $0x1f8] sm:$0xff]
    %v204 = vld [vmem:[#allocation6] sm:$0xff]
    %v205 = vld [vmem:[#allocation6 + $0x8] sm:$0xff]
    %v206 = vld [vmem:[#allocation6 + $0x10] sm:$0xff]
    %v207 = vld [vmem:[#allocation6 + $0x18] sm:$0xff]
    %v208 = vld [vmem:[%s2] sm:$0x1]
    %v210 = vlaneseq
    %v211 = vshrl.u32 %v210, 7
    %v212 = vsub.s32 0, %v211
    %v213 = vrot.slane %v208, %v212
    %vm215 = vcmask 261120
    %v217 = vsel %vm215, %v140, 0
    %v220 = vsel %vm215, %v141, 0
    %v223 = vsel %vm215, %v142, 0
    %v226 = vsel %vm215, %v143, 0
    %v229 = vsel %vm215, %v144, 0
    %v232 = vsel %vm215, %v145, 0
    %v235 = vsel %vm215, %v146, 0
    %v238 = vsel %vm215, %v147, 0
    %v241 = vsel %vm215, %v148, 0
    %v244 = vsel %vm215, %v149, 0
    %v247 = vsel %vm215, %v150, 0
    %v250 = vsel %vm215, %v151, 0
    %v253 = vsel %vm215, %v152, 0
    %v256 = vsel %vm215, %v153, 0
    %v259 = vsel %vm215, %v154, 0
    %v262 = vsel %vm215, %v155, 0
    %v265 = vsel %vm215, %v156, 0
    %v268 = vsel %vm215, %v157, 0
    %v271 = vsel %vm215, %v158, 0
    %v274 = vsel %vm215, %v159, 0
    %v277 = vsel %vm215, %v160, 0
    %v280 = vsel %vm215, %v161, 0
    %v283 = vsel %vm215, %v162, 0
    %v286 = vsel %vm215, %v163, 0
    %v289 = vsel %vm215, %v164, 0
    %v292 = vsel %vm215, %v165, 0
    %v295 = vsel %vm215, %v166, 0
    %v298 = vsel %vm215, %v167, 0
    %v301 = vsel %vm215, %v168, 0
    %v304 = vsel %vm215, %v169, 0
    %v307 = vsel %vm215, %v170, 0
    %v310 = vsel %vm215, %v171, 0
    %v313 = vsel %vm215, %v172, 0
    %v316 = vsel %vm215, %v173, 0
    %v319 = vsel %vm215, %v174, 0
    %v322 = vsel %vm215, %v175, 0
    %v325 = vsel %vm215, %v176, 0
    %v328 = vsel %vm215, %v177, 0
    %v331 = vsel %vm215, %v178, 0
    %v334 = vsel %vm215, %v179, 0
    %v337 = vsel %vm215, %v180, 0
    %v340 = vsel %vm215, %v181, 0
    %v343 = vsel %vm215, %v182, 0
    %v346 = vsel %vm215, %v183, 0
    %v349 = vsel %vm215, %v184, 0
    %v352 = vsel %vm215, %v185, 0
    %v355 = vsel %vm215, %v186, 0
    %v358 = vsel %vm215, %v187, 0
    %v361 = vsel %vm215, %v188, 0
    %v364 = vsel %vm215, %v189, 0
    %v367 = vsel %vm215, %v190, 0
    %v370 = vsel %vm215, %v191, 0
    %v373 = vsel %vm215, %v192, 0
    %v376 = vsel %vm215, %v193, 0
    %v379 = vsel %vm215, %v194, 0
    %v382 = vsel %vm215, %v195, 0
    %v385 = vsel %vm215, %v196, 0
    %v388 = vsel %vm215, %v197, 0
    %v391 = vsel %vm215, %v198, 0
    %v394 = vsel %vm215, %v199, 0
    %v397 = vsel %vm215, %v200, 0
    %v400 = vsel %vm215, %v201, 0
    %v403 = vsel %vm215, %v202, 0
    %v406 = vsel %vm215, %v203, 0
    %408 = vmatprep.subr.mxu0 0.0
    %409 = vmatpush1.msra.mxu0 %v204
    %410 = vmatprep.subr.mxu0 0.0
    %411 = vmatpush1.msra.mxu0 %v205
    %412 = vmatprep.subr.mxu0 0.0
    %413 = vmatpush1.msra.mxu0 %v206
    %414 = vmatprep.subr.mxu0 0.0
    %415 = vmatpush1.msra.mxu0 %v207
    %416 = vmatprep.subr.mxu0 0.0
    %417 = vmatpush1.msra.mxu0 0.0
    %418 = vmatprep.subr.mxu0 0.0
    %419 = vmatpush1.msra.mxu0 0.0
    %420 = vmatprep.subr.mxu0 0.0
    %421 = vmatpush1.msra.mxu0 0.0
    %422 = vmatprep.subr.mxu0 0.0
    %423 = vmatpush1.msra.mxu0 0.0
    %424 = vmatprep.subr.mxu0 0.0
    %425 = vmatpush1.msra.mxu0 0.0
    %426 = vmatprep.subr.mxu0 0.0
    %427 = vmatpush1.msra.mxu0 0.0
    %428 = vmatprep.subr.mxu0 0.0
    %429 = vmatpush1.msra.mxu0 0.0
    %430 = vmatprep.subr.mxu0 0.0
    %431 = vmatpush1.msra.mxu0 0.0
    %432 = vmatprep.subr.mxu0 0.0
    %433 = vmatpush1.msra.mxu0 0.0
    %434 = vmatprep.subr.mxu0 0.0
    %435 = vmatpush1.msra.mxu0 0.0
    %436 = vmatprep.subr.mxu0 0.0
    %437 = vmatpush1.msra.mxu0 0.0
    %438 = vmatprep.subr.mxu0 0.0
    %439 = vmatpush1.msra.mxu0 0.0
    %440 = vmatprep.subr.mxu0 0.0
    %441 = vmatpush1.msra.mxu0 0.0
    %442 = vmatprep.subr.mxu0 0.0
    %443 = vmatpush1.msra.mxu0 0.0
    %444 = vmatprep.subr.mxu0 0.0
    %445 = vmatpush1.msra.mxu0 0.0
    %446 = vmatprep.subr.mxu0 0.0
    %447 = vmatpush1.msra.mxu0 0.0
    %448 = vmatprep.subr.mxu0 0.0
    %449 = vmatpush1.msra.mxu0 0.0
    %450 = vmatprep.subr.mxu0 0.0
    %451 = vmatpush1.msra.mxu0 0.0
    %452 = vmatprep.subr.mxu0 0.0
    %453 = vmatpush1.msra.mxu0 0.0
    %454 = vmatprep.subr.mxu0 0.0
    %455 = vmatpush1.msra.mxu0 0.0
    %456 = vmatprep.subr.mxu0 0.0
    %457 = vmatpush1.msra.mxu0 0.0
    %458 = vmatprep.subr.mxu0 0.0
    %459 = vmatpush1.msra.mxu0 0.0
    %460 = vmatprep.subr.mxu0 0.0
    %461 = vmatpush1.msra.mxu0 0.0
    %462 = vmatprep.subr.mxu0 0.0
    %463 = vmatpush1.msra.mxu0 0.0
    %464 = vmatprep.subr.mxu0 0.0
    %465 = vmatpush1.msra.mxu0 0.0
    %466 = vmatprep.subr.mxu0 0.0
    %467 = vmatpush1.msra.mxu0 0.0
    %468 = vmatprep.subr.mxu0 0.0
    %469 = vmatpush1.msra.mxu0 0.0
    %470 = vmatprep.subr.mxu0 0.0
    %471 = vmatpush1.msra.mxu0 0.0
    %472 = vmatprep.mubr.f32.mxu0 0.0
    %473 = vmatmul.mubr.f32.gmra.mrb[0].mxu0 %v217
    %v474 = vpop.f32.mrb[0].mxu0
    %v475 = vadd.f32 %v213, %v474
    %v476 = vpop.f32.mrb[0].mxu0
    %477 = vmatprep.mubr.f32.mxu0 0.0
    %478 = vmatmul.mubr.f32.gmra.mrb[0].mxu0 %v220
    %v479 = vpop.f32.mrb[0].mxu0
    %v480 = vadd.f32 %v213, %v479
    %v481 = vpop.f32.mrb[0].mxu0
    %482 = vmatprep.mubr.f32.mxu0 0.0
    %483 = vmatmul.mubr.f32.gmra.mrb[0].mxu0 %v223
    %v484 = vpop.f32.mrb[0].mxu0
    %v485 = vadd.f32 %v213, %v484
    %v486 = vpop.f32.mrb[0].mxu0
    %487 = vmatprep.mubr.f32.mxu0 0.0
    %488 = vmatmul.mubr.f32.gmra.mrb[0].mxu0 %v226
    %v489 = vpop.f32.mrb[0].mxu0
    %v490 = vadd.f32 %v213, %v489
    %v491 = vpop.f32.mrb[0].mxu0
    %492 = vmatprep.mubr.f32.mxu0 0.0
    %493 = vmatmul.mubr.f32.gmra.mrb[0].mxu0 %v229
    %v494 = vpop.f32.mrb[0].mxu0
    %v495 = vadd.f32 %v213, %v494
    %v496 = vpop.f32.mrb[0].mxu0
    %497 = vmatprep.mubr.f32.mxu0 0.0
    %498 = vmatmul.mubr.f32.gmra.mrb[0].mxu0 %v232
    %v499 = vpop.f32.mrb[0].mxu0
    %v500 = vadd.f32 %v213, %v499
    %v501 = vpop.f32.mrb[0].mxu0
    %502 = vmatprep.mubr.f32.mxu0 0.0
    %503 = vmatmul.mubr.f32.gmra.mrb[0].mxu0 %v235
    %v504 = vpop.f32.mrb[0].mxu0
    %v505 = vadd.f32 %v213, %v504
    %v506 = vpop.f32.mrb[0].mxu0
    %507 = vmatprep.mubr.f32.mxu0 0.0
    %508 = vmatmul.mubr.f32.gmra.mrb[0].mxu0 %v238
    %v509 = vpop.f32.mrb[0].mxu0
    %v510 = vadd.f32 %v213, %v509
    %v511 = vpop.f32.mrb[0].mxu0
    %512 = vmatprep.mubr.f32.mxu0 0.0
    %513 = vmatmul.mubr.f32.gmra.mrb[0].mxu0 %v241
    %v514 = vpop.f32.mrb[0].mxu0
    %v515 = vadd.f32 %v213, %v514
    %v516 = vpop.f32.mrb[0].mxu0
    %517 = vmatprep.mubr.f32.mxu0 0.0
    %518 = vmatmul.mubr.f32.gmra.mrb[0].mxu0 %v244
    %v519 = vpop.f32.mrb[0].mxu0
    %v520 = vadd.f32 %v213, %v519
    %v521 = vpop.f32.mrb[0].mxu0
    %522 = vmatprep.mubr.f32.mxu0 0.0
    %523 = vmatmul.mubr.f32.gmra.mrb[0].mxu0 %v247
    %v524 = vpop.f32.mrb[0].mxu0
    %v525 = vadd.f32 %v213, %v524
    %v526 = vpop.f32.mrb[0].mxu0
    %527 = vmatprep.mubr.f32.mxu0 0.0
    %528 = vmatmul.mubr.f32.gmra.mrb[0].mxu0 %v250
    %v529 = vpop.f32.mrb[0].mxu0
    %v530 = vadd.f32 %v213, %v529
    %v531 = vpop.f32.mrb[0].mxu0
    %532 = vmatprep.mubr.f32.mxu0 0.0
    %533 = vmatmul.mubr.f32.gmra.mrb[0].mxu0 %v253
    %v534 = vpop.f32.mrb[0].mxu0
    %v535 = vadd.f32 %v213, %v534
    %v536 = vpop.f32.mrb[0].mxu0
    %537 = vmatprep.mubr.f32.mxu0 0.0
    %538 = vmatmul.mubr.f32.gmra.mrb[0].mxu0 %v256
    %v539 = vpop.f32.mrb[0].mxu0
    %v540 = vadd.f32 %v213, %v539
    %v541 = vpop.f32.mrb[0].mxu0
    %542 = vmatprep.mubr.f32.mxu0 0.0
    %543 = vmatmul.mubr.f32.gmra.mrb[0].mxu0 %v259
    %v544 = vpop.f32.mrb[0].mxu0
    %v545 = vadd.f32 %v213, %v544
    %v546 = vpop.f32.mrb[0].mxu0
    %547 = vmatprep.mubr.f32.mxu0 0.0
    %548 = vmatmul.mubr.f32.gmra.mrb[0].mxu0 %v262
    %v549 = vpop.f32.mrb[0].mxu0
    %v550 = vadd.f32 %v213, %v549
    %v551 = vpop.f32.mrb[0].mxu0
    %552 = vmatprep.mubr.f32.mxu0 0.0
    %553 = vmatmul.mubr.f32.gmra.mrb[0].mxu0 %v265
    %v554 = vpop.f32.mrb[0].mxu0
    %v555 = vadd.f32 %v213, %v554
    %v556 = vpop.f32.mrb[0].mxu0
    %557 = vmatprep.mubr.f32.mxu0 0.0
    %558 = vmatmul.mubr.f32.gmra.mrb[0].mxu0 %v268
    %v559 = vpop.f32.mrb[0].mxu0
    %v560 = vadd.f32 %v213, %v559
    %v561 = vpop.f32.mrb[0].mxu0
    %562 = vmatprep.mubr.f32.mxu0 0.0
    %563 = vmatmul.mubr.f32.gmra.mrb[0].mxu0 %v271
    %v564 = vpop.f32.mrb[0].mxu0
    %v565 = vadd.f32 %v213, %v564
    %v566 = vpop.f32.mrb[0].mxu0
    %567 = vmatprep.mubr.f32.mxu0 0.0
    %568 = vmatmul.mubr.f32.gmra.mrb[0].mxu0 %v274
    %v569 = vpop.f32.mrb[0].mxu0
    %v570 = vadd.f32 %v213, %v569
    %v571 = vpop.f32.mrb[0].mxu0
    %572 = vmatprep.mubr.f32.mxu0 0.0
    %573 = vmatmul.mubr.f32.gmra.mrb[0].mxu0 %v277
    %v574 = vpop.f32.mrb[0].mxu0
    %v575 = vadd.f32 %v213, %v574
    %v576 = vpop.f32.mrb[0].mxu0
    %577 = vmatprep.mubr.f32.mxu0 0.0
    %578 = vmatmul.mubr.f32.gmra.mrb[0].mxu0 %v280
    %v579 = vpop.f32.mrb[0].mxu0
    %v580 = vadd.f32 %v213, %v579
    %v581 = vpop.f32.mrb[0].mxu0
    %582 = vmatprep.mubr.f32.mxu0 0.0
    %583 = vmatmul.mubr.f32.gmra.mrb[0].mxu0 %v283
    %v584 = vpop.f32.mrb[0].mxu0
    %v585 = vadd.f32 %v213, %v584
    %v586 = vpop.f32.mrb[0].mxu0
    %587 = vmatprep.mubr.f32.mxu0 0.0
    %588 = vmatmul.mubr.f32.gmra.mrb[0].mxu0 %v286
    %v589 = vpop.f32.mrb[0].mxu0
    %v590 = vadd.f32 %v213, %v589
    %v591 = vpop.f32.mrb[0].mxu0
    %592 = vmatprep.mubr.f32.mxu0 0.0
    %593 = vmatmul.mubr.f32.gmra.mrb[0].mxu0 %v289
    %v594 = vpop.f32.mrb[0].mxu0
    %v595 = vadd.f32 %v213, %v594
    %v596 = vpop.f32.mrb[0].mxu0
    %597 = vmatprep.mubr.f32.mxu0 0.0
    %598 = vmatmul.mubr.f32.gmra.mrb[0].mxu0 %v292
    %v599 = vpop.f32.mrb[0].mxu0
    %v600 = vadd.f32 %v213, %v599
    %v601 = vpop.f32.mrb[0].mxu0
    %602 = vmatprep.mubr.f32.mxu0 0.0
    %603 = vmatmul.mubr.f32.gmra.mrb[0].mxu0 %v295
    %v604 = vpop.f32.mrb[0].mxu0
    %v605 = vadd.f32 %v213, %v604
    %v606 = vpop.f32.mrb[0].mxu0
    %607 = vmatprep.mubr.f32.mxu0 0.0
    %608 = vmatmul.mubr.f32.gmra.mrb[0].mxu0 %v298
    %v609 = vpop.f32.mrb[0].mxu0
    %v610 = vadd.f32 %v213, %v609
    %v611 = vpop.f32.mrb[0].mxu0
    %612 = vmatprep.mubr.f32.mxu0 0.0
    %613 = vmatmul.mubr.f32.gmra.mrb[0].mxu0 %v301
    %v614 = vpop.f32.mrb[0].mxu0
    %v615 = vadd.f32 %v213, %v614
    %v616 = vpop.f32.mrb[0].mxu0
    %617 = vmatprep.mubr.f32.mxu0 0.0
    %618 = vmatmul.mubr.f32.gmra.mrb[0].mxu0 %v304
    %v619 = vpop.f32.mrb[0].mxu0
    %v620 = vadd.f32 %v213, %v619
    %v621 = vpop.f32.mrb[0].mxu0
    %622 = vmatprep.mubr.f32.mxu0 0.0
    %623 = vmatmul.mubr.f32.gmra.mrb[0].mxu0 %v307
    %v624 = vpop.f32.mrb[0].mxu0
    %v625 = vadd.f32 %v213, %v624
    %v626 = vpop.f32.mrb[0].mxu0
    %627 = vmatprep.mubr.f32.mxu0 0.0
    %628 = vmatmul.mubr.f32.gmra.mrb[0].mxu0 %v310
    %v629 = vpop.f32.mrb[0].mxu0
    %v630 = vadd.f32 %v213, %v629
    %v631 = vpop.f32.mrb[0].mxu0
    %632 = vmatprep.mubr.f32.mxu0 0.0
    %633 = vmatmul.mubr.f32.gmra.mrb[0].mxu0 %v313
    %v634 = vpop.f32.mrb[0].mxu0
    %v635 = vadd.f32 %v213, %v634
    %v636 = vpop.f32.mrb[0].mxu0
    %637 = vmatprep.mubr.f32.mxu0 0.0
    %638 = vmatmul.mubr.f32.gmra.mrb[0].mxu0 %v316
    %v639 = vpop.f32.mrb[0].mxu0
    %v640 = vadd.f32 %v213, %v639
    %v641 = vpop.f32.mrb[0].mxu0
    %642 = vmatprep.mubr.f32.mxu0 0.0
    %643 = vmatmul.mubr.f32.gmra.mrb[0].mxu0 %v319
    %v644 = vpop.f32.mrb[0].mxu0
    %v645 = vadd.f32 %v213, %v644
    %v646 = vpop.f32.mrb[0].mxu0
    %647 = vmatprep.mubr.f32.mxu0 0.0
    %648 = vmatmul.mubr.f32.gmra.mrb[0].mxu0 %v322
    %v649 = vpop.f32.mrb[0].mxu0
    %v650 = vadd.f32 %v213, %v649
    %v651 = vpop.f32.mrb[0].mxu0
    %652 = vmatprep.mubr.f32.mxu0 0.0
    %653 = vmatmul.mubr.f32.gmra.mrb[0].mxu0 %v325
    %v654 = vpop.f32.mrb[0].mxu0
    %v655 = vadd.f32 %v213, %v654
    %v656 = vpop.f32.mrb[0].mxu0
    %657 = vmatprep.mubr.f32.mxu0 0.0
    %658 = vmatmul.mubr.f32.gmra.mrb[0].mxu0 %v328
    %v659 = vpop.f32.mrb[0].mxu0
    %v660 = vadd.f32 %v213, %v659
    %v661 = vpop.f32.mrb[0].mxu0
    %662 = vmatprep.mubr.f32.mxu0 0.0
    %663 = vmatmul.mubr.f32.gmra.mrb[0].mxu0 %v331
    %v664 = vpop.f32.mrb[0].mxu0
    %v665 = vadd.f32 %v213, %v664
    %v666 = vpop.f32.mrb[0].mxu0
    %667 = vmatprep.mubr.f32.mxu0 0.0
    %668 = vmatmul.mubr.f32.gmra.mrb[0].mxu0 %v334
    %v669 = vpop.f32.mrb[0].mxu0
    %v670 = vadd.f32 %v213, %v669
    %v671 = vpop.f32.mrb[0].mxu0
    %672 = vmatprep.mubr.f32.mxu0 0.0
    %673 = vmatmul.mubr.f32.gmra.mrb[0].mxu0 %v337
    %v674 = vpop.f32.mrb[0].mxu0
    %v675 = vadd.f32 %v213, %v674
    %v676 = vpop.f32.mrb[0].mxu0
    %677 = vmatprep.mubr.f32.mxu0 0.0
    %678 = vmatmul.mubr.f32.gmra.mrb[0].mxu0 %v340
    %v679 = vpop.f32.mrb[0].mxu0
    %v680 = vadd.f32 %v213, %v679
    %v681 = vpop.f32.mrb[0].mxu0
    %682 = vmatprep.mubr.f32.mxu0 0.0
    %683 = vmatmul.mubr.f32.gmra.mrb[0].mxu0 %v343
    %v684 = vpop.f32.mrb[0].mxu0
    %v685 = vadd.f32 %v213, %v684
    %v686 = vpop.f32.mrb[0].mxu0
    %687 = vmatprep.mubr.f32.mxu0 0.0
    %688 = vmatmul.mubr.f32.gmra.mrb[0].mxu0 %v346
    %v689 = vpop.f32.mrb[0].mxu0
    %v690 = vadd.f32 %v213, %v689
    %v691 = vpop.f32.mrb[0].mxu0
    %692 = vmatprep.mubr.f32.mxu0 0.0
    %693 = vmatmul.mubr.f32.gmra.mrb[0].mxu0 %v349
    %v694 = vpop.f32.mrb[0].mxu0
    %v695 = vadd.f32 %v213, %v694
    %v696 = vpop.f32.mrb[0].mxu0
    %697 = vmatprep.mubr.f32.mxu0 0.0
    %698 = vmatmul.mubr.f32.gmra.mrb[0].mxu0 %v352
    %v699 = vpop.f32.mrb[0].mxu0
    %v700 = vadd.f32 %v213, %v699
    %v701 = vpop.f32.mrb[0].mxu0
    %702 = vmatprep.mubr.f32.mxu0 0.0
    %703 = vmatmul.mubr.f32.gmra.mrb[0].mxu0 %v355
    %v704 = vpop.f32.mrb[0].mxu0
    %v705 = vadd.f32 %v213, %v704
    %v706 = vpop.f32.mrb[0].mxu0
    %707 = vmatprep.mubr.f32.mxu0 0.0
    %708 = vmatmul.mubr.f32.gmra.mrb[0].mxu0 %v358
    %v709 = vpop.f32.mrb[0].mxu0
    %v710 = vadd.f32 %v213, %v709
    %v711 = vpop.f32.mrb[0].mxu0
    %712 = vmatprep.mubr.f32.mxu0 0.0
    %713 = vmatmul.mubr.f32.gmra.mrb[0].mxu0 %v361
    %v714 = vpop.f32.mrb[0].mxu0
    %v715 = vadd.f32 %v213, %v714
    %v716 = vpop.f32.mrb[0].mxu0
    %717 = vmatprep.mubr.f32.mxu0 0.0
    %718 = vmatmul.mubr.f32.gmra.mrb[0].mxu0 %v364
    %v719 = vpop.f32.mrb[0].mxu0
    %v720 = vadd.f32 %v213, %v719
    %v721 = vpop.f32.mrb[0].mxu0
    %722 = vmatprep.mubr.f32.mxu0 0.0
    %723 = vmatmul.mubr.f32.gmra.mrb[0].mxu0 %v367
    %v724 = vpop.f32.mrb[0].mxu0
    %v725 = vadd.f32 %v213, %v724
    %v726 = vpop.f32.mrb[0].mxu0
    %727 = vmatprep.mubr.f32.mxu0 0.0
    %728 = vmatmul.mubr.f32.gmra.mrb[0].mxu0 %v370
    %v729 = vpop.f32.mrb[0].mxu0
    %v730 = vadd.f32 %v213, %v729
    %v731 = vpop.f32.mrb[0].mxu0
    %732 = vmatprep.mubr.f32.mxu0 0.0
    %733 = vmatmul.mubr.f32.gmra.mrb[0].mxu0 %v373
    %v734 = vpop.f32.mrb[0].mxu0
    %v735 = vadd.f32 %v213, %v734
    %v736 = vpop.f32.mrb[0].mxu0
    %737 = vmatprep.mubr.f32.mxu0 0.0
    %738 = vmatmul.mubr.f32.gmra.mrb[0].mxu0 %v376
    %v739 = vpop.f32.mrb[0].mxu0
    %v740 = vadd.f32 %v213, %v739
    %v741 = vpop.f32.mrb[0].mxu0
    %742 = vmatprep.mubr.f32.mxu0 0.0
    %743 = vmatmul.mubr.f32.gmra.mrb[0].mxu0 %v379
    %v744 = vpop.f32.mrb[0].mxu0
    %v745 = vadd.f32 %v213, %v744
    %v746 = vpop.f32.mrb[0].mxu0
    %747 = vmatprep.mubr.f32.mxu0 0.0
    %748 = vmatmul.mubr.f32.gmra.mrb[0].mxu0 %v382
    %v749 = vpop.f32.mrb[0].mxu0
    %v750 = vadd.f32 %v213, %v749
    %v751 = vpop.f32.mrb[0].mxu0
    %752 = vmatprep.mubr.f32.mxu0 0.0
    %753 = vmatmul.mubr.f32.gmra.mrb[0].mxu0 %v385
    %v754 = vpop.f32.mrb[0].mxu0
    %v755 = vadd.f32 %v213, %v754
    %v756 = vpop.f32.mrb[0].mxu0
    %757 = vmatprep.mubr.f32.mxu0 0.0
    %758 = vmatmul.mubr.f32.gmra.mrb[0].mxu0 %v388
    %v759 = vpop.f32.mrb[0].mxu0
    %v760 = vadd.f32 %v213, %v759
    %v761 = vpop.f32.mrb[0].mxu0
    %762 = vmatprep.mubr.f32.mxu0 0.0
    %763 = vmatmul.mubr.f32.gmra.mrb[0].mxu0 %v391
    %v764 = vpop.f32.mrb[0].mxu0
    %v765 = vadd.f32 %v213, %v764
    %v766 = vpop.f32.mrb[0].mxu0
    %767 = vmatprep.mubr.f32.mxu0 0.0
    %768 = vmatmul.mubr.f32.gmra.mrb[0].mxu0 %v394
    %v769 = vpop.f32.mrb[0].mxu0
    %v770 = vadd.f32 %v213, %v769
    %v771 = vpop.f32.mrb[0].mxu0
    %772 = vmatprep.mubr.f32.mxu0 0.0
    %773 = vmatmul.mubr.f32.gmra.mrb[0].mxu0 %v397
    %v774 = vpop.f32.mrb[0].mxu0
    %v775 = vadd.f32 %v213, %v774
    %v776 = vpop.f32.mrb[0].mxu0
    %777 = vmatprep.mubr.f32.mxu0 0.0
    %778 = vmatmul.mubr.f32.gmra.mrb[0].mxu0 %v400
    %v779 = vpop.f32.mrb[0].mxu0
    %v780 = vadd.f32 %v213, %v779
    %v781 = vpop.f32.mrb[0].mxu0
    %782 = vmatprep.mubr.f32.mxu0 0.0
    %783 = vmatmul.mubr.f32.gmra.mrb[0].mxu0 %v403
    %v784 = vpop.f32.mrb[0].mxu0
    %v785 = vadd.f32 %v213, %v784
    %v786 = vpop.f32.mrb[0].mxu0
    %787 = vmatprep.mubr.f32.mxu0 0.0
    %788 = vmatmul.mubr.f32.gmra.mrb[0].mxu0 %v406
    %v789 = vpop.f32.mrb[0].mxu0
    %v790 = vadd.f32 %v213, %v789
    %v791 = vpop.f32.mrb[0].mxu0
    %792 = vdwg.mxu0
    %v793 = vmax.f32 %v475, 0.0
    %v794 = vmax.f32 %v480, 0.0
    %v795 = vmax.f32 %v485, 0.0
    %v796 = vmax.f32 %v490, 0.0
    %v797 = vmax.f32 %v495, 0.0
    %v798 = vmax.f32 %v500, 0.0
    %v799 = vmax.f32 %v505, 0.0
    %v800 = vmax.f32 %v510, 0.0
    %v801 = vmax.f32 %v515, 0.0
    %v802 = vmax.f32 %v520, 0.0
    %v803 = vmax.f32 %v525, 0.0
    %v804 = vmax.f32 %v530, 0.0
    %v805 = vmax.f32 %v535, 0.0
    %v806 = vmax.f32 %v540, 0.0
    %v807 = vmax.f32 %v545, 0.0
    %v808 = vmax.f32 %v550, 0.0
    %v809 = vmax.f32 %v555, 0.0
    %v810 = vmax.f32 %v560, 0.0
    %v811 = vmax.f32 %v565, 0.0
    %v812 = vmax.f32 %v570, 0.0
    %v813 = vmax.f32 %v575, 0.0
    %v814 = vmax.f32 %v580, 0.0
    %v815 = vmax.f32 %v585, 0.0
    %v816 = vmax.f32 %v590, 0.0
    %v817 = vmax.f32 %v595, 0.0
    %v818 = vmax.f32 %v600, 0.0
    %v819 = vmax.f32 %v605, 0.0
    %v820 = vmax.f32 %v610, 0.0
    %v821 = vmax.f32 %v615, 0.0
    %v822 = vmax.f32 %v620, 0.0
    %v823 = vmax.f32 %v625, 0.0
    %v824 = vmax.f32 %v630, 0.0
    %v825 = vmax.f32 %v635, 0.0
    %v826 = vmax.f32 %v640, 0.0
    %v827 = vmax.f32 %v645, 0.0
    %v828 = vmax.f32 %v650, 0.0
    %v829 = vmax.f32 %v655, 0.0
    %v830 = vmax.f32 %v660, 0.0
    %v831 = vmax.f32 %v665, 0.0
    %v832 = vmax.f32 %v670, 0.0
    %v833 = vmax.f32 %v675, 0.0
    %v834 = vmax.f32 %v680, 0.0
    %v835 = vmax.f32 %v685, 0.0
    %v836 = vmax.f32 %v690, 0.0
    %v837 = vmax.f32 %v695, 0.0
    %v838 = vmax.f32 %v700, 0.0
    %v839 = vmax.f32 %v705, 0.0
    %v840 = vmax.f32 %v710, 0.0
    %v841 = vmax.f32 %v715, 0.0
    %v842 = vmax.f32 %v720, 0.0
    %v843 = vmax.f32 %v725, 0.0
    %v844 = vmax.f32 %v730, 0.0
    %v845 = vmax.f32 %v735, 0.0
    %v846 = vmax.f32 %v740, 0.0
    %v847 = vmax.f32 %v745, 0.0
    %v848 = vmax.f32 %v750, 0.0
    %v849 = vmax.f32 %v755, 0.0
    %v850 = vmax.f32 %v760, 0.0
    %v851 = vmax.f32 %v765, 0.0
    %v852 = vmax.f32 %v770, 0.0
    %v853 = vmax.f32 %v775, 0.0
    %v854 = vmax.f32 %v780, 0.0
    %v855 = vmax.f32 %v785, 0.0
    %v856 = vmax.f32 %v790, 0.0
    %857 = vst [vmem:[#allocation2] sm:$0xff] 0.0
    %858 = vst [vmem:[#allocation2 + $0x8] sm:$0xff] 0.0
    %859 = vst [vmem:[#allocation2 + $0x10] sm:$0x3] 0.0
    %860 = vst [vmem:[#allocation2 + $0x1b0] sm:$0xff] 0.0
    %861 = vst [vmem:[#allocation2 + $0x1b8] sm:$0xff] 0.0
    %862 = vst [vmem:[#allocation2 + $0x1c0] sm:$0x3] 0.0
    %s863 = scalar_lea.vmem [#allocation2], 408
    %864 = vst [vmem:[%s863] sm:$0xff] 0.0
    %865 = vst [vmem:[%s863 + $0x8] sm:$0xff] 0.0
    %866 = vst [vmem:[%s863 + $0x10] sm:$0x3] 0.0
    %867 = vst [vmem:[%s863 + $0x1b0] sm:$0xff] 0.0
    %868 = vst [vmem:[%s863 + $0x1b8] sm:$0xff] 0.0
    %869 = vst [vmem:[%s863 + $0x1c0] sm:$0x3] 0.0
    %870 = vst [vmem:[#allocation2] sm:$0x1] 0.0
    %871 = vst [vmem:[#allocation2 + $0x18] sm:$0x1] 0.0
    %872 = vst [vmem:[#allocation2 + $0x30] sm:$0x1] 0.0
    %873 = vst [vmem:[#allocation2 + $0x48] sm:$0x1] 0.0
    %874 = vst [vmem:[#allocation2 + $0x60] sm:$0x1] 0.0
    %875 = vst [vmem:[#allocation2 + $0x78] sm:$0x1] 0.0
    %876 = vst [vmem:[#allocation2 + $0x90] sm:$0x1] 0.0
    %877 = vst [vmem:[#allocation2 + $0xa8] sm:$0x1] 0.0
    %878 = vst [vmem:[#allocation2 + $0xc0] sm:$0x1] 0.0
    %879 = vst [vmem:[#allocation2 + $0xd8] sm:$0x1] 0.0
    %880 = vst [vmem:[#allocation2 + $0xf0] sm:$0x1] 0.0
    %881 = vst [vmem:[#allocation2 + $0x108] sm:$0x1] 0.0
    %882 = vst [vmem:[#allocation2 + $0x120] sm:$0x1] 0.0
    %883 = vst [vmem:[#allocation2 + $0x138] sm:$0x1] 0.0
    %884 = vst [vmem:[#allocation2 + $0x150] sm:$0x1] 0.0
    %885 = vst [vmem:[#allocation2 + $0x168] sm:$0x1] 0.0
    %886 = vst [vmem:[#allocation2 + $0x180] sm:$0x1] 0.0
    %887 = vst [vmem:[#allocation2 + $0x198] sm:$0x1] 0.0
    %888 = vst [vmem:[#allocation2 + $0x1b0] sm:$0x1] 0.0
    %889 = vst [vmem:[#allocation2 + $0x1c8] sm:$0x1] 0.0
    %890 = vst [vmem:[#allocation2 + $0x1e0] sm:$0x1] 0.0
    %891 = vst [vmem:[#allocation2 + $0x1f8] sm:$0x1] 0.0
    %892 = vst [vmem:[#allocation2 + $0x210] sm:$0x1] 0.0
    %893 = vst [vmem:[#allocation2 + $0x228] sm:$0x1] 0.0
    %894 = vst [vmem:[#allocation2 + $0x240] sm:$0x1] 0.0
    %895 = vst [vmem:[#allocation2 + $0x258] sm:$0x1] 0.0
    %896 = vst [vmem:[#allocation2 + $0x270] sm:$0x1] 0.0
    %897 = vst [vmem:[#allocation2 + $0x288] sm:$0x1] 0.0
    %898 = vst [vmem:[#allocation2 + $0x2a0] sm:$0x1] 0.0
    %899 = vst [vmem:[#allocation2 + $0x2b8] sm:$0x1] 0.0
    %900 = vst [vmem:[#allocation2 + $0x2d0] sm:$0x1] 0.0
    %901 = vst [vmem:[#allocation2 + $0x2e8] sm:$0x1] 0.0
    %902 = vst [vmem:[#allocation2 + $0x300] sm:$0x1] 0.0
    %903 = vst [vmem:[#allocation2 + $0x318] sm:$0x1] 0.0
    %904 = vst [vmem:[#allocation2 + $0x330] sm:$0x1] 0.0
    %905 = vst [vmem:[#allocation2 + $0x348] sm:$0x1] 0.0
    %906 = vst [vmem:[#allocation2 + $0x11] sm:$0x1] 0.0
    %907 = vst [vmem:[#allocation2 + $0x29] sm:$0x1] 0.0
    %908 = vst [vmem:[#allocation2 + $0x41] sm:$0x1] 0.0
    %909 = vst [vmem:[#allocation2 + $0x59] sm:$0x1] 0.0
    %910 = vst [vmem:[#allocation2 + $0x71] sm:$0x1] 0.0
    %911 = vst [vmem:[#allocation2 + $0x89] sm:$0x1] 0.0
    %912 = vst [vmem:[#allocation2 + $0xa1] sm:$0x1] 0.0
    %913 = vst [vmem:[#allocation2 + $0xb9] sm:$0x1] 0.0
    %914 = vst [vmem:[#allocation2 + $0xd1] sm:$0x1] 0.0
    %915 = vst [vmem:[#allocation2 + $0xe9] sm:$0x1] 0.0
    %916 = vst [vmem:[#allocation2 + $0x101] sm:$0x1] 0.0
    %917 = vst [vmem:[#allocation2 + $0x119] sm:$0x1] 0.0
    %918 = vst [vmem:[#allocation2 + $0x131] sm:$0x1] 0.0
    %919 = vst [vmem:[#allocation2 + $0x149] sm:$0x1] 0.0
    %920 = vst [vmem:[#allocation2 + $0x161] sm:$0x1] 0.0
    %921 = vst [vmem:[#allocation2 + $0x179] sm:$0x1] 0.0
    %922 = vst [vmem:[#allocation2 + $0x191] sm:$0x1] 0.0
    %923 = vst [vmem:[#allocation2 + $0x1a9] sm:$0x1] 0.0
    %924 = vst [vmem:[#allocation2 + $0x1c1] sm:$0x1] 0.0
    %925 = vst [vmem:[#allocation2 + $0x1d9] sm:$0x1] 0.0
    %926 = vst [vmem:[#allocation2 + $0x1f1] sm:$0x1] 0.0
    %927 = vst [vmem:[#allocation2 + $0x209] sm:$0x1] 0.0
    %928 = vst [vmem:[#allocation2 + $0x221] sm:$0x1] 0.0
    %929 = vst [vmem:[#allocation2 + $0x239] sm:$0x1] 0.0
    %930 = vst [vmem:[#allocation2 + $0x251] sm:$0x1] 0.0
    %931 = vst [vmem:[#allocation2 + $0x269] sm:$0x1] 0.0
    %932 = vst [vmem:[#allocation2 + $0x281] sm:$0x1] 0.0
    %933 = vst [vmem:[#allocation2 + $0x299] sm:$0x1] 0.0
    %934 = vst [vmem:[#allocation2 + $0x2b1] sm:$0x1] 0.0
    %935 = vst [vmem:[#allocation2 + $0x2c9] sm:$0x1] 0.0
    %936 = vst [vmem:[#allocation2 + $0x2e1] sm:$0x1] 0.0
    %937 = vst [vmem:[#allocation2 + $0x2f9] sm:$0x1] 0.0
    %938 = vst [vmem:[#allocation2 + $0x311] sm:$0x1] 0.0
    %939 = vst [vmem:[#allocation2 + $0x329] sm:$0x1] 0.0
    %940 = vst [vmem:[#allocation2 + $0x341] sm:$0x1] 0.0
    %941 = vst [vmem:[#allocation2 + $0x359] sm:$0x1] 0.0
    %s942 = scalar_lea.vmem [#allocation2], 24
    %943 = vst [vmem:[%s942 + $0x1] sm:$0xff] %v793
    %944 = vst [vmem:[%s942 + $0x9] sm:$0xff] %v794
    %945 = vst [vmem:[%s942 + $0x19] sm:$0xff] %v795
    %946 = vst [vmem:[%s942 + $0x21] sm:$0xff] %v796
    %947 = vst [vmem:[%s942 + $0x31] sm:$0xff] %v797
    %948 = vst [vmem:[%s942 + $0x39] sm:$0xff] %v798
    %949 = vst [vmem:[%s942 + $0x49] sm:$0xff] %v799
    %950 = vst [vmem:[%s942 + $0x51] sm:$0xff] %v800
    %951 = vst [vmem:[%s942 + $0x61] sm:$0xff] %v801
    %952 = vst [vmem:[%s942 + $0x69] sm:$0xff] %v802
    %953 = vst [vmem:[%s942 + $0x79] sm:$0xff] %v803
    %954 = vst [vmem:[%s942 + $0x81] sm:$0xff] %v804
    %955 = vst [vmem:[%s942 + $0x91] sm:$0xff] %v805
    %956 = vst [vmem:[%s942 + $0x99] sm:$0xff] %v806
    %957 = vst [vmem:[%s942 + $0xa9] sm:$0xff] %v807
    %958 = vst [vmem:[%s942 + $0xb1] sm:$0xff] %v808
    %959 = vst [vmem:[%s942 + $0xc1] sm:$0xff] %v809
    %960 = vst [vmem:[%s942 + $0xc9] sm:$0xff] %v810
    %961 = vst [vmem:[%s942 + $0xd9] sm:$0xff] %v811
    %962 = vst [vmem:[%s942 + $0xe1] sm:$0xff] %v812
    %963 = vst [vmem:[%s942 + $0xf1] sm:$0xff] %v813
    %964 = vst [vmem:[%s942 + $0xf9] sm:$0xff] %v814
    %965 = vst [vmem:[%s942 + $0x109] sm:$0xff] %v815
    %966 = vst [vmem:[%s942 + $0x111] sm:$0xff] %v816
    %967 = vst [vmem:[%s942 + $0x121] sm:$0xff] %v817
    %968 = vst [vmem:[%s942 + $0x129] sm:$0xff] %v818
    %969 = vst [vmem:[%s942 + $0x139] sm:$0xff] %v819
    %970 = vst [vmem:[%s942 + $0x141] sm:$0xff] %v820
    %971 = vst [vmem:[%s942 + $0x151] sm:$0xff] %v821
    %972 = vst [vmem:[%s942 + $0x159] sm:$0xff] %v822
    %973 = vst [vmem:[%s942 + $0x169] sm:$0xff] %v823
    %974 = vst [vmem:[%s942 + $0x171] sm:$0xff] %v824
    %975 = vst [vmem:[%s942 + $0x1b1] sm:$0xff] %v825
    %976 = vst [vmem:[%s942 + $0x1b9] sm:$0xff] %v826
    %977 = vst [vmem:[%s942 + $0x1c9] sm:$0xff] %v827
    %978 = vst [vmem:[%s942 + $0x1d1] sm:$0xff] %v828
    %979 = vst [vmem:[%s942 + $0x1e1] sm:$0xff] %v829
    %980 = vst [vmem:[%s942 + $0x1e9] sm:$0xff] %v830
    %981 = vst [vmem:[%s942 + $0x1f9] sm:$0xff] %v831
    %982 = vst [vmem:[%s942 + $0x201] sm:$0xff] %v832
    %983 = vst [vmem:[%s942 + $0x211] sm:$0xff] %v833
    %984 = vst [vmem:[%s942 + $0x219] sm:$0xff] %v834
    %985 = vst [vmem:[%s942 + $0x229] sm:$0xff] %v835
    %986 = vst [vmem:[%s942 + $0x231] sm:$0xff] %v836
    %987 = vst [vmem:[%s942 + $0x241] sm:$0xff] %v837
    %988 = vst [vmem:[%s942 + $0x249] sm:$0xff] %v838
    %989 = vst [vmem:[%s942 + $0x259] sm:$0xff] %v839
    %990 = vst [vmem:[%s942 + $0x261] sm:$0xff] %v840
    %991 = vst [vmem:[%s942 + $0x271] sm:$0xff] %v841
    %992 = vst [vmem:[%s942 + $0x279] sm:$0xff] %v842
    %993 = vst [vmem:[%s942 + $0x289] sm:$0xff] %v843
    %994 = vst [vmem:[%s942 + $0x291] sm:$0xff] %v844
    %995 = vst [vmem:[%s942 + $0x2a1] sm:$0xff] %v845
    %996 = vst [vmem:[%s942 + $0x2a9] sm:$0xff] %v846
    %997 = vst [vmem:[%s942 + $0x2b9] sm:$0xff] %v847
    %998 = vst [vmem:[%s942 + $0x2c1] sm:$0xff] %v848
    %999 = vst [vmem:[%s942 + $0x2d1] sm:$0xff] %v849
    %1000 = vst [vmem:[%s942 + $0x2d9] sm:$0xff] %v850
    %1001 = vst [vmem:[%s942 + $0x2e9] sm:$0xff] %v851
    %1002 = vst [vmem:[%s942 + $0x2f1] sm:$0xff] %v852
    %1003 = vst [vmem:[%s942 + $0x301] sm:$0xff] %v853
    %1004 = vst [vmem:[%s942 + $0x309] sm:$0xff] %v854
    %1005 = vst [vmem:[%s942 + $0x319] sm:$0xff] %v855
    %1006 = vst [vmem:[%s942 + $0x321] sm:$0xff] %v856
    %v1007 = vld [vmem:[#allocation2] ss:$2 sm:$0xff]
    %s1008 = scalar_lea.vmem [#allocation2], 48
    %v1009 = vld [vmem:[%s1008] ss:$2 sm:$0xff]
    %s1010 = scalar_lea.vmem [#allocation2], 96
    %v1011 = vld [vmem:[%s1010] ss:$2 sm:$0xff]
    %s1012 = scalar_lea.vmem [#allocation2], 144
    %v1013 = vld [vmem:[%s1012] ss:$2 sm:$0xff]
    %s1014 = scalar_lea.vmem [#allocation2], 192
    %v1015 = vld [vmem:[%s1014] ss:$2 sm:$0xff]
    %s1016 = scalar_lea.vmem [#allocation2], 240
    %v1017 = vld [vmem:[%s1016] ss:$2 sm:$0xff]
    %s1018 = scalar_lea.vmem [#allocation2], 288
    %v1019 = vld [vmem:[%s1018] ss:$2 sm:$0xff]
    %s1020 = scalar_lea.vmem [#allocation2], 336
    %v1021 = vld [vmem:[%s1020] ss:$2 sm:$0xff]
    %s1022 = scalar_lea.vmem [#allocation2], 432
    %v1023 = vld [vmem:[%s1022] ss:$2 sm:$0xff]
    %s1024 = scalar_lea.vmem [#allocation2], 480
    %v1025 = vld [vmem:[%s1024] ss:$2 sm:$0xff]
    %s1026 = scalar_lea.vmem [#allocation2], 528
    %v1027 = vld [vmem:[%s1026] ss:$2 sm:$0xff]
    %s1028 = scalar_lea.vmem [#allocation2], 576
    %v1029 = vld [vmem:[%s1028] ss:$2 sm:$0xff]
    %s1030 = scalar_lea.vmem [#allocation2], 624
    %v1031 = vld [vmem:[%s1030] ss:$2 sm:$0xff]
    %s1032 = scalar_lea.vmem [#allocation2], 672
    %v1033 = vld [vmem:[%s1032] ss:$2 sm:$0xff]
    %s1034 = scalar_lea.vmem [#allocation2], 720
    %v1035 = vld [vmem:[%s1034] ss:$2 sm:$0xff]
    %s1036 = scalar_lea.vmem [#allocation2], 768
    %v1037 = vld [vmem:[%s1036] ss:$2 sm:$0xff]
    %s1038 = scalar_lea.vmem [#allocation2], 1
    %v1039 = vld [vmem:[%s1038] ss:$2 sm:$0xff]
    %s1040 = scalar_lea.vmem [#allocation2], 49
    %v1041 = vld [vmem:[%s1040] ss:$2 sm:$0xff]
    %s1042 = scalar_lea.vmem [#allocation2], 97
    %v1043 = vld [vmem:[%s1042] ss:$2 sm:$0xff]
    %s1044 = scalar_lea.vmem [#allocation2], 145
    %v1045 = vld [vmem:[%s1044] ss:$2 sm:$0xff]
    %s1046 = scalar_lea.vmem [#allocation2], 193
    %v1047 = vld [vmem:[%s1046] ss:$2 sm:$0xff]
    %s1048 = scalar_lea.vmem [#allocation2], 241
    %v1049 = vld [vmem:[%s1048] ss:$2 sm:$0xff]
    %s1050 = scalar_lea.vmem [#allocation2], 289
    %v1051 = vld [vmem:[%s1050] ss:$2 sm:$0xff]
    %s1052 = scalar_lea.vmem [#allocation2], 337
    %v1053 = vld [vmem:[%s1052] ss:$2 sm:$0xff]
    %s1054 = scalar_lea.vmem [#allocation2], 433
    %v1055 = vld [vmem:[%s1054] ss:$2 sm:$0xff]
    %s1056 = scalar_lea.vmem [#allocation2], 481
    %v1057 = vld [vmem:[%s1056] ss:$2 sm:$0xff]
    %s1058 = scalar_lea.vmem [#allocation2], 529
    %v1059 = vld [vmem:[%s1058] ss:$2 sm:$0xff]
    %s1060 = scalar_lea.vmem [#allocation2], 577
    %v1061 = vld [vmem:[%s1060] ss:$2 sm:$0xff]
    %s1062 = scalar_lea.vmem [#allocation2], 625
    %v1063 = vld [vmem:[%s1062] ss:$2 sm:$0xff]
    %s1064 = scalar_lea.vmem [#allocation2], 673
    %v1065 = vld [vmem:[%s1064] ss:$2 sm:$0xff]
    %s1066 = scalar_lea.vmem [#allocation2], 721
    %v1067 = vld [vmem:[%s1066] ss:$2 sm:$0xff]
    %s1068 = scalar_lea.vmem [#allocation2], 769
    %v1069 = vld [vmem:[%s1068] ss:$2 sm:$0xff]
    %s1070 = scalar_lea.vmem [#allocation2], 2
    %v1071 = vld [vmem:[%s1070] ss:$2 sm:$0xff]
    %s1072 = scalar_lea.vmem [#allocation2], 50
    %v1073 = vld [vmem:[%s1072] ss:$2 sm:$0xff]
    %s1074 = scalar_lea.vmem [#allocation2], 98
    %v1075 = vld [vmem:[%s1074] ss:$2 sm:$0xff]
    %s1076 = scalar_lea.vmem [#allocation2], 146
    %v1077 = vld [vmem:[%s1076] ss:$2 sm:$0xff]
    %s1078 = scalar_lea.vmem [#allocation2], 194
    %v1079 = vld [vmem:[%s1078] ss:$2 sm:$0xff]
    %s1080 = scalar_lea.vmem [#allocation2], 242
    %v1081 = vld [vmem:[%s1080] ss:$2 sm:$0xff]
    %s1082 = scalar_lea.vmem [#allocation2], 290
    %v1083 = vld [vmem:[%s1082] ss:$2 sm:$0xff]
    %s1084 = scalar_lea.vmem [#allocation2], 338
    %v1085 = vld [vmem:[%s1084] ss:$2 sm:$0xff]
    %s1086 = scalar_lea.vmem [#allocation2], 434
    %v1087 = vld [vmem:[%s1086] ss:$2 sm:$0xff]
    %s1088 = scalar_lea.vmem [#allocation2], 482
    %v1089 = vld [vmem:[%s1088] ss:$2 sm:$0xff]
    %s1090 = scalar_lea.vmem [#allocation2], 530
    %v1091 = vld [vmem:[%s1090] ss:$2 sm:$0xff]
    %s1092 = scalar_lea.vmem [#allocation2], 578
    %v1093 = vld [vmem:[%s1092] ss:$2 sm:$0xff]
    %s1094 = scalar_lea.vmem [#allocation2], 626
    %v1095 = vld [vmem:[%s1094] ss:$2 sm:$0xff]
    %s1096 = scalar_lea.vmem [#allocation2], 674
    %v1097 = vld [vmem:[%s1096] ss:$2 sm:$0xff]
    %s1098 = scalar_lea.vmem [#allocation2], 722
    %v1099 = vld [vmem:[%s1098] ss:$2 sm:$0xff]
    %s1100 = scalar_lea.vmem [#allocation2], 770
    %v1101 = vld [vmem:[%s1100] ss:$2 sm:$0xff]
    %v1102 = vld [vmem:[%s942] ss:$2 sm:$0xff]
    %s1103 = scalar_lea.vmem %s942, 48 [#allocation2]
    %v1104 = vld [vmem:[%s1103] ss:$2 sm:$0xff]
    %s1105 = scalar_lea.vmem %s942, 96 [#allocation2]
    %v1106 = vld [vmem:[%s1105] ss:$2 sm:$0xff]
    %s1107 = scalar_lea.vmem %s942, 144 [#allocation2]
    %v1108 = vld [vmem:[%s1107] ss:$2 sm:$0xff]
    %s1109 = scalar_lea.vmem %s942, 192 [#allocation2]
    %v1110 = vld [vmem:[%s1109] ss:$2 sm:$0xff]
    %s1111 = scalar_lea.vmem %s942, 240 [#allocation2]
    %v1112 = vld [vmem:[%s1111] ss:$2 sm:$0xff]
    %s1113 = scalar_lea.vmem %s942, 288 [#allocation2]
    %v1114 = vld [vmem:[%s1113] ss:$2 sm:$0xff]
    %s1115 = scalar_lea.vmem %s942, 336 [#allocation2]
    %v1116 = vld [vmem:[%s1115] ss:$2 sm:$0xff]
    %s1117 = scalar_lea.vmem %s942, 432 [#allocation2]
    %v1118 = vld [vmem:[%s1117] ss:$2 sm:$0xff]
    %s1119 = scalar_lea.vmem %s942, 480 [#allocation2]
    %v1120 = vld [vmem:[%s1119] ss:$2 sm:$0xff]
    %s1121 = scalar_lea.vmem %s942, 528 [#allocation2]
    %v1122 = vld [vmem:[%s1121] ss:$2 sm:$0xff]
    %s1123 = scalar_lea.vmem %s942, 576 [#allocation2]
    %v1124 = vld [vmem:[%s1123] ss:$2 sm:$0xff]
    %s1125 = scalar_lea.vmem %s942, 624 [#allocation2]
    %v1126 = vld [vmem:[%s1125] ss:$2 sm:$0xff]
    %s1127 = scalar_lea.vmem %s942, 672 [#allocation2]
    %v1128 = vld [vmem:[%s1127] ss:$2 sm:$0xff]
    %s1129 = scalar_lea.vmem %s942, 720 [#allocation2]
    %v1130 = vld [vmem:[%s1129] ss:$2 sm:$0xff]
    %s1131 = scalar_lea.vmem %s942, 768 [#allocation2]
    %v1132 = vld [vmem:[%s1131] ss:$2 sm:$0xff]
    %s1133 = scalar_lea.vmem %s942, 1 [#allocation2]
    %v1134 = vld [vmem:[%s1133] ss:$2 sm:$0xff]
    %s1135 = scalar_lea.vmem %s942, 49 [#allocation2]
    %v1136 = vld [vmem:[%s1135] ss:$2 sm:$0xff]
    %s1137 = scalar_lea.vmem %s942, 97 [#allocation2]
    %v1138 = vld [vmem:[%s1137] ss:$2 sm:$0xff]
    %s1139 = scalar_lea.vmem %s942, 145 [#allocation2]
    %v1140 = vld [vmem:[%s1139] ss:$2 sm:$0xff]
    %s1141 = scalar_lea.vmem %s942, 193 [#allocation2]
    %v1142 = vld [vmem:[%s1141] ss:$2 sm:$0xff]
    %s1143 = scalar_lea.vmem %s942, 241 [#allocation2]
    %v1144 = vld [vmem:[%s1143] ss:$2 sm:$0xff]
    %s1145 = scalar_lea.vmem %s942, 289 [#allocation2]
    %v1146 = vld [vmem:[%s1145] ss:$2 sm:$0xff]
    %s1147 = scalar_lea.vmem %s942, 337 [#allocation2]
    %v1148 = vld [vmem:[%s1147] ss:$2 sm:$0xff]
    %s1149 = scalar_lea.vmem %s942, 433 [#allocation2]
    %v1150 = vld [vmem:[%s1149] ss:$2 sm:$0xff]
    %s1151 = scalar_lea.vmem %s942, 481 [#allocation2]
    %v1152 = vld [vmem:[%s1151] ss:$2 sm:$0xff]
    %s1153 = scalar_lea.vmem %s942, 529 [#allocation2]
    %v1154 = vld [vmem:[%s1153] ss:$2 sm:$0xff]
    %s1155 = scalar_lea.vmem %s942, 577 [#allocation2]
    %v1156 = vld [vmem:[%s1155] ss:$2 sm:$0xff]
    %s1157 = scalar_lea.vmem %s942, 625 [#allocation2]
    %v1158 = vld [vmem:[%s1157] ss:$2 sm:$0xff]
    %s1159 = scalar_lea.vmem %s942, 673 [#allocation2]
    %v1160 = vld [vmem:[%s1159] ss:$2 sm:$0xff]
    %s1161 = scalar_lea.vmem %s942, 721 [#allocation2]
    %v1162 = vld [vmem:[%s1161] ss:$2 sm:$0xff]
    %s1163 = scalar_lea.vmem %s942, 769 [#allocation2]
    %v1164 = vld [vmem:[%s1163] ss:$2 sm:$0xff]
    %s1165 = scalar_lea.vmem %s942, 2 [#allocation2]
    %v1166 = vld [vmem:[%s1165] ss:$2 sm:$0xff]
    %s1167 = scalar_lea.vmem %s942, 50 [#allocation2]
    %v1168 = vld [vmem:[%s1167] ss:$2 sm:$0xff]
    %s1169 = scalar_lea.vmem %s942, 98 [#allocation2]
    %v1170 = vld [vmem:[%s1169] ss:$2 sm:$0xff]
    %s1171 = scalar_lea.vmem %s942, 146 [#allocation2]
    %v1172 = vld [vmem:[%s1171] ss:$2 sm:$0xff]
    %s1173 = scalar_lea.vmem %s942, 194 [#allocation2]
    %v1174 = vld [vmem:[%s1173] ss:$2 sm:$0xff]
    %s1175 = scalar_lea.vmem %s942, 242 [#allocation2]
    %v1176 = vld [vmem:[%s1175] ss:$2 sm:$0xff]
    %s1177 = scalar_lea.vmem %s942, 290 [#allocation2]
    %v1178 = vld [vmem:[%s1177] ss:$2 sm:$0xff]
    %s1179 = scalar_lea.vmem %s942, 338 [#allocation2]
    %v1180 = vld [vmem:[%s1179] ss:$2 sm:$0xff]
    %s1181 = scalar_lea.vmem %s942, 434 [#allocation2]
    %v1182 = vld [vmem:[%s1181] ss:$2 sm:$0xff]
    %s1183 = scalar_lea.vmem %s942, 482 [#allocation2]
    %v1184 = vld [vmem:[%s1183] ss:$2 sm:$0xff]
    %s1185 = scalar_lea.vmem %s942, 530 [#allocation2]
    %v1186 = vld [vmem:[%s1185] ss:$2 sm:$0xff]
    %s1187 = scalar_lea.vmem %s942, 578 [#allocation2]
    %v1188 = vld [vmem:[%s1187] ss:$2 sm:$0xff]
    %s1189 = scalar_lea.vmem %s942, 626 [#allocation2]
    %v1190 = vld [vmem:[%s1189] ss:$2 sm:$0xff]
    %s1191 = scalar_lea.vmem %s942, 674 [#allocation2]
    %v1192 = vld [vmem:[%s1191] ss:$2 sm:$0xff]
    %s1193 = scalar_lea.vmem %s942, 722 [#allocation2]
    %v1194 = vld [vmem:[%s1193] ss:$2 sm:$0xff]
    %s1195 = scalar_lea.vmem %s942, 770 [#allocation2]
    %v1196 = vld [vmem:[%s1195] ss:$2 sm:$0xff]
    %s1197 = scalar_lea.vmem [#allocation2], 48
    %v1198 = vld [vmem:[%s1197] ss:$2 sm:$0xff]
    %s1199 = scalar_lea.vmem %s1197, 48 [#allocation2]
    %v1200 = vld [vmem:[%s1199] ss:$2 sm:$0xff]
    %s1201 = scalar_lea.vmem %s1197, 96 [#allocation2]
    %v1202 = vld [vmem:[%s1201] ss:$2 sm:$0xff]
    %s1203 = scalar_lea.vmem %s1197, 144 [#allocation2]
    %v1204 = vld [vmem:[%s1203] ss:$2 sm:$0xff]
    %s1205 = scalar_lea.vmem %s1197, 192 [#allocation2]
    %v1206 = vld [vmem:[%s1205] ss:$2 sm:$0xff]
    %s1207 = scalar_lea.vmem %s1197, 240 [#allocation2]
    %v1208 = vld [vmem:[%s1207] ss:$2 sm:$0xff]
    %s1209 = scalar_lea.vmem %s1197, 288 [#allocation2]
    %v1210 = vld [vmem:[%s1209] ss:$2 sm:$0xff]
    %s1211 = scalar_lea.vmem %s1197, 336 [#allocation2]
    %v1212 = vld [vmem:[%s1211] ss:$2 sm:$0xff]
    %s1213 = scalar_lea.vmem %s1197, 432 [#allocation2]
    %v1214 = vld [vmem:[%s1213] ss:$2 sm:$0xff]
    %s1215 = scalar_lea.vmem %s1197, 480 [#allocation2]
    %v1216 = vld [vmem:[%s1215] ss:$2 sm:$0xff]
    %s1217 = scalar_lea.vmem %s1197, 528 [#allocation2]
    %v1218 = vld [vmem:[%s1217] ss:$2 sm:$0xff]
    %s1219 = scalar_lea.vmem %s1197, 576 [#allocation2]
    %v1220 = vld [vmem:[%s1219] ss:$2 sm:$0xff]
    %s1221 = scalar_lea.vmem %s1197, 624 [#allocation2]
    %v1222 = vld [vmem:[%s1221] ss:$2 sm:$0xff]
    %s1223 = scalar_lea.vmem %s1197, 672 [#allocation2]
    %v1224 = vld [vmem:[%s1223] ss:$2 sm:$0xff]
    %s1225 = scalar_lea.vmem %s1197, 720 [#allocation2]
    %v1226 = vld [vmem:[%s1225] ss:$2 sm:$0xff]
    %s1227 = scalar_lea.vmem %s1197, 768 [#allocation2]
    %v1228 = vld [vmem:[%s1227] ss:$2 sm:$0xff]
    %s1229 = scalar_lea.vmem %s1197, 1 [#allocation2]
    %v1230 = vld [vmem:[%s1229] ss:$2 sm:$0xff]
    %s1231 = scalar_lea.vmem %s1197, 49 [#allocation2]
    %v1232 = vld [vmem:[%s1231] ss:$2 sm:$0xff]
    %s1233 = scalar_lea.vmem %s1197, 97 [#allocation2]
    %v1234 = vld [vmem:[%s1233] ss:$2 sm:$0xff]
    %s1235 = scalar_lea.vmem %s1197, 145 [#allocation2]
    %v1236 = vld [vmem:[%s1235] ss:$2 sm:$0xff]
    %s1237 = scalar_lea.vmem %s1197, 193 [#allocation2]
    %v1238 = vld [vmem:[%s1237] ss:$2 sm:$0xff]
    %s1239 = scalar_lea.vmem %s1197, 241 [#allocation2]
    %v1240 = vld [vmem:[%s1239] ss:$2 sm:$0xff]
    %s1241 = scalar_lea.vmem %s1197, 289 [#allocation2]
    %v1242 = vld [vmem:[%s1241] ss:$2 sm:$0xff]
    %s1243 = scalar_lea.vmem %s1197, 337 [#allocation2]
    %v1244 = vld [vmem:[%s1243] ss:$2 sm:$0xff]
    %s1245 = scalar_lea.vmem %s1197, 433 [#allocation2]
    %v1246 = vld [vmem:[%s1245] ss:$2 sm:$0xff]
    %s1247 = scalar_lea.vmem %s1197, 481 [#allocation2]
    %v1248 = vld [vmem:[%s1247] ss:$2 sm:$0xff]
    %s1249 = scalar_lea.vmem %s1197, 529 [#allocation2]
    %v1250 = vld [vmem:[%s1249] ss:$2 sm:$0xff]
    %s1251 = scalar_lea.vmem %s1197, 577 [#allocation2]
    %v1252 = vld [vmem:[%s1251] ss:$2 sm:$0xff]
    %s1253 = scalar_lea.vmem %s1197, 625 [#allocation2]
    %v1254 = vld [vmem:[%s1253] ss:$2 sm:$0xff]
    %s1255 = scalar_lea.vmem %s1197, 673 [#allocation2]
    %v1256 = vld [vmem:[%s1255] ss:$2 sm:$0xff]
    %s1257 = scalar_lea.vmem %s1197, 721 [#allocation2]
    %v1258 = vld [vmem:[%s1257] ss:$2 sm:$0xff]
    %s1259 = scalar_lea.vmem %s1197, 769 [#allocation2]
    %v1260 = vld [vmem:[%s1259] ss:$2 sm:$0xff]
    %s1261 = scalar_lea.vmem %s1197, 2 [#allocation2]
    %v1262 = vld [vmem:[%s1261] ss:$2 sm:$0xff]
    %s1263 = scalar_lea.vmem %s1197, 50 [#allocation2]
    %v1264 = vld [vmem:[%s1263] ss:$2 sm:$0xff]
    %s1265 = scalar_lea.vmem %s1197, 98 [#allocation2]
    %v1266 = vld [vmem:[%s1265] ss:$2 sm:$0xff]
    %s1267 = scalar_lea.vmem %s1197, 146 [#allocation2]
    %v1268 = vld [vmem:[%s1267] ss:$2 sm:$0xff]
    %s1269 = scalar_lea.vmem %s1197, 194 [#allocation2]
    %v1270 = vld [vmem:[%s1269] ss:$2 sm:$0xff]
    %s1271 = scalar_lea.vmem %s1197, 242 [#allocation2]
    %v1272 = vld [vmem:[%s1271] ss:$2 sm:$0xff]
    %s1273 = scalar_lea.vmem %s1197, 290 [#allocation2]
    %v1274 = vld [vmem:[%s1273] ss:$2 sm:$0xff]
    %s1275 = scalar_lea.vmem %s1197, 338 [#allocation2]
    %v1276 = vld [vmem:[%s1275] ss:$2 sm:$0xff]
    %s1277 = scalar_lea.vmem %s1197, 434 [#allocation2]
    %v1278 = vld [vmem:[%s1277] ss:$2 sm:$0xff]
    %s1279 = scalar_lea.vmem %s1197, 482 [#allocation2]
    %v1280 = vld [vmem:[%s1279] ss:$2 sm:$0xff]
    %s1281 = scalar_lea.vmem %s1197, 530 [#allocation2]
    %v1282 = vld [vmem:[%s1281] ss:$2 sm:$0xff]
    %s1283 = scalar_lea.vmem %s1197, 578 [#allocation2]
    %v1284 = vld [vmem:[%s1283] ss:$2 sm:$0xff]
    %s1285 = scalar_lea.vmem %s1197, 626 [#allocation2]
    %v1286 = vld [vmem:[%s1285] ss:$2 sm:$0xff]
    %s1287 = scalar_lea.vmem %s1197, 674 [#allocation2]
    %v1288 = vld [vmem:[%s1287] ss:$2 sm:$0xff]
    %s1289 = scalar_lea.vmem %s1197, 722 [#allocation2]
    %v1290 = vld [vmem:[%s1289] ss:$2 sm:$0xff]
    %s1291 = scalar_lea.vmem %s1197, 770 [#allocation2]
    %v1292 = vld [vmem:[%s1291] ss:$2 sm:$0xff]
    %v1293 = vld [vmem:[#allocation8] sm:$0xff]
    %v1294 = vld [vmem:[#allocation8 + $0x8] sm:$0xff]
    %v1295 = vld [vmem:[#allocation8 + $0x10] sm:$0xff]
    %v1296 = vld [vmem:[#allocation8 + $0x18] sm:$0xff]
    %v1297 = vld [vmem:[#allocation8 + $0x20] sm:$0xff]
    %v1298 = vld [vmem:[#allocation8 + $0x28] sm:$0xff]
    %v1299 = vld [vmem:[#allocation8 + $0x30] sm:$0xff]
    %v1300 = vld [vmem:[#allocation8 + $0x38] sm:$0xff]
    %v1301 = vld [vmem:[#allocation8 + $0x40] sm:$0xff]
    %v1302 = vld [vmem:[#allocation8 + $0x48] sm:$0xff]
    %v1303 = vld [vmem:[#allocation8 + $0x50] sm:$0xff]
    %v1304 = vld [vmem:[#allocation8 + $0x58] sm:$0xff]
    %v1305 = vld [vmem:[#allocation8 + $0x60] sm:$0xff]
    %v1306 = vld [vmem:[#allocation8 + $0x68] sm:$0xff]
    %v1307 = vld [vmem:[#allocation8 + $0x70] sm:$0xff]
    %v1308 = vld [vmem:[#allocation8 + $0x78] sm:$0xff]
    %v1309 = vld [vmem:[#allocation8 + $0x80] sm:$0xff]
    %v1310 = vld [vmem:[#allocation8 + $0x88] sm:$0xff]
    %v1311 = vld [vmem:[#allocation8 + $0x90] sm:$0xff]
    %v1312 = vld [vmem:[#allocation8 + $0x98] sm:$0xff]
    %v1313 = vld [vmem:[#allocation8 + $0xa0] sm:$0xff]
    %v1314 = vld [vmem:[#allocation8 + $0xa8] sm:$0xff]
    %v1315 = vld [vmem:[#allocation8 + $0xb0] sm:$0xff]
    %v1316 = vld [vmem:[#allocation8 + $0xb8] sm:$0xff]
    %v1317 = vld [vmem:[#allocation8 + $0xc0] sm:$0xff]
    %v1318 = vld [vmem:[#allocation8 + $0xc8] sm:$0xff]
    %v1319 = vld [vmem:[#allocation8 + $0xd0] sm:$0xff]
    %v1320 = vld [vmem:[#allocation8 + $0xd8] sm:$0xff]
    %v1321 = vld [vmem:[#allocation8 + $0xe0] sm:$0xff]
    %v1322 = vld [vmem:[#allocation8 + $0xe8] sm:$0xff]
    %v1323 = vld [vmem:[#allocation8 + $0xf0] sm:$0xff]
    %v1324 = vld [vmem:[#allocation8 + $0xf8] sm:$0xff]
    %v1325 = vld [vmem:[#allocation8 + $0x100] sm:$0xff]
    %v1326 = vld [vmem:[#allocation8 + $0x108] sm:$0xff]
    %v1327 = vld [vmem:[#allocation8 + $0x110] sm:$0xff]
    %v1328 = vld [vmem:[#allocation8 + $0x118] sm:$0xff]
    %v1329 = vld [vmem:[#allocation8 + $0x120] sm:$0xff]
    %v1330 = vld [vmem:[#allocation8 + $0x128] sm:$0xff]
    %v1331 = vld [vmem:[#allocation8 + $0x130] sm:$0xff]
    %v1332 = vld [vmem:[#allocation8 + $0x138] sm:$0xff]
    %v1333 = vld [vmem:[#allocation8 + $0x140] sm:$0xff]
    %v1334 = vld [vmem:[#allocation8 + $0x148] sm:$0xff]
    %v1335 = vld [vmem:[#allocation8 + $0x150] sm:$0xff]
    %v1336 = vld [vmem:[#allocation8 + $0x158] sm:$0xff]
    %v1337 = vld [vmem:[#allocation8 + $0x160] sm:$0xff]
    %v1338 = vld [vmem:[#allocation8 + $0x168] sm:$0xff]
    %v1339 = vld [vmem:[#allocation8 + $0x170] sm:$0xff]
    %v1340 = vld [vmem:[#allocation8 + $0x178] sm:$0xff]
    %v1341 = vld [vmem:[#allocation8 + $0x180] sm:$0xff]
    %v1342 = vld [vmem:[#allocation8 + $0x188] sm:$0xff]
    %v1343 = vld [vmem:[#allocation8 + $0x190] sm:$0xff]
    %v1344 = vld [vmem:[#allocation8 + $0x198] sm:$0xff]
    %v1345 = vld [vmem:[#allocation8 + $0x1a0] sm:$0xff]
    %v1346 = vld [vmem:[#allocation8 + $0x1a8] sm:$0xff]
    %v1347 = vld [vmem:[#allocation8 + $0x1b0] sm:$0xff]
    %v1348 = vld [vmem:[#allocation8 + $0x1b8] sm:$0xff]
    %v1349 = vld [vmem:[#allocation8 + $0x1c0] sm:$0xff]
    %v1350 = vld [vmem:[#allocation8 + $0x1c8] sm:$0xff]
    %v1351 = vld [vmem:[#allocation8 + $0x1d0] sm:$0xff]
    %v1352 = vld [vmem:[#allocation8 + $0x1d8] sm:$0xff]
    %v1353 = vld [vmem:[#allocation8 + $0x1e0] sm:$0xff]
    %v1354 = vld [vmem:[#allocation8 + $0x1e8] sm:$0xff]
    %v1355 = vld [vmem:[#allocation8 + $0x1f0] sm:$0xff]
    %v1356 = vld [vmem:[#allocation8 + $0x1f8] sm:$0xff]
    %v1357 = vld [vmem:[#allocation8 + $0x200] sm:$0xff]
    %v1358 = vld [vmem:[#allocation8 + $0x208] sm:$0xff]
    %v1359 = vld [vmem:[#allocation8 + $0x210] sm:$0xff]
    %v1360 = vld [vmem:[#allocation8 + $0x218] sm:$0xff]
    %v1361 = vld [vmem:[#allocation8 + $0x220] sm:$0xff]
    %v1362 = vld [vmem:[#allocation8 + $0x228] sm:$0xff]
    %v1363 = vld [vmem:[#allocation8 + $0x230] sm:$0xff]
    %v1364 = vld [vmem:[#allocation8 + $0x238] sm:$0xff]
    %v1365 = vld [vmem:[#allocation8 + $0x240] sm:$0xff]
    %v1366 = vld [vmem:[#allocation8 + $0x248] sm:$0xff]
    %v1367 = vld [vmem:[#allocation8 + $0x250] sm:$0xff]
    %v1368 = vld [vmem:[#allocation8 + $0x258] sm:$0xff]
    %v1369 = vld [vmem:[#allocation8 + $0x260] sm:$0xff]
    %v1370 = vld [vmem:[#allocation8 + $0x268] sm:$0xff]
    %v1371 = vld [vmem:[#allocation8 + $0x270] sm:$0xff]
    %v1372 = vld [vmem:[#allocation8 + $0x278] sm:$0xff]
    %v1373 = vld [vmem:[#allocation8 + $0x280] sm:$0xff]
    %v1374 = vld [vmem:[#allocation8 + $0x288] sm:$0xff]
    %v1375 = vld [vmem:[#allocation8 + $0x290] sm:$0xff]
    %v1376 = vld [vmem:[#allocation8 + $0x298] sm:$0xff]
    %v1377 = vld [vmem:[#allocation8 + $0x2a0] sm:$0xff]
    %v1378 = vld [vmem:[#allocation8 + $0x2a8] sm:$0xff]
    %v1379 = vld [vmem:[#allocation8 + $0x2b0] sm:$0xff]
    %v1380 = vld [vmem:[#allocation8 + $0x2b8] sm:$0xff]
    %v1381 = vld [vmem:[#allocation8 + $0x2c0] sm:$0xff]
    %v1382 = vld [vmem:[#allocation8 + $0x2c8] sm:$0xff]
    %v1383 = vld [vmem:[#allocation8 + $0x2d0] sm:$0xff]
    %v1384 = vld [vmem:[#allocation8 + $0x2d8] sm:$0xff]
    %v1385 = vld [vmem:[#allocation8 + $0x2e0] sm:$0xff]
    %v1386 = vld [vmem:[#allocation8 + $0x2e8] sm:$0xff]
    %v1387 = vld [vmem:[#allocation8 + $0x2f0] sm:$0xff]
    %v1388 = vld [vmem:[#allocation8 + $0x2f8] sm:$0xff]
    %v1389 = vld [vmem:[#allocation8 + $0x300] sm:$0xff]
    %v1390 = vld [vmem:[#allocation8 + $0x308] sm:$0xff]
    %v1391 = vld [vmem:[#allocation8 + $0x310] sm:$0xff]
    %v1392 = vld [vmem:[#allocation8 + $0x318] sm:$0xff]
    %v1393 = vld [vmem:[#allocation8 + $0x320] sm:$0xff]
    %v1394 = vld [vmem:[#allocation8 + $0x328] sm:$0xff]
    %v1395 = vld [vmem:[#allocation8 + $0x330] sm:$0xff]
    %v1396 = vld [vmem:[#allocation8 + $0x338] sm:$0xff]
    %v1397 = vld [vmem:[#allocation8 + $0x340] sm:$0xff]
    %v1398 = vld [vmem:[#allocation8 + $0x348] sm:$0xff]
    %v1399 = vld [vmem:[#allocation8 + $0x350] sm:$0xff]
    %v1400 = vld [vmem:[#allocation8 + $0x358] sm:$0xff]
    %v1401 = vld [vmem:[#allocation8 + $0x360] sm:$0xff]
    %v1402 = vld [vmem:[#allocation8 + $0x368] sm:$0xff]
    %v1403 = vld [vmem:[#allocation8 + $0x370] sm:$0xff]
    %v1404 = vld [vmem:[#allocation8 + $0x378] sm:$0xff]
    %v1405 = vld [vmem:[#allocation8 + $0x380] sm:$0xff]
    %v1406 = vld [vmem:[#allocation8 + $0x388] sm:$0xff]
    %v1407 = vld [vmem:[#allocation8 + $0x390] sm:$0xff]
    %v1408 = vld [vmem:[#allocation8 + $0x398] sm:$0xff]
    %v1409 = vld [vmem:[#allocation8 + $0x3a0] sm:$0xff]
    %v1410 = vld [vmem:[#allocation8 + $0x3a8] sm:$0xff]
    %v1411 = vld [vmem:[#allocation8 + $0x3b0] sm:$0xff]
    %v1412 = vld [vmem:[#allocation8 + $0x3b8] sm:$0xff]
    %v1413 = vld [vmem:[#allocation8 + $0x3c0] sm:$0xff]
    %v1414 = vld [vmem:[#allocation8 + $0x3c8] sm:$0xff]
    %v1415 = vld [vmem:[#allocation8 + $0x3d0] sm:$0xff]
    %v1416 = vld [vmem:[#allocation8 + $0x3d8] sm:$0xff]
    %v1417 = vld [vmem:[#allocation8 + $0x3e0] sm:$0xff]
    %v1418 = vld [vmem:[#allocation8 + $0x3e8] sm:$0xff]
    %v1419 = vld [vmem:[#allocation8 + $0x3f0] sm:$0xff]
    %v1420 = vld [vmem:[#allocation8 + $0x3f8] sm:$0xff]
    %v1421 = vld [vmem:[#allocation8 + $0x400] sm:$0xff]
    %v1422 = vld [vmem:[#allocation8 + $0x408] sm:$0xff]
    %v1423 = vld [vmem:[#allocation8 + $0x410] sm:$0xff]
    %v1424 = vld [vmem:[#allocation8 + $0x418] sm:$0xff]
    %v1425 = vld [vmem:[#allocation8 + $0x420] sm:$0xff]
    %v1426 = vld [vmem:[#allocation8 + $0x428] sm:$0xff]
    %v1427 = vld [vmem:[#allocation8 + $0x430] sm:$0xff]
    %v1428 = vld [vmem:[#allocation8 + $0x438] sm:$0xff]
    %v1429 = vld [vmem:[#allocation8 + $0x440] sm:$0xff]
    %v1430 = vld [vmem:[#allocation8 + $0x448] sm:$0xff]
    %v1431 = vld [vmem:[#allocation8 + $0x450] sm:$0xff]
    %v1432 = vld [vmem:[#allocation8 + $0x458] sm:$0xff]
    %v1433 = vld [vmem:[#allocation8 + $0x460] sm:$0xff]
    %v1434 = vld [vmem:[#allocation8 + $0x468] sm:$0xff]
    %v1435 = vld [vmem:[#allocation8 + $0x470] sm:$0xff]
    %v1436 = vld [vmem:[#allocation8 + $0x478] sm:$0xff]
    %v1437 = vld [vmem:[%s4] sm:$0x1]
    %v1439 = vlaneseq
    %v1440 = vshrl.u32 %v1439, 7
    %v1441 = vsub.s32 0, %v1440
    %v1442 = vrot.slane %v1437, %v1441
    %1444 = vmatprep.subr.mxu0 0.0
    %1445 = vmatpush1.msra.mxu0 %v1293
    %1446 = vmatprep.subr.mxu0 0.0
    %1447 = vmatpush1.msra.mxu0 %v1294
    %1448 = vmatprep.subr.mxu0 0.0
    %1449 = vmatpush1.msra.mxu0 %v1295
    %1450 = vmatprep.subr.mxu0 0.0
    %1451 = vmatpush1.msra.mxu0 %v1296
    %1452 = vmatprep.subr.mxu0 0.0
    %1453 = vmatpush1.msra.mxu0 %v1297
    %1454 = vmatprep.subr.mxu0 0.0
    %1455 = vmatpush1.msra.mxu0 %v1298
    %1456 = vmatprep.subr.mxu0 0.0
    %1457 = vmatpush1.msra.mxu0 %v1299
    %1458 = vmatprep.subr.mxu0 0.0
    %1459 = vmatpush1.msra.mxu0 %v1300
    %1460 = vmatprep.subr.mxu0 0.0
    %1461 = vmatpush1.msra.mxu0 %v1301
    %1462 = vmatprep.subr.mxu0 0.0
    %1463 = vmatpush1.msra.mxu0 %v1302
    %1464 = vmatprep.subr.mxu0 0.0
    %1465 = vmatpush1.msra.mxu0 %v1303
    %1466 = vmatprep.subr.mxu0 0.0
    %1467 = vmatpush1.msra.mxu0 %v1304
    %1468 = vmatprep.subr.mxu0 0.0
    %1469 = vmatpush1.msra.mxu0 %v1305
    %1470 = vmatprep.subr.mxu0 0.0
    %1471 = vmatpush1.msra.mxu0 %v1306
    %1472 = vmatprep.subr.mxu0 0.0
    %1473 = vmatpush1.msra.mxu0 %v1307
    %1474 = vmatprep.subr.mxu0 0.0
    %1475 = vmatpush1.msra.mxu0 %v1308
    %1476 = vmatprep.subr.mxu0 0.0
    %1477 = vmatpush1.msra.mxu0 %v1309
    %1478 = vmatprep.subr.mxu0 0.0
    %1479 = vmatpush1.msra.mxu0 %v1310
    %1480 = vmatprep.subr.mxu0 0.0
    %1481 = vmatpush1.msra.mxu0 %v1311
    %1482 = vmatprep.subr.mxu0 0.0
    %1483 = vmatpush1.msra.mxu0 %v1312
    %1484 = vmatprep.subr.mxu0 0.0
    %1485 = vmatpush1.msra.mxu0 %v1313
    %1486 = vmatprep.subr.mxu0 0.0
    %1487 = vmatpush1.msra.mxu0 %v1314
    %1488 = vmatprep.subr.mxu0 0.0
    %1489 = vmatpush1.msra.mxu0 %v1315
    %1490 = vmatprep.subr.mxu0 0.0
    %1491 = vmatpush1.msra.mxu0 %v1316
    %1492 = vmatprep.subr.mxu0 0.0
    %1493 = vmatpush1.msra.mxu0 %v1317
    %1494 = vmatprep.subr.mxu0 0.0
    %1495 = vmatpush1.msra.mxu0 %v1318
    %1496 = vmatprep.subr.mxu0 0.0
    %1497 = vmatpush1.msra.mxu0 %v1319
    %1498 = vmatprep.subr.mxu0 0.0
    %1499 = vmatpush1.msra.mxu0 %v1320
    %1500 = vmatprep.subr.mxu0 0.0
    %1501 = vmatpush1.msra.mxu0 %v1321
    %1502 = vmatprep.subr.mxu0 0.0
    %1503 = vmatpush1.msra.mxu0 %v1322
    %1504 = vmatprep.subr.mxu0 0.0
    %1505 = vmatpush1.msra.mxu0 %v1323
    %1506 = vmatprep.subr.mxu0 0.0
    %1507 = vmatpush1.msra.mxu0 %v1324
    %1508 = vmatprep.mubr.f32.mxu0 %v1039
    %1509 = vmatmul.mubr.f32.gmra.mrb[0].mxu0 %v1007
    %v1510 = vpop.f32.mrb[0].mxu0
    %v1511 = vadd.f32 %v1442, %v1510
    %v1512 = vpop.f32.mrb[0].mxu0
    %1513 = vmatprep.mubr.f32.mxu0 %v1041
    %1514 = vmatmul.mubr.f32.gmra.mrb[0].mxu0 %v1009
    %v1515 = vpop.f32.mrb[0].mxu0
    %v1516 = vadd.f32 %v1442, %v1515
    %v1517 = vpop.f32.mrb[0].mxu0
    %1518 = vmatprep.mubr.f32.mxu0 %v1043
    %1519 = vmatmul.mubr.f32.gmra.mrb[0].mxu0 %v1011
    %v1520 = vpop.f32.mrb[0].mxu0
    %v1521 = vadd.f32 %v1442, %v1520
    %v1522 = vpop.f32.mrb[0].mxu0
    %1523 = vmatprep.mubr.f32.mxu0 %v1045
    %1524 = vmatmul.mubr.f32.gmra.mrb[0].mxu0 %v1013
    %v1525 = vpop.f32.mrb[0].mxu0
    %v1526 = vadd.f32 %v1442, %v1525
    %v1527 = vpop.f32.mrb[0].mxu0
    %1528 = vmatprep.mubr.f32.mxu0 %v1047
    %1529 = vmatmul.mubr.f32.gmra.mrb[0].mxu0 %v1015
    %v1530 = vpop.f32.mrb[0].mxu0
    %v1531 = vadd.f32 %v1442, %v1530
    %v1532 = vpop.f32.mrb[0].mxu0
    %1533 = vmatprep.mubr.f32.mxu0 %v1049
    %1534 = vmatmul.mubr.f32.gmra.mrb[0].mxu0 %v1017
    %v1535 = vpop.f32.mrb[0].mxu0
    %v1536 = vadd.f32 %v1442, %v1535
    %v1537 = vpop.f32.mrb[0].mxu0
    %1538 = vmatprep.mubr.f32.mxu0 %v1051
    %1539 = vmatmul.mubr.f32.gmra.mrb[0].mxu0 %v1019
    %v1540 = vpop.f32.mrb[0].mxu0
    %v1541 = vadd.f32 %v1442, %v1540
    %v1542 = vpop.f32.mrb[0].mxu0
    %1543 = vmatprep.mubr.f32.mxu0 %v1053
    %1544 = vmatmul.mubr.f32.gmra.mrb[0].mxu0 %v1021
    %v1545 = vpop.f32.mrb[0].mxu0
    %v1546 = vadd.f32 %v1442, %v1545
    %v1547 = vpop.f32.mrb[0].mxu0
    %1548 = vmatprep.mubr.f32.mxu0 %v1055
    %1549 = vmatmul.mubr.f32.gmra.mrb[0].mxu0 %v1023
    %v1550 = vpop.f32.mrb[0].mxu0
    %v1551 = vadd.f32 %v1442, %v1550
    %v1552 = vpop.f32.mrb[0].mxu0
    %1553 = vmatprep.mubr.f32.mxu0 %v1057
    %1554 = vmatmul.mubr.f32.gmra.mrb[0].mxu0 %v1025
    %v1555 = vpop.f32.mrb[0].mxu0
    %v1556 = vadd.f32 %v1442, %v1555
    %v1557 = vpop.f32.mrb[0].mxu0
    %1558 = vmatprep.mubr.f32.mxu0 %v1059
    %1559 = vmatmul.mubr.f32.gmra.mrb[0].mxu0 %v1027
    %v1560 = vpop.f32.mrb[0].mxu0
    %v1561 = vadd.f32 %v1442, %v1560
    %v1562 = vpop.f32.mrb[0].mxu0
    %1563 = vmatprep.mubr.f32.mxu0 %v1061
    %1564 = vmatmul.mubr.f32.gmra.mrb[0].mxu0 %v1029
    %v1565 = vpop.f32.mrb[0].mxu0
    %v1566 = vadd.f32 %v1442, %v1565
    %v1567 = vpop.f32.mrb[0].mxu0
    %1568 = vmatprep.mubr.f32.mxu0 %v1063
    %1569 = vmatmul.mubr.f32.gmra.mrb[0].mxu0 %v1031
    %v1570 = vpop.f32.mrb[0].mxu0
    %v1571 = vadd.f32 %v1442, %v1570
    %v1572 = vpop.f32.mrb[0].mxu0
    %1573 = vmatprep.mubr.f32.mxu0 %v1065
    %1574 = vmatmul.mubr.f32.gmra.mrb[0].mxu0 %v1033
    %v1575 = vpop.f32.mrb[0].mxu0
    %v1576 = vadd.f32 %v1442, %v1575
    %v1577 = vpop.f32.mrb[0].mxu0
    %1578 = vmatprep.mubr.f32.mxu0 %v1067
    %1579 = vmatmul.mubr.f32.gmra.mrb[0].mxu0 %v1035
    %v1580 = vpop.f32.mrb[0].mxu0
    %v1581 = vadd.f32 %v1442, %v1580
    %v1582 = vpop.f32.mrb[0].mxu0
    %1583 = vmatprep.mubr.f32.mxu0 %v1069
    %1584 = vmatmul.mubr.f32.gmra.mrb[0].mxu0 %v1037
    %v1585 = vpop.f32.mrb[0].mxu0
    %v1586 = vadd.f32 %v1442, %v1585
    %v1587 = vpop.f32.mrb[0].mxu0
    %1588 = vdwg.mxu0
    %1589 = vmatprep.subr.mxu0 0.0
    %1590 = vmatpush1.msra.mxu0 %v1325
    %1591 = vmatprep.subr.mxu0 0.0
    %1592 = vmatpush1.msra.mxu0 %v1326
    %1593 = vmatprep.subr.mxu0 0.0
    %1594 = vmatpush1.msra.mxu0 %v1327
    %1595 = vmatprep.subr.mxu0 0.0
    %1596 = vmatpush1.msra.mxu0 %v1328
    %1597 = vmatprep.subr.mxu0 0.0
    %1598 = vmatpush1.msra.mxu0 %v1329
    %1599 = vmatprep.subr.mxu0 0.0
    %1600 = vmatpush1.msra.mxu0 %v1330
    %1601 = vmatprep.subr.mxu0 0.0
    %1602 = vmatpush1.msra.mxu0 %v1331
    %1603 = vmatprep.subr.mxu0 0.0
    %1604 = vmatpush1.msra.mxu0 %v1332
    %1605 = vmatprep.subr.mxu0 0.0
    %1606 = vmatpush1.msra.mxu0 %v1333
    %1607 = vmatprep.subr.mxu0 0.0
    %1608 = vmatpush1.msra.mxu0 %v1334
    %1609 = vmatprep.subr.mxu0 0.0
    %1610 = vmatpush1.msra.mxu0 %v1335
    %1611 = vmatprep.subr.mxu0 0.0
    %1612 = vmatpush1.msra.mxu0 %v1336
    %1613 = vmatprep.subr.mxu0 0.0
    %1614 = vmatpush1.msra.mxu0 %v1337
    %1615 = vmatprep.subr.mxu0 0.0
    %1616 = vmatpush1.msra.mxu0 %v1338
    %1617 = vmatprep.subr.mxu0 0.0
    %1618 = vmatpush1.msra.mxu0 %v1339
    %1619 = vmatprep.subr.mxu0 0.0
    %1620 = vmatpush1.msra.mxu0 %v1340
    %1621 = vmatprep.subr.mxu0 0.0
    %1622 = vmatpush1.msra.mxu0 %v1341
    %1623 = vmatprep.subr.mxu0 0.0
    %1624 = vmatpush1.msra.mxu0 %v1342
    %1625 = vmatprep.subr.mxu0 0.0
    %1626 = vmatpush1.msra.mxu0 %v1343
    %1627 = vmatprep.subr.mxu0 0.0
    %1628 = vmatpush1.msra.mxu0 %v1344
    %1629 = vmatprep.subr.mxu0 0.0
    %1630 = vmatpush1.msra.mxu0 %v1345
    %1631 = vmatprep.subr.mxu0 0.0
    %1632 = vmatpush1.msra.mxu0 %v1346
    %1633 = vmatprep.subr.mxu0 0.0
    %1634 = vmatpush1.msra.mxu0 %v1347
    %1635 = vmatprep.subr.mxu0 0.0
    %1636 = vmatpush1.msra.mxu0 %v1348
    %1637 = vmatprep.subr.mxu0 0.0
    %1638 = vmatpush1.msra.mxu0 %v1349
    %1639 = vmatprep.subr.mxu0 0.0
    %1640 = vmatpush1.msra.mxu0 %v1350
    %1641 = vmatprep.subr.mxu0 0.0
    %1642 = vmatpush1.msra.mxu0 %v1351
    %1643 = vmatprep.subr.mxu0 0.0
    %1644 = vmatpush1.msra.mxu0 %v1352
    %1645 = vmatprep.subr.mxu0 0.0
    %1646 = vmatpush1.msra.mxu0 %v1353
    %1647 = vmatprep.subr.mxu0 0.0
    %1648 = vmatpush1.msra.mxu0 %v1354
    %1649 = vmatprep.subr.mxu0 0.0
    %1650 = vmatpush1.msra.mxu0 %v1355
    %1651 = vmatprep.subr.mxu0 0.0
    %1652 = vmatpush1.msra.mxu0 %v1356
    %1653 = vmatprep.mubr.f32.mxu0 %v1102
    %1654 = vmatmul.mubr.f32.gmra.mrb[0].mxu0 %v1071
    %v1655 = vpop.f32.mrb[0].mxu0
    %v1656 = vadd.f32 %v1511, %v1655
    %v1657 = vpop.f32.mrb[0].mxu0
    %1658 = vmatprep.mubr.f32.mxu0 %v1104
    %1659 = vmatmul.mubr.f32.gmra.mrb[0].mxu0 %v1073
    %v1660 = vpop.f32.mrb[0].mxu0
    %v1661 = vadd.f32 %v1516, %v1660
    %v1662 = vpop.f32.mrb[0].mxu0
    %1663 = vmatprep.mubr.f32.mxu0 %v1106
    %1664 = vmatmul.mubr.f32.gmra.mrb[0].mxu0 %v1075
    %v1665 = vpop.f32.mrb[0].mxu0
    %v1666 = vadd.f32 %v1521, %v1665
    %v1667 = vpop.f32.mrb[0].mxu0
    %1668 = vmatprep.mubr.f32.mxu0 %v1108
    %1669 = vmatmul.mubr.f32.gmra.mrb[0].mxu0 %v1077
    %v1670 = vpop.f32.mrb[0].mxu0
    %v1671 = vadd.f32 %v1526, %v1670
    %v1672 = vpop.f32.mrb[0].mxu0
    %1673 = vmatprep.mubr.f32.mxu0 %v1110
    %1674 = vmatmul.mubr.f32.gmra.mrb[0].mxu0 %v1079
    %v1675 = vpop.f32.mrb[0].mxu0
    %v1676 = vadd.f32 %v1531, %v1675
    %v1677 = vpop.f32.mrb[0].mxu0
    %1678 = vmatprep.mubr.f32.mxu0 %v1112
    %1679 = vmatmul.mubr.f32.gmra.mrb[0].mxu0 %v1081
    %v1680 = vpop.f32.mrb[0].mxu0
    %v1681 = vadd.f32 %v1536, %v1680
    %v1682 = vpop.f32.mrb[0].mxu0
    %1683 = vmatprep.mubr.f32.mxu0 %v1114
    %1684 = vmatmul.mubr.f32.gmra.mrb[0].mxu0 %v1083
    %v1685 = vpop.f32.mrb[0].mxu0
    %v1686 = vadd.f32 %v1541, %v1685
    %v1687 = vpop.f32.mrb[0].mxu0
    %1688 = vmatprep.mubr.f32.mxu0 %v1116
    %1689 = vmatmul.mubr.f32.gmra.mrb[0].mxu0 %v1085
    %v1690 = vpop.f32.mrb[0].mxu0
    %v1691 = vadd.f32 %v1546, %v1690
    %v1692 = vpop.f32.mrb[0].mxu0
    %1693 = vmatprep.mubr.f32.mxu0 %v1118
    %1694 = vmatmul.mubr.f32.gmra.mrb[0].mxu0 %v1087
    %v1695 = vpop.f32.mrb[0].mxu0
    %v1696 = vadd.f32 %v1551, %v1695
    %v1697 = vpop.f32.mrb[0].mxu0
    %1698 = vmatprep.mubr.f32.mxu0 %v1120
    %1699 = vmatmul.mubr.f32.gmra.mrb[0].mxu0 %v1089
    %v1700 = vpop.f32.mrb[0].mxu0
    %v1701 = vadd.f32 %v1556, %v1700
    %v1702 = vpop.f32.mrb[0].mxu0
    %1703 = vmatprep.mubr.f32.mxu0 %v1122
    %1704 = vmatmul.mubr.f32.gmra.mrb[0].mxu0 %v1091
    %v1705 = vpop.f32.mrb[0].mxu0
    %v1706 = vadd.f32 %v1561, %v1705
    %v1707 = vpop.f32.mrb[0].mxu0
    %1708 = vmatprep.mubr.f32.mxu0 %v1124
    %1709 = vmatmul.mubr.f32.gmra.mrb[0].mxu0 %v1093
    %v1710 = vpop.f32.mrb[0].mxu0
    %v1711 = vadd.f32 %v1566, %v1710
    %v1712 = vpop.f32.mrb[0].mxu0
    %1713 = vmatprep.mubr.f32.mxu0 %v1126
    %1714 = vmatmul.mubr.f32.gmra.mrb[0].mxu0 %v1095
    %v1715 = vpop.f32.mrb[0].mxu0
    %v1716 = vadd.f32 %v1571, %v1715
    %v1717 = vpop.f32.mrb[0].mxu0
    %1718 = vmatprep.mubr.f32.mxu0 %v1128
    %1719 = vmatmul.mubr.f32.gmra.mrb[0].mxu0 %v1097
    %v1720 = vpop.f32.mrb[0].mxu0
    %v1721 = vadd.f32 %v1576, %v1720
    %v1722 = vpop.f32.mrb[0].mxu0
    %1723 = vmatprep.mubr.f32.mxu0 %v1130
    %1724 = vmatmul.mubr.f32.gmra.mrb[0].mxu0 %v1099
    %v1725 = vpop.f32.mrb[0].mxu0
    %v1726 = vadd.f32 %v1581, %v1725
    %v1727 = vpop.f32.mrb[0].mxu0
    %1728 = vmatprep.mubr.f32.mxu0 %v1132
    %1729 = vmatmul.mubr.f32.gmra.mrb[0].mxu0 %v1101
    %v1730 = vpop.f32.mrb[0].mxu0
    %v1731 = vadd.f32 %v1586, %v1730
    %v1732 = vpop.f32.mrb[0].mxu0
    %1733 = vdwg.mxu0
    %1734 = vmatprep.subr.mxu0 0.0
    %1735 = vmatpush1.msra.mxu0 %v1357
    %1736 = vmatprep.subr.mxu0 0.0
    %1737 = vmatpush1.msra.mxu0 %v1358
    %1738 = vmatprep.subr.mxu0 0.0
    %1739 = vmatpush1.msra.mxu0 %v1359
    %1740 = vmatprep.subr.mxu0 0.0
    %1741 = vmatpush1.msra.mxu0 %v1360
    %1742 = vmatprep.subr.mxu0 0.0
    %1743 = vmatpush1.msra.mxu0 %v1361
    %1744 = vmatprep.subr.mxu0 0.0
    %1745 = vmatpush1.msra.mxu0 %v1362
    %1746 = vmatprep.subr.mxu0 0.0
    %1747 = vmatpush1.msra.mxu0 %v1363
    %1748 = vmatprep.subr.mxu0 0.0
    %1749 = vmatpush1.msra.mxu0 %v1364
    %1750 = vmatprep.subr.mxu0 0.0
    %1751 = vmatpush1.msra.mxu0 %v1365
    %1752 = vmatprep.subr.mxu0 0.0
    %1753 = vmatpush1.msra.mxu0 %v1366
    %1754 = vmatprep.subr.mxu0 0.0
    %1755 = vmatpush1.msra.mxu0 %v1367
    %1756 = vmatprep.subr.mxu0 0.0
    %1757 = vmatpush1.msra.mxu0 %v1368
    %1758 = vmatprep.subr.mxu0 0.0
    %1759 = vmatpush1.msra.mxu0 %v1369
    %1760 = vmatprep.subr.mxu0 0.0
    %1761 = vmatpush1.msra.mxu0 %v1370
    %1762 = vmatprep.subr.mxu0 0.0
    %1763 = vmatpush1.msra.mxu0 %v1371
    %1764 = vmatprep.subr.mxu0 0.0
    %1765 = vmatpush1.msra.mxu0 %v1372
    %1766 = vmatprep.subr.mxu0 0.0
    %1767 = vmatpush1.msra.mxu0 %v1373
    %1768 = vmatprep.subr.mxu0 0.0
    %1769 = vmatpush1.msra.mxu0 %v1374
    %1770 = vmatprep.subr.mxu0 0.0
    %1771 = vmatpush1.msra.mxu0 %v1375
    %1772 = vmatprep.subr.mxu0 0.0
    %1773 = vmatpush1.msra.mxu0 %v1376
    %1774 = vmatprep.subr.mxu0 0.0
    %1775 = vmatpush1.msra.mxu0 %v1377
    %1776 = vmatprep.subr.mxu0 0.0
    %1777 = vmatpush1.msra.mxu0 %v1378
    %1778 = vmatprep.subr.mxu0 0.0
    %1779 = vmatpush1.msra.mxu0 %v1379
    %1780 = vmatprep.subr.mxu0 0.0
    %1781 = vmatpush1.msra.mxu0 %v1380
    %1782 = vmatprep.subr.mxu0 0.0
    %1783 = vmatpush1.msra.mxu0 %v1381
    %1784 = vmatprep.subr.mxu0 0.0
    %1785 = vmatpush1.msra.mxu0 %v1382
    %1786 = vmatprep.subr.mxu0 0.0
    %1787 = vmatpush1.msra.mxu0 %v1383
    %1788 = vmatprep.subr.mxu0 0.0
    %1789 = vmatpush1.msra.mxu0 %v1384
    %1790 = vmatprep.subr.mxu0 0.0
    %1791 = vmatpush1.msra.mxu0 %v1385
    %1792 = vmatprep.subr.mxu0 0.0
    %1793 = vmatpush1.msra.mxu0 %v1386
    %1794 = vmatprep.subr.mxu0 0.0
    %1795 = vmatpush1.msra.mxu0 %v1387
    %1796 = vmatprep.subr.mxu0 0.0
    %1797 = vmatpush1.msra.mxu0 %v1388
    %1798 = vmatprep.mubr.f32.mxu0 %v1166
    %1799 = vmatmul.mubr.f32.gmra.mrb[0].mxu0 %v1134
    %v1800 = vpop.f32.mrb[0].mxu0
    %v1801 = vadd.f32 %v1656, %v1800
    %v1802 = vpop.f32.mrb[0].mxu0
    %1803 = vmatprep.mubr.f32.mxu0 %v1168
    %1804 = vmatmul.mubr.f32.gmra.mrb[0].mxu0 %v1136
    %v1805 = vpop.f32.mrb[0].mxu0
    %v1806 = vadd.f32 %v1661, %v1805
    %v1807 = vpop.f32.mrb[0].mxu0
    %1808 = vmatprep.mubr.f32.mxu0 %v1170
    %1809 = vmatmul.mubr.f32.gmra.mrb[0].mxu0 %v1138
    %v1810 = vpop.f32.mrb[0].mxu0
    %v1811 = vadd.f32 %v1666, %v1810
    %v1812 = vpop.f32.mrb[0].mxu0
    %1813 = vmatprep.mubr.f32.mxu0 %v1172
    %1814 = vmatmul.mubr.f32.gmra.mrb[0].mxu0 %v1140
    %v1815 = vpop.f32.mrb[0].mxu0
    %v1816 = vadd.f32 %v1671, %v1815
    %v1817 = vpop.f32.mrb[0].mxu0
    %1818 = vmatprep.mubr.f32.mxu0 %v1174
    %1819 = vmatmul.mubr.f32.gmra.mrb[0].mxu0 %v1142
    %v1820 = vpop.f32.mrb[0].mxu0
    %v1821 = vadd.f32 %v1676, %v1820
    %v1822 = vpop.f32.mrb[0].mxu0
    %1823 = vmatprep.mubr.f32.mxu0 %v1176
    %1824 = vmatmul.mubr.f32.gmra.mrb[0].mxu0 %v1144
    %v1825 = vpop.f32.mrb[0].mxu0
    %v1826 = vadd.f32 %v1681, %v1825
    %v1827 = vpop.f32.mrb[0].mxu0
    %1828 = vmatprep.mubr.f32.mxu0 %v1178
    %1829 = vmatmul.mubr.f32.gmra.mrb[0].mxu0 %v1146
    %v1830 = vpop.f32.mrb[0].mxu0
    %v1831 = vadd.f32 %v1686, %v1830
    %v1832 = vpop.f32.mrb[0].mxu0
    %1833 = vmatprep.mubr.f32.mxu0 %v1180
    %1834 = vmatmul.mubr.f32.gmra.mrb[0].mxu0 %v1148
    %v1835 = vpop.f32.mrb[0].mxu0
    %v1836 = vadd.f32 %v1691, %v1835
    %v1837 = vpop.f32.mrb[0].mxu0
    %1838 = vmatprep.mubr.f32.mxu0 %v1182
    %1839 = vmatmul.mubr.f32.gmra.mrb[0].mxu0 %v1150
    %v1840 = vpop.f32.mrb[0].mxu0
    %v1841 = vadd.f32 %v1696, %v1840
    %v1842 = vpop.f32.mrb[0].mxu0
    %1843 = vmatprep.mubr.f32.mxu0 %v1184
    %1844 = vmatmul.mubr.f32.gmra.mrb[0].mxu0 %v1152
    %v1845 = vpop.f32.mrb[0].mxu0
    %v1846 = vadd.f32 %v1701, %v1845
    %v1847 = vpop.f32.mrb[0].mxu0
    %1848 = vmatprep.mubr.f32.mxu0 %v1186
    %1849 = vmatmul.mubr.f32.gmra.mrb[0].mxu0 %v1154
    %v1850 = vpop.f32.mrb[0].mxu0
    %v1851 = vadd.f32 %v1706, %v1850
    %v1852 = vpop.f32.mrb[0].mxu0
    %1853 = vmatprep.mubr.f32.mxu0 %v1188
    %1854 = vmatmul.mubr.f32.gmra.mrb[0].mxu0 %v1156
    %v1855 = vpop.f32.mrb[0].mxu0
    %v1856 = vadd.f32 %v1711, %v1855
    %v1857 = vpop.f32.mrb[0].mxu0
    %1858 = vmatprep.mubr.f32.mxu0 %v1190
    %1859 = vmatmul.mubr.f32.gmra.mrb[0].mxu0 %v1158
    %v1860 = vpop.f32.mrb[0].mxu0
    %v1861 = vadd.f32 %v1716, %v1860
    %v1862 = vpop.f32.mrb[0].mxu0
    %1863 = vmatprep.mubr.f32.mxu0 %v1192
    %1864 = vmatmul.mubr.f32.gmra.mrb[0].mxu0 %v1160
    %v1865 = vpop.f32.mrb[0].mxu0
    %v1866 = vadd.f32 %v1721, %v1865
    %v1867 = vpop.f32.mrb[0].mxu0
    %1868 = vmatprep.mubr.f32.mxu0 %v1194
    %1869 = vmatmul.mubr.f32.gmra.mrb[0].mxu0 %v1162
    %v1870 = vpop.f32.mrb[0].mxu0
    %v1871 = vadd.f32 %v1726, %v1870
    %v1872 = vpop.f32.mrb[0].mxu0
    %1873 = vmatprep.mubr.f32.mxu0 %v1196
    %1874 = vmatmul.mubr.f32.gmra.mrb[0].mxu0 %v1164
    %v1875 = vpop.f32.mrb[0].mxu0
    %v1876 = vadd.f32 %v1731, %v1875
    %v1877 = vpop.f32.mrb[0].mxu0
    %1878 = vdwg.mxu0
    %1879 = vmatprep.subr.mxu0 0.0
    %1880 = vmatpush1.msra.mxu0 %v1389
    %1881 = vmatprep.subr.mxu0 0.0
    %1882 = vmatpush1.msra.mxu0 %v1390
    %1883 = vmatprep.subr.mxu0 0.0
    %1884 = vmatpush1.msra.mxu0 %v1391
    %1885 = vmatprep.subr.mxu0 0.0
    %1886 = vmatpush1.msra.mxu0 %v1392
    %1887 = vmatprep.subr.mxu0 0.0
    %1888 = vmatpush1.msra.mxu0 %v1393
    %1889 = vmatprep.subr.mxu0 0.0
    %1890 = vmatpush1.msra.mxu0 %v1394
    %1891 = vmatprep.subr.mxu0 0.0
    %1892 = vmatpush1.msra.mxu0 %v1395
    %1893 = vmatprep.subr.mxu0 0.0
    %1894 = vmatpush1.msra.mxu0 %v1396
    %1895 = vmatprep.subr.mxu0 0.0
    %1896 = vmatpush1.msra.mxu0 %v1397
    %1897 = vmatprep.subr.mxu0 0.0
    %1898 = vmatpush1.msra.mxu0 %v1398
    %1899 = vmatprep.subr.mxu0 0.0
    %1900 = vmatpush1.msra.mxu0 %v1399
    %1901 = vmatprep.subr.mxu0 0.0
    %1902 = vmatpush1.msra.mxu0 %v1400
    %1903 = vmatprep.subr.mxu0 0.0
    %1904 = vmatpush1.msra.mxu0 %v1401
    %1905 = vmatprep.subr.mxu0 0.0
    %1906 = vmatpush1.msra.mxu0 %v1402
    %1907 = vmatprep.subr.mxu0 0.0
    %1908 = vmatpush1.msra.mxu0 %v1403
    %1909 = vmatprep.subr.mxu0 0.0
    %1910 = vmatpush1.msra.mxu0 %v1404
    %1911 = vmatprep.subr.mxu0 0.0
    %1912 = vmatpush1.msra.mxu0 %v1405
    %1913 = vmatprep.subr.mxu0 0.0
    %1914 = vmatpush1.msra.mxu0 %v1406
    %1915 = vmatprep.subr.mxu0 0.0
    %1916 = vmatpush1.msra.mxu0 %v1407
    %1917 = vmatprep.subr.mxu0 0.0
    %1918 = vmatpush1.msra.mxu0 %v1408
    %1919 = vmatprep.subr.mxu0 0.0
    %1920 = vmatpush1.msra.mxu0 %v1409
    %1921 = vmatprep.subr.mxu0 0.0
    %1922 = vmatpush1.msra.mxu0 %v1410
    %1923 = vmatprep.subr.mxu0 0.0
    %1924 = vmatpush1.msra.mxu0 %v1411
    %1925 = vmatprep.subr.mxu0 0.0
    %1926 = vmatpush1.msra.mxu0 %v1412
    %1927 = vmatprep.subr.mxu0 0.0
    %1928 = vmatpush1.msra.mxu0 %v1413
    %1929 = vmatprep.subr.mxu0 0.0
    %1930 = vmatpush1.msra.mxu0 %v1414
    %1931 = vmatprep.subr.mxu0 0.0
    %1932 = vmatpush1.msra.mxu0 %v1415
    %1933 = vmatprep.subr.mxu0 0.0
    %1934 = vmatpush1.msra.mxu0 %v1416
    %1935 = vmatprep.subr.mxu0 0.0
    %1936 = vmatpush1.msra.mxu0 %v1417
    %1937 = vmatprep.subr.mxu0 0.0
    %1938 = vmatpush1.msra.mxu0 %v1418
    %1939 = vmatprep.subr.mxu0 0.0
    %1940 = vmatpush1.msra.mxu0 %v1419
    %1941 = vmatprep.subr.mxu0 0.0
    %1942 = vmatpush1.msra.mxu0 %v1420
    %1943 = vmatprep.mubr.f32.mxu0 %v1230
    %1944 = vmatmul.mubr.f32.gmra.mrb[0].mxu0 %v1198
    %v1945 = vpop.f32.mrb[0].mxu0
    %v1946 = vadd.f32 %v1801, %v1945
    %v1947 = vpop.f32.mrb[0].mxu0
    %1948 = vmatprep.mubr.f32.mxu0 %v1232
    %1949 = vmatmul.mubr.f32.gmra.mrb[0].mxu0 %v1200
    %v1950 = vpop.f32.mrb[0].mxu0
    %v1951 = vadd.f32 %v1806, %v1950
    %v1952 = vpop.f32.mrb[0].mxu0
    %1953 = vmatprep.mubr.f32.mxu0 %v1234
    %1954 = vmatmul.mubr.f32.gmra.mrb[0].mxu0 %v1202
    %v1955 = vpop.f32.mrb[0].mxu0
    %v1956 = vadd.f32 %v1811, %v1955
    %v1957 = vpop.f32.mrb[0].mxu0
    %1958 = vmatprep.mubr.f32.mxu0 %v1236
    %1959 = vmatmul.mubr.f32.gmra.mrb[0].mxu0 %v1204
    %v1960 = vpop.f32.mrb[0].mxu0
    %v1961 = vadd.f32 %v1816, %v1960
    %v1962 = vpop.f32.mrb[0].mxu0
    %1963 = vmatprep.mubr.f32.mxu0 %v1238
    %1964 = vmatmul.mubr.f32.gmra.mrb[0].mxu0 %v1206
    %v1965 = vpop.f32.mrb[0].mxu0
    %v1966 = vadd.f32 %v1821, %v1965
    %v1967 = vpop.f32.mrb[0].mxu0
    %1968 = vmatprep.mubr.f32.mxu0 %v1240
    %1969 = vmatmul.mubr.f32.gmra.mrb[0].mxu0 %v1208
    %v1970 = vpop.f32.mrb[0].mxu0
    %v1971 = vadd.f32 %v1826, %v1970
    %v1972 = vpop.f32.mrb[0].mxu0
    %1973 = vmatprep.mubr.f32.mxu0 %v1242
    %1974 = vmatmul.mubr.f32.gmra.mrb[0].mxu0 %v1210
    %v1975 = vpop.f32.mrb[0].mxu0
    %v1976 = vadd.f32 %v1831, %v1975
    %v1977 = vpop.f32.mrb[0].mxu0
    %1978 = vmatprep.mubr.f32.mxu0 %v1244
    %1979 = vmatmul.mubr.f32.gmra.mrb[0].mxu0 %v1212
    %v1980 = vpop.f32.mrb[0].mxu0
    %v1981 = vadd.f32 %v1836, %v1980
    %v1982 = vpop.f32.mrb[0].mxu0
    %1983 = vmatprep.mubr.f32.mxu0 %v1246
    %1984 = vmatmul.mubr.f32.gmra.mrb[0].mxu0 %v1214
    %v1985 = vpop.f32.mrb[0].mxu0
    %v1986 = vadd.f32 %v1841, %v1985
    %v1987 = vpop.f32.mrb[0].mxu0
    %1988 = vmatprep.mubr.f32.mxu0 %v1248
    %1989 = vmatmul.mubr.f32.gmra.mrb[0].mxu0 %v1216
    %v1990 = vpop.f32.mrb[0].mxu0
    %v1991 = vadd.f32 %v1846, %v1990
    %v1992 = vpop.f32.mrb[0].mxu0
    %1993 = vmatprep.mubr.f32.mxu0 %v1250
    %1994 = vmatmul.mubr.f32.gmra.mrb[0].mxu0 %v1218
    %v1995 = vpop.f32.mrb[0].mxu0
    %v1996 = vadd.f32 %v1851, %v1995
    %v1997 = vpop.f32.mrb[0].mxu0
    %1998 = vmatprep.mubr.f32.mxu0 %v1252
    %1999 = vmatmul.mubr.f32.gmra.mrb[0].mxu0 %v1220
    %v2000 = vpop.f32.mrb[0].mxu0
    %v2001 = vadd.f32 %v1856, %v2000
    %v2002 = vpop.f32.mrb[0].mxu0
    %2003 = vmatprep.mubr.f32.mxu0 %v1254
    %2004 = vmatmul.mubr.f32.gmra.mrb[0].mxu0 %v1222
    %v2005 = vpop.f32.mrb[0].mxu0
    %v2006 = vadd.f32 %v1861, %v2005
    %v2007 = vpop.f32.mrb[0].mxu0
    %2008 = vmatprep.mubr.f32.mxu0 %v1256
    %2009 = vmatmul.mubr.f32.gmra.mrb[0].mxu0 %v1224
    %v2010 = vpop.f32.mrb[0].mxu0
    %v2011 = vadd.f32 %v1866, %v2010
    %v2012 = vpop.f32.mrb[0].mxu0
    %2013 = vmatprep.mubr.f32.mxu0 %v1258
    %2014 = vmatmul.mubr.f32.gmra.mrb[0].mxu0 %v1226
    %v2015 = vpop.f32.mrb[0].mxu0
    %v2016 = vadd.f32 %v1871, %v2015
    %v2017 = vpop.f32.mrb[0].mxu0
    %2018 = vmatprep.mubr.f32.mxu0 %v1260
    %2019 = vmatmul.mubr.f32.gmra.mrb[0].mxu0 %v1228
    %v2020 = vpop.f32.mrb[0].mxu0
    %v2021 = vadd.f32 %v1876, %v2020
    %v2022 = vpop.f32.mrb[0].mxu0
    %2023 = vdwg.mxu0
    %2024 = vmatprep.subr.mxu0 0.0
    %2025 = vmatpush1.msra.mxu0 %v1421
    %2026 = vmatprep.subr.mxu0 0.0
    %2027 = vmatpush1.msra.mxu0 %v1422
    %2028 = vmatprep.subr.mxu0 0.0
    %2029 = vmatpush1.msra.mxu0 %v1423
    %2030 = vmatprep.subr.mxu0 0.0
    %2031 = vmatpush1.msra.mxu0 %v1424
    %2032 = vmatprep.subr.mxu0 0.0
    %2033 = vmatpush1.msra.mxu0 %v1425
    %2034 = vmatprep.subr.mxu0 0.0
    %2035 = vmatpush1.msra.mxu0 %v1426
    %2036 = vmatprep.subr.mxu0 0.0
    %2037 = vmatpush1.msra.mxu0 %v1427
    %2038 = vmatprep.subr.mxu0 0.0
    %2039 = vmatpush1.msra.mxu0 %v1428
    %2040 = vmatprep.subr.mxu0 0.0
    %2041 = vmatpush1.msra.mxu0 %v1429
    %2042 = vmatprep.subr.mxu0 0.0
    %2043 = vmatpush1.msra.mxu0 %v1430
    %2044 = vmatprep.subr.mxu0 0.0
    %2045 = vmatpush1.msra.mxu0 %v1431
    %2046 = vmatprep.subr.mxu0 0.0
    %2047 = vmatpush1.msra.mxu0 %v1432
    %2048 = vmatprep.subr.mxu0 0.0
    %2049 = vmatpush1.msra.mxu0 %v1433
    %2050 = vmatprep.subr.mxu0 0.0
    %2051 = vmatpush1.msra.mxu0 %v1434
    %2052 = vmatprep.subr.mxu0 0.0
    %2053 = vmatpush1.msra.mxu0 %v1435
    %2054 = vmatprep.subr.mxu0 0.0
    %2055 = vmatpush1.msra.mxu0 %v1436
    %2056 = vmatprep.subr.mxu0 0.0
    %2057 = vmatpush1.msra.mxu0 0.0
    %2058 = vmatprep.subr.mxu0 0.0
    %2059 = vmatpush1.msra.mxu0 0.0
    %2060 = vmatprep.subr.mxu0 0.0
    %2061 = vmatpush1.msra.mxu0 0.0
    %2062 = vmatprep.subr.mxu0 0.0
    %2063 = vmatpush1.msra.mxu0 0.0
    %2064 = vmatprep.subr.mxu0 0.0
    %2065 = vmatpush1.msra.mxu0 0.0
    %2066 = vmatprep.subr.mxu0 0.0
    %2067 = vmatpush1.msra.mxu0 0.0
    %2068 = vmatprep.subr.mxu0 0.0
    %2069 = vmatpush1.msra.mxu0 0.0
    %2070 = vmatprep.subr.mxu0 0.0
    %2071 = vmatpush1.msra.mxu0 0.0
    %2072 = vmatprep.subr.mxu0 0.0
    %2073 = vmatpush1.msra.mxu0 0.0
    %2074 = vmatprep.subr.mxu0 0.0
    %2075 = vmatpush1.msra.mxu0 0.0
    %2076 = vmatprep.subr.mxu0 0.0
    %2077 = vmatpush1.msra.mxu0 0.0
    %2078 = vmatprep.subr.mxu0 0.0
    %2079 = vmatpush1.msra.mxu0 0.0
    %2080 = vmatprep.subr.mxu0 0.0
    %2081 = vmatpush1.msra.mxu0 0.0
    %2082 = vmatprep.subr.mxu0 0.0
    %2083 = vmatpush1.msra.mxu0 0.0
    %2084 = vmatprep.subr.mxu0 0.0
    %2085 = vmatpush1.msra.mxu0 0.0
    %2086 = vmatprep.subr.mxu0 0.0
    %2087 = vmatpush1.msra.mxu0 0.0
    %2088 = vmatprep.mubr.f32.mxu0 0.0
    %2089 = vmatmul.mubr.f32.gmra.mrb[0].mxu0 %v1262
    %v2090 = vpop.f32.mrb[0].mxu0
    %v2091 = vadd.f32 %v1946, %v2090
    %v2092 = vpop.f32.mrb[0].mxu0
    %2093 = vmatprep.mubr.f32.mxu0 0.0
    %2094 = vmatmul.mubr.f32.gmra.mrb[0].mxu0 %v1264
    %v2095 = vpop.f32.mrb[0].mxu0
    %v2096 = vadd.f32 %v1951, %v2095
    %v2097 = vpop.f32.mrb[0].mxu0
    %2098 = vmatprep.mubr.f32.mxu0 0.0
    %2099 = vmatmul.mubr.f32.gmra.mrb[0].mxu0 %v1266
    %v2100 = vpop.f32.mrb[0].mxu0
    %v2101 = vadd.f32 %v1956, %v2100
    %v2102 = vpop.f32.mrb[0].mxu0
    %2103 = vmatprep.mubr.f32.mxu0 0.0
    %2104 = vmatmul.mubr.f32.gmra.mrb[0].mxu0 %v1268
    %v2105 = vpop.f32.mrb[0].mxu0
    %v2106 = vadd.f32 %v1961, %v2105
    %v2107 = vpop.f32.mrb[0].mxu0
    %2108 = vmatprep.mubr.f32.mxu0 0.0
    %2109 = vmatmul.mubr.f32.gmra.mrb[0].mxu0 %v1270
    %v2110 = vpop.f32.mrb[0].mxu0
    %v2111 = vadd.f32 %v1966, %v2110
    %v2112 = vpop.f32.mrb[0].mxu0
    %2113 = vmatprep.mubr.f32.mxu0 0.0
    %2114 = vmatmul.mubr.f32.gmra.mrb[0].mxu0 %v1272
    %v2115 = vpop.f32.mrb[0].mxu0
    %v2116 = vadd.f32 %v1971, %v2115
    %v2117 = vpop.f32.mrb[0].mxu0
    %2118 = vmatprep.mubr.f32.mxu0 0.0
    %2119 = vmatmul.mubr.f32.gmra.mrb[0].mxu0 %v1274
    %v2120 = vpop.f32.mrb[0].mxu0
    %v2121 = vadd.f32 %v1976, %v2120
    %v2122 = vpop.f32.mrb[0].mxu0
    %2123 = vmatprep.mubr.f32.mxu0 0.0
    %2124 = vmatmul.mubr.f32.gmra.mrb[0].mxu0 %v1276
    %v2125 = vpop.f32.mrb[0].mxu0
    %v2126 = vadd.f32 %v1981, %v2125
    %v2127 = vpop.f32.mrb[0].mxu0
    %2128 = vmatprep.mubr.f32.mxu0 0.0
    %2129 = vmatmul.mubr.f32.gmra.mrb[0].mxu0 %v1278
    %v2130 = vpop.f32.mrb[0].mxu0
    %v2131 = vadd.f32 %v1986, %v2130
    %v2132 = vpop.f32.mrb[0].mxu0
    %2133 = vmatprep.mubr.f32.mxu0 0.0
    %2134 = vmatmul.mubr.f32.gmra.mrb[0].mxu0 %v1280
    %v2135 = vpop.f32.mrb[0].mxu0
    %v2136 = vadd.f32 %v1991, %v2135
    %v2137 = vpop.f32.mrb[0].mxu0
    %2138 = vmatprep.mubr.f32.mxu0 0.0
    %2139 = vmatmul.mubr.f32.gmra.mrb[0].mxu0 %v1282
    %v2140 = vpop.f32.mrb[0].mxu0
    %v2141 = vadd.f32 %v1996, %v2140
    %v2142 = vpop.f32.mrb[0].mxu0
    %2143 = vmatprep.mubr.f32.mxu0 0.0
    %2144 = vmatmul.mubr.f32.gmra.mrb[0].mxu0 %v1284
    %v2145 = vpop.f32.mrb[0].mxu0
    %v2146 = vadd.f32 %v2001, %v2145
    %v2147 = vpop.f32.mrb[0].mxu0
    %2148 = vmatprep.mubr.f32.mxu0 0.0
    %2149 = vmatmul.mubr.f32.gmra.mrb[0].mxu0 %v1286
    %v2150 = vpop.f32.mrb[0].mxu0
    %v2151 = vadd.f32 %v2006, %v2150
    %v2152 = vpop.f32.mrb[0].mxu0
    %2153 = vmatprep.mubr.f32.mxu0 0.0
    %2154 = vmatmul.mubr.f32.gmra.mrb[0].mxu0 %v1288
    %v2155 = vpop.f32.mrb[0].mxu0
    %v2156 = vadd.f32 %v2011, %v2155
    %v2157 = vpop.f32.mrb[0].mxu0
    %2158 = vmatprep.mubr.f32.mxu0 0.0
    %2159 = vmatmul.mubr.f32.gmra.mrb[0].mxu0 %v1290
    %v2160 = vpop.f32.mrb[0].mxu0
    %v2161 = vadd.f32 %v2016, %v2160
    %v2162 = vpop.f32.mrb[0].mxu0
    %2163 = vmatprep.mubr.f32.mxu0 0.0
    %2164 = vmatmul.mubr.f32.gmra.mrb[0].mxu0 %v1292
    %v2165 = vpop.f32.mrb[0].mxu0
    %v2166 = vadd.f32 %v2021, %v2165
    %v2167 = vpop.f32.mrb[0].mxu0
    %2168 = vdwg.mxu0
    %v2169 = vmax.f32 %v2091, 0.0
    %v2170 = vmax.f32 %v2096, 0.0
    %v2171 = vmax.f32 %v2101, 0.0
    %v2172 = vmax.f32 %v2106, 0.0
    %v2173 = vmax.f32 %v2111, 0.0
    %v2174 = vmax.f32 %v2116, 0.0
    %v2175 = vmax.f32 %v2121, 0.0
    %v2176 = vmax.f32 %v2126, 0.0
    %v2177 = vmax.f32 %v2131, 0.0
    %v2178 = vmax.f32 %v2136, 0.0
    %v2179 = vmax.f32 %v2141, 0.0
    %v2180 = vmax.f32 %v2146, 0.0
    %v2181 = vmax.f32 %v2151, 0.0
    %v2182 = vmax.f32 %v2156, 0.0
    %v2183 = vmax.f32 %v2161, 0.0
    %v2184 = vmax.f32 %v2166, 0.0
    %v2185 = vld [vmem:[#allocation9] sm:$0xff]
    %v2186 = vld [vmem:[#allocation9 + $0x8] sm:$0xff]
    %v2187 = vld [vmem:[#allocation9 + $0x10] sm:$0xff]
    %v2188 = vld [vmem:[#allocation9 + $0x18] sm:$0xff]
    %v2189 = vld [vmem:[#allocation9 + $0x20] sm:$0xff]
    %v2190 = vld [vmem:[#allocation9 + $0x28] sm:$0xff]
    %v2191 = vld [vmem:[#allocation9 + $0x30] sm:$0xff]
    %v2192 = vld [vmem:[#allocation9 + $0x38] sm:$0xff]
    %v2193 = vld [vmem:[#allocation9 + $0x40] sm:$0xff]
    %v2194 = vld [vmem:[#allocation9 + $0x48] sm:$0xff]
    %v2195 = vld [vmem:[#allocation9 + $0x50] sm:$0xff]
    %v2196 = vld [vmem:[#allocation9 + $0x58] sm:$0xff]
    %v2197 = vld [vmem:[#allocation9 + $0x60] sm:$0xff]
    %v2198 = vld [vmem:[#allocation9 + $0x68] sm:$0xff]
    %v2199 = vld [vmem:[#allocation9 + $0x70] sm:$0xff]
    %v2200 = vld [vmem:[#allocation9 + $0x78] sm:$0xff]
    %v2201 = vld [vmem:[%s6] sm:$0x1]
    %v2203 = vlaneseq
    %v2204 = vshrl.u32 %v2203, 7
    %v2205 = vsub.s32 0, %v2204
    %v2206 = vrot.slane %v2201, %v2205
    %2208 = vmatprep.subr.mxu0 0.0
    %2209 = vmatpush1.msra.mxu0 %v2185
    %2210 = vmatprep.subr.mxu0 0.0
    %2211 = vmatpush1.msra.mxu0 %v2186
    %2212 = vmatprep.subr.mxu0 0.0
    %2213 = vmatpush1.msra.mxu0 %v2187
    %2214 = vmatprep.subr.mxu0 0.0
    %2215 = vmatpush1.msra.mxu0 %v2188
    %2216 = vmatprep.subr.mxu0 0.0
    %2217 = vmatpush1.msra.mxu0 %v2189
    %2218 = vmatprep.subr.mxu0 0.0
    %2219 = vmatpush1.msra.mxu0 %v2190
    %2220 = vmatprep.subr.mxu0 0.0
    %2221 = vmatpush1.msra.mxu0 %v2191
    %2222 = vmatprep.subr.mxu0 0.0
    %2223 = vmatpush1.msra.mxu0 %v2192
    %2224 = vmatprep.subr.mxu0 0.0
    %2225 = vmatpush1.msra.mxu0 %v2193
    %2226 = vmatprep.subr.mxu0 0.0
    %2227 = vmatpush1.msra.mxu0 %v2194
    %2228 = vmatprep.subr.mxu0 0.0
    %2229 = vmatpush1.msra.mxu0 %v2195
    %2230 = vmatprep.subr.mxu0 0.0
    %2231 = vmatpush1.msra.mxu0 %v2196
    %2232 = vmatprep.subr.mxu0 0.0
    %2233 = vmatpush1.msra.mxu0 %v2197
    %2234 = vmatprep.subr.mxu0 0.0
    %2235 = vmatpush1.msra.mxu0 %v2198
    %2236 = vmatprep.subr.mxu0 0.0
    %2237 = vmatpush1.msra.mxu0 %v2199
    %2238 = vmatprep.subr.mxu0 0.0
    %2239 = vmatpush1.msra.mxu0 %v2200
    %2240 = vmatprep.subr.mxu0 0.0
    %2241 = vmatpush1.msra.mxu0 0.0
    %2242 = vmatprep.subr.mxu0 0.0
    %2243 = vmatpush1.msra.mxu0 0.0
    %2244 = vmatprep.subr.mxu0 0.0
    %2245 = vmatpush1.msra.mxu0 0.0
    %2246 = vmatprep.subr.mxu0 0.0
    %2247 = vmatpush1.msra.mxu0 0.0
    %2248 = vmatprep.subr.mxu0 0.0
    %2249 = vmatpush1.msra.mxu0 0.0
    %2250 = vmatprep.subr.mxu0 0.0
    %2251 = vmatpush1.msra.mxu0 0.0
    %2252 = vmatprep.subr.mxu0 0.0
    %2253 = vmatpush1.msra.mxu0 0.0
    %2254 = vmatprep.subr.mxu0 0.0
    %2255 = vmatpush1.msra.mxu0 0.0
    %2256 = vmatprep.subr.mxu0 0.0
    %2257 = vmatpush1.msra.mxu0 0.0
    %2258 = vmatprep.subr.mxu0 0.0
    %2259 = vmatpush1.msra.mxu0 0.0
    %2260 = vmatprep.subr.mxu0 0.0
    %2261 = vmatpush1.msra.mxu0 0.0
    %2262 = vmatprep.subr.mxu0 0.0
    %2263 = vmatpush1.msra.mxu0 0.0
    %2264 = vmatprep.subr.mxu0 0.0
    %2265 = vmatpush1.msra.mxu0 0.0
    %2266 = vmatprep.subr.mxu0 0.0
    %2267 = vmatpush1.msra.mxu0 0.0
    %2268 = vmatprep.subr.mxu0 0.0
    %2269 = vmatpush1.msra.mxu0 0.0
    %2270 = vmatprep.subr.mxu0 0.0
    %2271 = vmatpush1.msra.mxu0 0.0
    %2272 = vmatprep.mubr.f32.mxu0 0.0
    %2273 = vmatmul.mubr.f32.gmra.mrb[0].mxu0 %v2169
    %v2274 = vpop.f32.mrb[0].mxu0
    %v2275 = vadd.f32 %v2206, %v2274
    %v2276 = vpop.f32.mrb[0].mxu0
    %2277 = vmatprep.mubr.f32.mxu0 0.0
    %2278 = vmatmul.mubr.f32.gmra.mrb[0].mxu0 %v2170
    %v2279 = vpop.f32.mrb[0].mxu0
    %v2280 = vadd.f32 %v2206, %v2279
    %v2281 = vpop.f32.mrb[0].mxu0
    %2282 = vmatprep.mubr.f32.mxu0 0.0
    %2283 = vmatmul.mubr.f32.gmra.mrb[0].mxu0 %v2171
    %v2284 = vpop.f32.mrb[0].mxu0
    %v2285 = vadd.f32 %v2206, %v2284
    %v2286 = vpop.f32.mrb[0].mxu0
    %2287 = vmatprep.mubr.f32.mxu0 0.0
    %2288 = vmatmul.mubr.f32.gmra.mrb[0].mxu0 %v2172
    %v2289 = vpop.f32.mrb[0].mxu0
    %v2290 = vadd.f32 %v2206, %v2289
    %v2291 = vpop.f32.mrb[0].mxu0
    %2292 = vmatprep.mubr.f32.mxu0 0.0
    %2293 = vmatmul.mubr.f32.gmra.mrb[0].mxu0 %v2173
    %v2294 = vpop.f32.mrb[0].mxu0
    %v2295 = vadd.f32 %v2206, %v2294
    %v2296 = vpop.f32.mrb[0].mxu0
    %2297 = vmatprep.mubr.f32.mxu0 0.0
    %2298 = vmatmul.mubr.f32.gmra.mrb[0].mxu0 %v2174
    %v2299 = vpop.f32.mrb[0].mxu0
    %v2300 = vadd.f32 %v2206, %v2299
    %v2301 = vpop.f32.mrb[0].mxu0
    %2302 = vmatprep.mubr.f32.mxu0 0.0
    %2303 = vmatmul.mubr.f32.gmra.mrb[0].mxu0 %v2175
    %v2304 = vpop.f32.mrb[0].mxu0
    %v2305 = vadd.f32 %v2206, %v2304
    %v2306 = vpop.f32.mrb[0].mxu0
    %2307 = vmatprep.mubr.f32.mxu0 0.0
    %2308 = vmatmul.mubr.f32.gmra.mrb[0].mxu0 %v2176
    %v2309 = vpop.f32.mrb[0].mxu0
    %v2310 = vadd.f32 %v2206, %v2309
    %v2311 = vpop.f32.mrb[0].mxu0
    %2312 = vmatprep.mubr.f32.mxu0 0.0
    %2313 = vmatmul.mubr.f32.gmra.mrb[0].mxu0 %v2177
    %v2314 = vpop.f32.mrb[0].mxu0
    %v2315 = vadd.f32 %v2206, %v2314
    %v2316 = vpop.f32.mrb[0].mxu0
    %2317 = vmatprep.mubr.f32.mxu0 0.0
    %2318 = vmatmul.mubr.f32.gmra.mrb[0].mxu0 %v2178
    %v2319 = vpop.f32.mrb[0].mxu0
    %v2320 = vadd.f32 %v2206, %v2319
    %v2321 = vpop.f32.mrb[0].mxu0
    %2322 = vmatprep.mubr.f32.mxu0 0.0
    %2323 = vmatmul.mubr.f32.gmra.mrb[0].mxu0 %v2179
    %v2324 = vpop.f32.mrb[0].mxu0
    %v2325 = vadd.f32 %v2206, %v2324
    %v2326 = vpop.f32.mrb[0].mxu0
    %2327 = vmatprep.mubr.f32.mxu0 0.0
    %2328 = vmatmul.mubr.f32.gmra.mrb[0].mxu0 %v2180
    %v2329 = vpop.f32.mrb[0].mxu0
    %v2330 = vadd.f32 %v2206, %v2329
    %v2331 = vpop.f32.mrb[0].mxu0
    %2332 = vmatprep.mubr.f32.mxu0 0.0
    %2333 = vmatmul.mubr.f32.gmra.mrb[0].mxu0 %v2181
    %v2334 = vpop.f32.mrb[0].mxu0
    %v2335 = vadd.f32 %v2206, %v2334
    %v2336 = vpop.f32.mrb[0].mxu0
    %2337 = vmatprep.mubr.f32.mxu0 0.0
    %2338 = vmatmul.mubr.f32.gmra.mrb[0].mxu0 %v2182
    %v2339 = vpop.f32.mrb[0].mxu0
    %v2340 = vadd.f32 %v2206, %v2339
    %v2341 = vpop.f32.mrb[0].mxu0
    %2342 = vmatprep.mubr.f32.mxu0 0.0
    %2343 = vmatmul.mubr.f32.gmra.mrb[0].mxu0 %v2183
    %v2344 = vpop.f32.mrb[0].mxu0
    %v2345 = vadd.f32 %v2206, %v2344
    %v2346 = vpop.f32.mrb[0].mxu0
    %2347 = vmatprep.mubr.f32.mxu0 0.0
    %2348 = vmatmul.mubr.f32.gmra.mrb[0].mxu0 %v2184
    %v2349 = vpop.f32.mrb[0].mxu0
    %v2350 = vadd.f32 %v2206, %v2349
    %v2351 = vpop.f32.mrb[0].mxu0
    %2352 = vdwg.mxu0
    %v2353 = vld [vmem:[#allocation3] ss:$2 sm:$0xff]
    %s2354 = scalar_lea.vmem [#allocation3], 32
    %v2355 = vld [vmem:[%s2354] ss:$2 sm:$0xff]
    %s2356 = scalar_lea.vmem [#allocation3], 64
    %v2357 = vld [vmem:[%s2356] ss:$2 sm:$0xff]
    %s2358 = scalar_lea.vmem [#allocation3], 96
    %v2359 = vld [vmem:[%s2358] ss:$2 sm:$0xff]
    %s2360 = scalar_lea.vmem [#allocation3], 128
    %v2361 = vld [vmem:[%s2360] ss:$2 sm:$0xff]
    %s2362 = scalar_lea.vmem [#allocation3], 160
    %v2363 = vld [vmem:[%s2362] ss:$2 sm:$0xff]
    %s2364 = scalar_lea.vmem [#allocation3], 192
    %v2365 = vld [vmem:[%s2364] ss:$2 sm:$0xff]
    %s2366 = scalar_lea.vmem [#allocation3], 224
    %v2367 = vld [vmem:[%s2366] ss:$2 sm:$0xff]
    %s2368 = scalar_lea.vmem [#allocation3], 256
    %v2369 = vld [vmem:[%s2368] ss:$2 sm:$0xff]
    %s2370 = scalar_lea.vmem [#allocation3], 288
    %v2371 = vld [vmem:[%s2370] ss:$2 sm:$0xff]
    %s2372 = scalar_lea.vmem [#allocation3], 320
    %v2373 = vld [vmem:[%s2372] ss:$2 sm:$0xff]
    %s2374 = scalar_lea.vmem [#allocation3], 352
    %v2375 = vld [vmem:[%s2374] ss:$2 sm:$0xff]
    %s2376 = scalar_lea.vmem [#allocation3], 384
    %v2377 = vld [vmem:[%s2376] ss:$2 sm:$0xff]
    %s2378 = scalar_lea.vmem [#allocation3], 416
    %v2379 = vld [vmem:[%s2378] ss:$2 sm:$0xff]
    %s2380 = scalar_lea.vmem [#allocation3], 448
    %v2381 = vld [vmem:[%s2380] ss:$2 sm:$0xff]
    %s2382 = scalar_lea.vmem [#allocation3], 480
    %v2383 = vld [vmem:[%s2382] ss:$2 sm:$0xff]
    %v2384 = vld [vmem:[#allocation11] sm:$0xff]
    %v2385 = vld [vmem:[#allocation11 + $0x8] sm:$0xff]
    %v2386 = vld [vmem:[#allocation11 + $0x10] sm:$0xff]
    %v2387 = vld [vmem:[#allocation11 + $0x18] sm:$0xff]
    %v2388 = vld [vmem:[%s8] sm:$0x1]
    %v2390 = vlaneseq
    %v2391 = vshrl.u32 %v2390, 7
    %v2392 = vsub.s32 0, %v2391
    %v2393 = vrot.slane %v2388, %v2392
    %v2396 = vsel %vm215, %v2353, 0
    %v2399 = vsel %vm215, %v2355, 0
    %v2402 = vsel %vm215, %v2357, 0
    %v2405 = vsel %vm215, %v2359, 0
    %v2408 = vsel %vm215, %v2361, 0
    %v2411 = vsel %vm215, %v2363, 0
    %v2414 = vsel %vm215, %v2365, 0
    %v2417 = vsel %vm215, %v2367, 0
    %v2420 = vsel %vm215, %v2369, 0
    %v2423 = vsel %vm215, %v2371, 0
    %v2426 = vsel %vm215, %v2373, 0
    %v2429 = vsel %vm215, %v2375, 0
    %v2432 = vsel %vm215, %v2377, 0
    %v2435 = vsel %vm215, %v2379, 0
    %v2438 = vsel %vm215, %v2381, 0
    %v2441 = vsel %vm215, %v2383, 0
    %2443 = vmatprep.subr.mxu0 0.0
    %2444 = vmatpush1.msra.mxu0 %v2384
    %2445 = vmatprep.subr.mxu0 0.0
    %2446 = vmatpush1.msra.mxu0 %v2385
    %2447 = vmatprep.subr.mxu0 0.0
    %2448 = vmatpush1.msra.mxu0 %v2386
    %2449 = vmatprep.subr.mxu0 0.0
    %2450 = vmatpush1.msra.mxu0 %v2387
    %2451 = vmatprep.subr.mxu0 0.0
    %2452 = vmatpush1.msra.mxu0 0.0
    %2453 = vmatprep.subr.mxu0 0.0
    %2454 = vmatpush1.msra.mxu0 0.0
    %2455 = vmatprep.subr.mxu0 0.0
    %2456 = vmatpush1.msra.mxu0 0.0
    %2457 = vmatprep.subr.mxu0 0.0
    %2458 = vmatpush1.msra.mxu0 0.0
    %2459 = vmatprep.subr.mxu0 0.0
    %2460 = vmatpush1.msra.mxu0 0.0
    %2461 = vmatprep.subr.mxu0 0.0
    %2462 = vmatpush1.msra.mxu0 0.0
    %2463 = vmatprep.subr.mxu0 0.0
    %2464 = vmatpush1.msra.mxu0 0.0
    %2465 = vmatprep.subr.mxu0 0.0
    %2466 = vmatpush1.msra.mxu0 0.0
    %2467 = vmatprep.subr.mxu0 0.0
    %2468 = vmatpush1.msra.mxu0 0.0
    %2469 = vmatprep.subr.mxu0 0.0
    %2470 = vmatpush1.msra.mxu0 0.0
    %2471 = vmatprep.subr.mxu0 0.0
    %2472 = vmatpush1.msra.mxu0 0.0
    %2473 = vmatprep.subr.mxu0 0.0
    %2474 = vmatpush1.msra.mxu0 0.0
    %2475 = vmatprep.subr.mxu0 0.0
    %2476 = vmatpush1.msra.mxu0 0.0
    %2477 = vmatprep.subr.mxu0 0.0
    %2478 = vmatpush1.msra.mxu0 0.0
    %2479 = vmatprep.subr.mxu0 0.0
    %2480 = vmatpush1.msra.mxu0 0.0
    %2481 = vmatprep.subr.mxu0 0.0
    %2482 = vmatpush1.msra.mxu0 0.0
    %2483 = vmatprep.subr.mxu0 0.0
    %2484 = vmatpush1.msra.mxu0 0.0
    %2485 = vmatprep.subr.mxu0 0.0
    %2486 = vmatpush1.msra.mxu0 0.0
    %2487 = vmatprep.subr.mxu0 0.0
    %2488 = vmatpush1.msra.mxu0 0.0
    %2489 = vmatprep.subr.mxu0 0.0
    %2490 = vmatpush1.msra.mxu0 0.0
    %2491 = vmatprep.subr.mxu0 0.0
    %2492 = vmatpush1.msra.mxu0 0.0
    %2493 = vmatprep.subr.mxu0 0.0
    %2494 = vmatpush1.msra.mxu0 0.0
    %2495 = vmatprep.subr.mxu0 0.0
    %2496 = vmatpush1.msra.mxu0 0.0
    %2497 = vmatprep.subr.mxu0 0.0
    %2498 = vmatpush1.msra.mxu0 0.0
    %2499 = vmatprep.subr.mxu0 0.0
    %2500 = vmatpush1.msra.mxu0 0.0
    %2501 = vmatprep.subr.mxu0 0.0
    %2502 = vmatpush1.msra.mxu0 0.0
    %2503 = vmatprep.subr.mxu0 0.0
    %2504 = vmatpush1.msra.mxu0 0.0
    %2505 = vmatprep.subr.mxu0 0.0
    %2506 = vmatpush1.msra.mxu0 0.0
    %2507 = vmatprep.mubr.f32.mxu0 0.0
    %2508 = vmatmul.mubr.f32.gmra.mrb[0].mxu0 %v2396
    %v2509 = vpop.f32.mrb[0].mxu0
    %v2510 = vadd.f32 %v2393, %v2509
    %v2511 = vpop.f32.mrb[0].mxu0
    %2512 = vmatprep.mubr.f32.mxu0 0.0
    %2513 = vmatmul.mubr.f32.gmra.mrb[0].mxu0 %v2399
    %v2514 = vpop.f32.mrb[0].mxu0
    %v2515 = vadd.f32 %v2393, %v2514
    %v2516 = vpop.f32.mrb[0].mxu0
    %2517 = vmatprep.mubr.f32.mxu0 0.0
    %2518 = vmatmul.mubr.f32.gmra.mrb[0].mxu0 %v2402
    %v2519 = vpop.f32.mrb[0].mxu0
    %v2520 = vadd.f32 %v2393, %v2519
    %v2521 = vpop.f32.mrb[0].mxu0
    %2522 = vmatprep.mubr.f32.mxu0 0.0
    %2523 = vmatmul.mubr.f32.gmra.mrb[0].mxu0 %v2405
    %v2524 = vpop.f32.mrb[0].mxu0
    %v2525 = vadd.f32 %v2393, %v2524
    %v2526 = vpop.f32.mrb[0].mxu0
    %2527 = vmatprep.mubr.f32.mxu0 0.0
    %2528 = vmatmul.mubr.f32.gmra.mrb[0].mxu0 %v2408
    %v2529 = vpop.f32.mrb[0].mxu0
    %v2530 = vadd.f32 %v2393, %v2529
    %v2531 = vpop.f32.mrb[0].mxu0
    %2532 = vmatprep.mubr.f32.mxu0 0.0
    %2533 = vmatmul.mubr.f32.gmra.mrb[0].mxu0 %v2411
    %v2534 = vpop.f32.mrb[0].mxu0
    %v2535 = vadd.f32 %v2393, %v2534
    %v2536 = vpop.f32.mrb[0].mxu0
    %2537 = vmatprep.mubr.f32.mxu0 0.0
    %2538 = vmatmul.mubr.f32.gmra.mrb[0].mxu0 %v2414
    %v2539 = vpop.f32.mrb[0].mxu0
    %v2540 = vadd.f32 %v2393, %v2539
    %v2541 = vpop.f32.mrb[0].mxu0
    %2542 = vmatprep.mubr.f32.mxu0 0.0
    %2543 = vmatmul.mubr.f32.gmra.mrb[0].mxu0 %v2417
    %v2544 = vpop.f32.mrb[0].mxu0
    %v2545 = vadd.f32 %v2393, %v2544
    %v2546 = vpop.f32.mrb[0].mxu0
    %2547 = vmatprep.mubr.f32.mxu0 0.0
    %2548 = vmatmul.mubr.f32.gmra.mrb[0].mxu0 %v2420
    %v2549 = vpop.f32.mrb[0].mxu0
    %v2550 = vadd.f32 %v2393, %v2549
    %v2551 = vpop.f32.mrb[0].mxu0
    %2552 = vmatprep.mubr.f32.mxu0 0.0
    %2553 = vmatmul.mubr.f32.gmra.mrb[0].mxu0 %v2423
    %v2554 = vpop.f32.mrb[0].mxu0
    %v2555 = vadd.f32 %v2393, %v2554
    %v2556 = vpop.f32.mrb[0].mxu0
    %2557 = vmatprep.mubr.f32.mxu0 0.0
    %2558 = vmatmul.mubr.f32.gmra.mrb[0].mxu0 %v2426
    %v2559 = vpop.f32.mrb[0].mxu0
    %v2560 = vadd.f32 %v2393, %v2559
    %v2561 = vpop.f32.mrb[0].mxu0
    %2562 = vmatprep.mubr.f32.mxu0 0.0
    %2563 = vmatmul.mubr.f32.gmra.mrb[0].mxu0 %v2429
    %v2564 = vpop.f32.mrb[0].mxu0
    %v2565 = vadd.f32 %v2393, %v2564
    %v2566 = vpop.f32.mrb[0].mxu0
    %2567 = vmatprep.mubr.f32.mxu0 0.0
    %2568 = vmatmul.mubr.f32.gmra.mrb[0].mxu0 %v2432
    %v2569 = vpop.f32.mrb[0].mxu0
    %v2570 = vadd.f32 %v2393, %v2569
    %v2571 = vpop.f32.mrb[0].mxu0
    %2572 = vmatprep.mubr.f32.mxu0 0.0
    %2573 = vmatmul.mubr.f32.gmra.mrb[0].mxu0 %v2435
    %v2574 = vpop.f32.mrb[0].mxu0
    %v2575 = vadd.f32 %v2393, %v2574
    %v2576 = vpop.f32.mrb[0].mxu0
    %2577 = vmatprep.mubr.f32.mxu0 0.0
    %2578 = vmatmul.mubr.f32.gmra.mrb[0].mxu0 %v2438
    %v2579 = vpop.f32.mrb[0].mxu0
    %v2580 = vadd.f32 %v2393, %v2579
    %v2581 = vpop.f32.mrb[0].mxu0
    %2582 = vmatprep.mubr.f32.mxu0 0.0
    %2583 = vmatmul.mubr.f32.gmra.mrb[0].mxu0 %v2441
    %v2584 = vpop.f32.mrb[0].mxu0
    %v2585 = vadd.f32 %v2393, %v2584
    %v2586 = vpop.f32.mrb[0].mxu0
    %2587 = vdwg.mxu0
    %v2588 = vadd.f32 %v2275, %v2280
    %v2589 = vadd.f32 %v2588, %v2285
    %v2590 = vadd.f32 %v2589, %v2290
    %v2591 = vadd.f32 %v2590, %v2295
    %v2592 = vadd.f32 %v2591, %v2300
    %v2593 = vadd.f32 %v2592, %v2305
    %v2594 = vadd.f32 %v2593, %v2310
    %v2595 = vrot.slane %v2594, 4
    %v2596 = vadd.f32 %v2594, %v2595
    %v2597 = vrot.slane %v2596, 2
    %v2598 = vadd.f32 %v2596, %v2597
    %v2599 = vrot.slane %v2598, 1
    %v2600 = vadd.f32 %v2598, %v2599
    %v2601 = vrcp.pop 64.0
    %v2602 = vmul.f32 %v2600, %v2601
    %v2603 = vld [vmem:[#allocation12] sm:$0xff]
    %v2604 = vld [vmem:[#allocation12 + $0x8] sm:$0xff]
    %v2605 = vld [vmem:[#allocation12 + $0x10] sm:$0xff]
    %v2606 = vld [vmem:[#allocation12 + $0x18] sm:$0xff]
    %v2607 = vld [vmem:[#allocation12 + $0x20] sm:$0xff]
    %v2608 = vld [vmem:[#allocation12 + $0x28] sm:$0xff]
    %v2609 = vld [vmem:[#allocation12 + $0x30] sm:$0xff]
    %v2610 = vld [vmem:[#allocation12 + $0x38] sm:$0xff]
    %v2611 = vld [vmem:[#allocation12 + $0x40] sm:$0xff]
    %v2612 = vld [vmem:[#allocation12 + $0x48] sm:$0xff]
    %v2613 = vld [vmem:[#allocation12 + $0x50] sm:$0xff]
    %v2614 = vld [vmem:[#allocation12 + $0x58] sm:$0xff]
    %v2615 = vld [vmem:[#allocation12 + $0x60] sm:$0xff]
    %v2616 = vld [vmem:[#allocation12 + $0x68] sm:$0xff]
    %v2617 = vld [vmem:[#allocation12 + $0x70] sm:$0xff]
    %v2618 = vld [vmem:[#allocation12 + $0x78] sm:$0xff]
    %v2619 = vld [vmem:[%s10] sm:$0x1]
    %2620 = vmatprep.subr.mxu0 0.0
    %2621 = vmatpush1.msra.mxu0 %v2603
    %2622 = vmatprep.subr.mxu0 0.0
    %2623 = vmatpush1.msra.mxu0 %v2604
    %2624 = vmatprep.subr.mxu0 0.0
    %2625 = vmatpush1.msra.mxu0 %v2605
    %2626 = vmatprep.subr.mxu0 0.0
    %2627 = vmatpush1.msra.mxu0 %v2606
    %2628 = vmatprep.subr.mxu0 0.0
    %2629 = vmatpush1.msra.mxu0 %v2607
    %2630 = vmatprep.subr.mxu0 0.0
    %2631 = vmatpush1.msra.mxu0 %v2608
    %2632 = vmatprep.subr.mxu0 0.0
    %2633 = vmatpush1.msra.mxu0 %v2609
    %2634 = vmatprep.subr.mxu0 0.0
    %2635 = vmatpush1.msra.mxu0 %v2610
    %2636 = vmatprep.subr.mxu0 0.0
    %2637 = vmatpush1.msra.mxu0 %v2611
    %2638 = vmatprep.subr.mxu0 0.0
    %2639 = vmatpush1.msra.mxu0 %v2612
    %2640 = vmatprep.subr.mxu0 0.0
    %2641 = vmatpush1.msra.mxu0 %v2613
    %2642 = vmatprep.subr.mxu0 0.0
    %2643 = vmatpush1.msra.mxu0 %v2614
    %2644 = vmatprep.subr.mxu0 0.0
    %2645 = vmatpush1.msra.mxu0 %v2615
    %2646 = vmatprep.subr.mxu0 0.0
    %2647 = vmatpush1.msra.mxu0 %v2616
    %2648 = vmatprep.subr.mxu0 0.0
    %2649 = vmatpush1.msra.mxu0 %v2617
    %2650 = vmatprep.subr.mxu0 0.0
    %2651 = vmatpush1.msra.mxu0 %v2618
    %2652 = vmatprep.subr.mxu0 0.0
    %2653 = vmatpush1.msra.mxu0 0.0
    %2654 = vmatprep.subr.mxu0 0.0
    %2655 = vmatpush1.msra.mxu0 0.0
    %2656 = vmatprep.subr.mxu0 0.0
    %2657 = vmatpush1.msra.mxu0 0.0
    %2658 = vmatprep.subr.mxu0 0.0
    %2659 = vmatpush1.msra.mxu0 0.0
    %2660 = vmatprep.subr.mxu0 0.0
    %2661 = vmatpush1.msra.mxu0 0.0
    %2662 = vmatprep.subr.mxu0 0.0
    %2663 = vmatpush1.msra.mxu0 0.0
    %2664 = vmatprep.subr.mxu0 0.0
    %2665 = vmatpush1.msra.mxu0 0.0
    %2666 = vmatprep.subr.mxu0 0.0
    %2667 = vmatpush1.msra.mxu0 0.0
    %2668 = vmatprep.subr.mxu0 0.0
    %2669 = vmatpush1.msra.mxu0 0.0
    %2670 = vmatprep.subr.mxu0 0.0
    %2671 = vmatpush1.msra.mxu0 0.0
    %2672 = vmatprep.subr.mxu0 0.0
    %2673 = vmatpush1.msra.mxu0 0.0
    %2674 = vmatprep.subr.mxu0 0.0
    %2675 = vmatpush1.msra.mxu0 0.0
    %2676 = vmatprep.subr.mxu0 0.0
    %2677 = vmatpush1.msra.mxu0 0.0
    %2678 = vmatprep.subr.mxu0 0.0
    %2679 = vmatpush1.msra.mxu0 0.0
    %2680 = vmatprep.subr.mxu0 0.0
    %2681 = vmatpush1.msra.mxu0 0.0
    %2682 = vmatprep.subr.mxu0 0.0
    %2683 = vmatpush1.msra.mxu0 0.0
    %2684 = vmatprep.mubr.f32.mxu0 0.0
    %2685 = vmatmul.mubr.f32.gmra.mrb[0].mxu0 %v2602
    %v2686 = vpop.f32.mrb[0].mxu0
    %v2687 = vadd.f32 %v2619, %v2686
    %v2688 = vpop.f32.mrb[0].mxu0
    %2689 = vdwg.mxu0
    %v2690 = vmax.f32 %v2687, 0.0
    %v2691 = vld [vmem:[#allocation14] sm:$0xff]
    %v2692 = vld [vmem:[#allocation14 + $0x8] sm:$0xff]
    %v2693 = vld [vmem:[#allocation14 + $0x10] sm:$0xff]
    %v2694 = vld [vmem:[#allocation14 + $0x18] sm:$0xff]
    %v2695 = vld [vmem:[#allocation14 + $0x20] sm:$0xff]
    %v2696 = vld [vmem:[#allocation14 + $0x28] sm:$0xff]
    %v2697 = vld [vmem:[#allocation14 + $0x30] sm:$0xff]
    %v2698 = vld [vmem:[#allocation14 + $0x38] sm:$0xff]
    %v2699 = vld [vmem:[#allocation14 + $0x40] sm:$0xff]
    %v2700 = vld [vmem:[#allocation14 + $0x48] sm:$0xff]
    %v2701 = vld [vmem:[#allocation14 + $0x50] sm:$0xff]
    %v2702 = vld [vmem:[#allocation14 + $0x58] sm:$0xff]
    %v2703 = vld [vmem:[#allocation14 + $0x60] sm:$0xff]
    %v2704 = vld [vmem:[#allocation14 + $0x68] sm:$0xff]
    %v2705 = vld [vmem:[#allocation14 + $0x70] sm:$0xff]
    %v2706 = vld [vmem:[#allocation14 + $0x78] sm:$0xff]
    %v2707 = vld [vmem:[%s12] sm:$0x1]
    %2708 = vmatprep.subr.mxu0 0.0
    %2709 = vmatpush1.msra.mxu0 %v2691
    %2710 = vmatprep.subr.mxu0 0.0
    %2711 = vmatpush1.msra.mxu0 %v2692
    %2712 = vmatprep.subr.mxu0 0.0
    %2713 = vmatpush1.msra.mxu0 %v2693
    %2714 = vmatprep.subr.mxu0 0.0
    %2715 = vmatpush1.msra.mxu0 %v2694
    %2716 = vmatprep.subr.mxu0 0.0
    %2717 = vmatpush1.msra.mxu0 %v2695
    %2718 = vmatprep.subr.mxu0 0.0
    %2719 = vmatpush1.msra.mxu0 %v2696
    %2720 = vmatprep.subr.mxu0 0.0
    %2721 = vmatpush1.msra.mxu0 %v2697
    %2722 = vmatprep.subr.mxu0 0.0
    %2723 = vmatpush1.msra.mxu0 %v2698
    %2724 = vmatprep.subr.mxu0 0.0
    %2725 = vmatpush1.msra.mxu0 %v2699
    %2726 = vmatprep.subr.mxu0 0.0
    %2727 = vmatpush1.msra.mxu0 %v2700
    %2728 = vmatprep.subr.mxu0 0.0
    %2729 = vmatpush1.msra.mxu0 %v2701
    %2730 = vmatprep.subr.mxu0 0.0
    %2731 = vmatpush1.msra.mxu0 %v2702
    %2732 = vmatprep.subr.mxu0 0.0
    %2733 = vmatpush1.msra.mxu0 %v2703
    %2734 = vmatprep.subr.mxu0 0.0
    %2735 = vmatpush1.msra.mxu0 %v2704
    %2736 = vmatprep.subr.mxu0 0.0
    %2737 = vmatpush1.msra.mxu0 %v2705
    %2738 = vmatprep.subr.mxu0 0.0
    %2739 = vmatpush1.msra.mxu0 %v2706
    %2740 = vmatprep.subr.mxu0 0.0
    %2741 = vmatpush1.msra.mxu0 0.0
    %2742 = vmatprep.subr.mxu0 0.0
    %2743 = vmatpush1.msra.mxu0 0.0
    %2744 = vmatprep.subr.mxu0 0.0
    %2745 = vmatpush1.msra.mxu0 0.0
    %2746 = vmatprep.subr.mxu0 0.0
    %2747 = vmatpush1.msra.mxu0 0.0
    %2748 = vmatprep.subr.mxu0 0.0
    %2749 = vmatpush1.msra.mxu0 0.0
    %2750 = vmatprep.subr.mxu0 0.0
    %2751 = vmatpush1.msra.mxu0 0.0
    %2752 = vmatprep.subr.mxu0 0.0
    %2753 = vmatpush1.msra.mxu0 0.0
    %2754 = vmatprep.subr.mxu0 0.0
    %2755 = vmatpush1.msra.mxu0 0.0
    %2756 = vmatprep.subr.mxu0 0.0
    %2757 = vmatpush1.msra.mxu0 0.0
    %2758 = vmatprep.subr.mxu0 0.0
    %2759 = vmatpush1.msra.mxu0 0.0
    %2760 = vmatprep.subr.mxu0 0.0
    %2761 = vmatpush1.msra.mxu0 0.0
    %2762 = vmatprep.subr.mxu0 0.0
    %2763 = vmatpush1.msra.mxu0 0.0
    %2764 = vmatprep.subr.mxu0 0.0
    %2765 = vmatpush1.msra.mxu0 0.0
    %2766 = vmatprep.subr.mxu0 0.0
    %2767 = vmatpush1.msra.mxu0 0.0
    %2768 = vmatprep.subr.mxu0 0.0
    %2769 = vmatpush1.msra.mxu0 0.0
    %2770 = vmatprep.subr.mxu0 0.0
    %2771 = vmatpush1.msra.mxu0 0.0
    %2772 = vmatprep.mubr.f32.mxu0 0.0
    %2773 = vmatmul.mubr.f32.gmra.mrb[0].mxu0 %v2690
    %v2774 = vpop.f32.mrb[0].mxu0
    %v2775 = vadd.f32 %v2707, %v2774
    %v2776 = vpop.f32.mrb[0].mxu0
    %2777 = vdwg.mxu0
    %v2778 = vxor.u32 %v2775, 2147483648
    %v2779 = vmul.f32 %v2778, 1.442695
    %v2780 = vpow.pop %v2779
    %v2781 = vadd.f32 %v2780, 1.0
    %v2782 = vrcp.pop %v2781
    %v2783 = vmul.f32 1.0, %v2782
    %v2784 = vlaneseq
    %v2785 = vshrl.u32 %v2784, 7
    %v2786 = vsub.s32 0, %v2785
    %v2787 = vrot.slane %v2783, %v2786
    %v2788 = vmul.f32 %v2275, %v2787
    %v2789 = vmul.f32 %v2280, %v2787
    %v2790 = vmul.f32 %v2285, %v2787
    %v2791 = vmul.f32 %v2290, %v2787
    %v2792 = vmul.f32 %v2295, %v2787
    %v2793 = vmul.f32 %v2300, %v2787
    %v2794 = vmul.f32 %v2305, %v2787
    %v2795 = vmul.f32 %v2310, %v2787
    %v2796 = vadd.f32 %v2788, %v2510
    %v2797 = vadd.f32 %v2789, %v2515
    %v2798 = vadd.f32 %v2790, %v2520
    %v2799 = vadd.f32 %v2791, %v2525
    %v2800 = vadd.f32 %v2792, %v2530
    %v2801 = vadd.f32 %v2793, %v2535
    %v2802 = vadd.f32 %v2794, %v2540
    %v2803 = vadd.f32 %v2795, %v2545
    %v2804 = vmax.f32 %v2796, 0.0
    %v2805 = vmax.f32 %v2797, 0.0
    %v2806 = vmax.f32 %v2798, 0.0
    %v2807 = vmax.f32 %v2799, 0.0
    %v2808 = vmax.f32 %v2800, 0.0
    %v2809 = vmax.f32 %v2801, 0.0
    %v2810 = vmax.f32 %v2802, 0.0
    %v2811 = vmax.f32 %v2803, 0.0
    %2812 = vst [vmem:[#allocation15] sm:$0xff] %v2804
    %2813 = vst [vmem:[#allocation15 + $0x8] sm:$0xff] %v2805
    %2814 = vst [vmem:[#allocation15 + $0x10] sm:$0xff] %v2806
    %2815 = vst [vmem:[#allocation15 + $0x18] sm:$0xff] %v2807
    %2816 = vst [vmem:[#allocation15 + $0x20] sm:$0xff] %v2808
    %2817 = vst [vmem:[#allocation15 + $0x28] sm:$0xff] %v2809
    %2818 = vst [vmem:[#allocation15 + $0x30] sm:$0xff] %v2810
    %2819 = vst [vmem:[#allocation15 + $0x38] sm:$0xff] %v2811
    %v2820 = vadd.f32 %v2315, %v2320
    %v2821 = vadd.f32 %v2820, %v2325
    %v2822 = vadd.f32 %v2821, %v2330
    %v2823 = vadd.f32 %v2822, %v2335
    %v2824 = vadd.f32 %v2823, %v2340
    %v2825 = vadd.f32 %v2824, %v2345
    %v2826 = vadd.f32 %v2825, %v2350
    %v2827 = vrot.slane %v2826, 4
    %v2828 = vadd.f32 %v2826, %v2827
    %v2829 = vrot.slane %v2828, 2
    %v2830 = vadd.f32 %v2828, %v2829
    %v2831 = vrot.slane %v2830, 1
    %v2832 = vadd.f32 %v2830, %v2831
    %v2833 = vmul.f32 %v2832, %v2601
    %v2834 = vld [vmem:[#allocation12] sm:$0xff]
    %v2835 = vld [vmem:[#allocation12 + $0x8] sm:$0xff]
    %v2836 = vld [vmem:[#allocation12 + $0x10] sm:$0xff]
    %v2837 = vld [vmem:[#allocation12 + $0x18] sm:$0xff]
    %v2838 = vld [vmem:[#allocation12 + $0x20] sm:$0xff]
    %v2839 = vld [vmem:[#allocation12 + $0x28] sm:$0xff]
    %v2840 = vld [vmem:[#allocation12 + $0x30] sm:$0xff]
    %v2841 = vld [vmem:[#allocation12 + $0x38] sm:$0xff]
    %v2842 = vld [vmem:[#allocation12 + $0x40] sm:$0xff]
    %v2843 = vld [vmem:[#allocation12 + $0x48] sm:$0xff]
    %v2844 = vld [vmem:[#allocation12 + $0x50] sm:$0xff]
    %v2845 = vld [vmem:[#allocation12 + $0x58] sm:$0xff]
    %v2846 = vld [vmem:[#allocation12 + $0x60] sm:$0xff]
    %v2847 = vld [vmem:[#allocation12 + $0x68] sm:$0xff]
    %v2848 = vld [vmem:[#allocation12 + $0x70] sm:$0xff]
    %v2849 = vld [vmem:[#allocation12 + $0x78] sm:$0xff]
    %v2850 = vld [vmem:[%s10] sm:$0x1]
    %2851 = vmatprep.subr.mxu0 0.0
    %2852 = vmatpush1.msra.mxu0 %v2834
    %2853 = vmatprep.subr.mxu0 0.0
    %2854 = vmatpush1.msra.mxu0 %v2835
    %2855 = vmatprep.subr.mxu0 0.0
    %2856 = vmatpush1.msra.mxu0 %v2836
    %2857 = vmatprep.subr.mxu0 0.0
    %2858 = vmatpush1.msra.mxu0 %v2837
    %2859 = vmatprep.subr.mxu0 0.0
    %2860 = vmatpush1.msra.mxu0 %v2838
    %2861 = vmatprep.subr.mxu0 0.0
    %2862 = vmatpush1.msra.mxu0 %v2839
    %2863 = vmatprep.subr.mxu0 0.0
    %2864 = vmatpush1.msra.mxu0 %v2840
    %2865 = vmatprep.subr.mxu0 0.0
    %2866 = vmatpush1.msra.mxu0 %v2841
    %2867 = vmatprep.subr.mxu0 0.0
    %2868 = vmatpush1.msra.mxu0 %v2842
    %2869 = vmatprep.subr.mxu0 0.0
    %2870 = vmatpush1.msra.mxu0 %v2843
    %2871 = vmatprep.subr.mxu0 0.0
    %2872 = vmatpush1.msra.mxu0 %v2844
    %2873 = vmatprep.subr.mxu0 0.0
    %2874 = vmatpush1.msra.mxu0 %v2845
    %2875 = vmatprep.subr.mxu0 0.0
    %2876 = vmatpush1.msra.mxu0 %v2846
    %2877 = vmatprep.subr.mxu0 0.0
    %2878 = vmatpush1.msra.mxu0 %v2847
    %2879 = vmatprep.subr.mxu0 0.0
    %2880 = vmatpush1.msra.mxu0 %v2848
    %2881 = vmatprep.subr.mxu0 0.0
    %2882 = vmatpush1.msra.mxu0 %v2849
    %2883 = vmatprep.subr.mxu0 0.0
    %2884 = vmatpush1.msra.mxu0 0.0
    %2885 = vmatprep.subr.mxu0 0.0
    %2886 = vmatpush1.msra.mxu0 0.0
    %2887 = vmatprep.subr.mxu0 0.0
    %2888 = vmatpush1.msra.mxu0 0.0
    %2889 = vmatprep.subr.mxu0 0.0
    %2890 = vmatpush1.msra.mxu0 0.0
    %2891 = vmatprep.subr.mxu0 0.0
    %2892 = vmatpush1.msra.mxu0 0.0
    %2893 = vmatprep.subr.mxu0 0.0
    %2894 = vmatpush1.msra.mxu0 0.0
    %2895 = vmatprep.subr.mxu0 0.0
    %2896 = vmatpush1.msra.mxu0 0.0
    %2897 = vmatprep.subr.mxu0 0.0
    %2898 = vmatpush1.msra.mxu0 0.0
    %2899 = vmatprep.subr.mxu0 0.0
    %2900 = vmatpush1.msra.mxu0 0.0
    %2901 = vmatprep.subr.mxu0 0.0
    %2902 = vmatpush1.msra.mxu0 0.0
    %2903 = vmatprep.subr.mxu0 0.0
    %2904 = vmatpush1.msra.mxu0 0.0
    %2905 = vmatprep.subr.mxu0 0.0
    %2906 = vmatpush1.msra.mxu0 0.0
    %2907 = vmatprep.subr.mxu0 0.0
    %2908 = vmatpush1.msra.mxu0 0.0
    %2909 = vmatprep.subr.mxu0 0.0
    %2910 = vmatpush1.msra.mxu0 0.0
    %2911 = vmatprep.subr.mxu0 0.0
    %2912 = vmatpush1.msra.mxu0 0.0
    %2913 = vmatprep.subr.mxu0 0.0
    %2914 = vmatpush1.msra.mxu0 0.0
    %2915 = vmatprep.mubr.f32.mxu0 0.0
    %2916 = vmatmul.mubr.f32.gmra.mrb[0].mxu0 %v2833
    %v2917 = vpop.f32.mrb[0].mxu0
    %v2918 = vadd.f32 %v2850, %v2917
    %v2919 = vpop.f32.mrb[0].mxu0
    %2920 = vdwg.mxu0
    %v2921 = vmax.f32 %v2918, 0.0
    %v2922 = vld [vmem:[#allocation14] sm:$0xff]
    %v2923 = vld [vmem:[#allocation14 + $0x8] sm:$0xff]
    %v2924 = vld [vmem:[#allocation14 + $0x10] sm:$0xff]
    %v2925 = vld [vmem:[#allocation14 + $0x18] sm:$0xff]
    %v2926 = vld [vmem:[#allocation14 + $0x20] sm:$0xff]
    %v2927 = vld [vmem:[#allocation14 + $0x28] sm:$0xff]
    %v2928 = vld [vmem:[#allocation14 + $0x30] sm:$0xff]
    %v2929 = vld [vmem:[#allocation14 + $0x38] sm:$0xff]
    %v2930 = vld [vmem:[#allocation14 + $0x40] sm:$0xff]
    %v2931 = vld [vmem:[#allocation14 + $0x48] sm:$0xff]
    %v2932 = vld [vmem:[#allocation14 + $0x50] sm:$0xff]
    %v2933 = vld [vmem:[#allocation14 + $0x58] sm:$0xff]
    %v2934 = vld [vmem:[#allocation14 + $0x60] sm:$0xff]
    %v2935 = vld [vmem:[#allocation14 + $0x68] sm:$0xff]
    %v2936 = vld [vmem:[#allocation14 + $0x70] sm:$0xff]
    %v2937 = vld [vmem:[#allocation14 + $0x78] sm:$0xff]
    %v2938 = vld [vmem:[%s12] sm:$0x1]
    %2939 = vmatprep.subr.mxu0 0.0
    %2940 = vmatpush1.msra.mxu0 %v2922
    %2941 = vmatprep.subr.mxu0 0.0
    %2942 = vmatpush1.msra.mxu0 %v2923
    %2943 = vmatprep.subr.mxu0 0.0
    %2944 = vmatpush1.msra.mxu0 %v2924
    %2945 = vmatprep.subr.mxu0 0.0
    %2946 = vmatpush1.msra.mxu0 %v2925
    %2947 = vmatprep.subr.mxu0 0.0
    %2948 = vmatpush1.msra.mxu0 %v2926
    %2949 = vmatprep.subr.mxu0 0.0
    %2950 = vmatpush1.msra.mxu0 %v2927
    %2951 = vmatprep.subr.mxu0 0.0
    %2952 = vmatpush1.msra.mxu0 %v2928
    %2953 = vmatprep.subr.mxu0 0.0
    %2954 = vmatpush1.msra.mxu0 %v2929
    %2955 = vmatprep.subr.mxu0 0.0
    %2956 = vmatpush1.msra.mxu0 %v2930
    %2957 = vmatprep.subr.mxu0 0.0
    %2958 = vmatpush1.msra.mxu0 %v2931
    %2959 = vmatprep.subr.mxu0 0.0
    %2960 = vmatpush1.msra.mxu0 %v2932
    %2961 = vmatprep.subr.mxu0 0.0
    %2962 = vmatpush1.msra.mxu0 %v2933
    %2963 = vmatprep.subr.mxu0 0.0
    %2964 = vmatpush1.msra.mxu0 %v2934
    %2965 = vmatprep.subr.mxu0 0.0
    %2966 = vmatpush1.msra.mxu0 %v2935
    %2967 = vmatprep.subr.mxu0 0.0
    %2968 = vmatpush1.msra.mxu0 %v2936
    %2969 = vmatprep.subr.mxu0 0.0
    %2970 = vmatpush1.msra.mxu0 %v2937
    %2971 = vmatprep.subr.mxu0 0.0
    %2972 = vmatpush1.msra.mxu0 0.0
    %2973 = vmatprep.subr.mxu0 0.0
    %2974 = vmatpush1.msra.mxu0 0.0
    %2975 = vmatprep.subr.mxu0 0.0
    %2976 = vmatpush1.msra.mxu0 0.0
    %2977 = vmatprep.subr.mxu0 0.0
    %2978 = vmatpush1.msra.mxu0 0.0
    %2979 = vmatprep.subr.mxu0 0.0
    %2980 = vmatpush1.msra.mxu0 0.0
    %2981 = vmatprep.subr.mxu0 0.0
    %2982 = vmatpush1.msra.mxu0 0.0
    %2983 = vmatprep.subr.mxu0 0.0
    %2984 = vmatpush1.msra.mxu0 0.0
    %2985 = vmatprep.subr.mxu0 0.0
    %2986 = vmatpush1.msra.mxu0 0.0
    %2987 = vmatprep.subr.mxu0 0.0
    %2988 = vmatpush1.msra.mxu0 0.0
    %2989 = vmatprep.subr.mxu0 0.0
    %2990 = vmatpush1.msra.mxu0 0.0
    %2991 = vmatprep.subr.mxu0 0.0
    %2992 = vmatpush1.msra.mxu0 0.0
    %2993 = vmatprep.subr.mxu0 0.0
    %2994 = vmatpush1.msra.mxu0 0.0
    %2995 = vmatprep.subr.mxu0 0.0
    %2996 = vmatpush1.msra.mxu0 0.0
    %2997 = vmatprep.subr.mxu0 0.0
    %2998 = vmatpush1.msra.mxu0 0.0
    %2999 = vmatprep.subr.mxu0 0.0
    %3000 = vmatpush1.msra.mxu0 0.0
    %3001 = vmatprep.subr.mxu0 0.0
    %3002 = vmatpush1.msra.mxu0 0.0
    %3003 = vmatprep.mubr.f32.mxu0 0.0
    %3004 = vmatmul.mubr.f32.gmra.mrb[0].mxu0 %v2921
    %v3005 = vpop.f32.mrb[0].mxu0
    %v3006 = vadd.f32 %v2938, %v3005
    %v3007 = vpop.f32.mrb[0].mxu0
    %3008 = vdwg.mxu0
    %v3009 = vxor.u32 %v3006, 2147483648
    %v3010 = vmul.f32 %v3009, 1.442695
    %v3011 = vpow.pop %v3010
    %v3012 = vadd.f32 %v3011, 1.0
    %v3013 = vrcp.pop %v3012
    %v3014 = vmul.f32 1.0, %v3013
    %v3015 = vlaneseq
    %v3016 = vshrl.u32 %v3015, 7
    %v3017 = vsub.s32 0, %v3016
    %v3018 = vrot.slane %v3014, %v3017
    %v3019 = vmul.f32 %v2315, %v3018
    %v3020 = vmul.f32 %v2320, %v3018
    %v3021 = vmul.f32 %v2325, %v3018
    %v3022 = vmul.f32 %v2330, %v3018
    %v3023 = vmul.f32 %v2335, %v3018
    %v3024 = vmul.f32 %v2340, %v3018
    %v3025 = vmul.f32 %v2345, %v3018
    %v3026 = vmul.f32 %v2350, %v3018
    %v3027 = vadd.f32 %v3019, %v2550
    %v3028 = vadd.f32 %v3020, %v2555
    %v3029 = vadd.f32 %v3021, %v2560
    %v3030 = vadd.f32 %v3022, %v2565
    %v3031 = vadd.f32 %v3023, %v2570
    %v3032 = vadd.f32 %v3024, %v2575
    %v3033 = vadd.f32 %v3025, %v2580
    %v3034 = vadd.f32 %v3026, %v2585
    %v3035 = vmax.f32 %v3027, 0.0
    %v3036 = vmax.f32 %v3028, 0.0
    %v3037 = vmax.f32 %v3029, 0.0
    %v3038 = vmax.f32 %v3030, 0.0
    %v3039 = vmax.f32 %v3031, 0.0
    %v3040 = vmax.f32 %v3032, 0.0
    %v3041 = vmax.f32 %v3033, 0.0
    %v3042 = vmax.f32 %v3034, 0.0
    %s3043 = scalar_lea.vmem [#allocation15], 64
    %3044 = vst [vmem:[%s3043] sm:$0xff] %v3035
    %3045 = vst [vmem:[%s3043 + $0x8] sm:$0xff] %v3036
    %3046 = vst [vmem:[%s3043 + $0x10] sm:$0xff] %v3037
    %3047 = vst [vmem:[%s3043 + $0x18] sm:$0xff] %v3038
    %3048 = vst [vmem:[%s3043 + $0x20] sm:$0xff] %v3039
    %3049 = vst [vmem:[%s3043 + $0x28] sm:$0xff] %v3040
    %3050 = vst [vmem:[%s3043 + $0x30] sm:$0xff] %v3041
    %3051 = vst [vmem:[%s3043 + $0x38] sm:$0xff] %v3042
    // Predicated region
    $region82: #{tpu_custom_call.1} parent=1 // pred_check
      _
    $region83: #{tpu_custom_call.1} parent=1 // pred_check_branch
      %3053 = sbr.rel (0) target = $region85
    $region84: #{tpu_custom_call.1} parent=1 // pred_region
      %s3055 = ssub.s32 2048, 2048
      %3056 = vsyncadd [#allocation5], %s3055
      %s3057 = sshll.u32 [#allocation15], 4
      %s3058 = int_to_ptr.vmem [resolvable:$true] %s3057
      %3063 = dma.vmem_to_hbm [thread:$0]  %s3058, 2048, %s13, [#allocation5], 128, 128, 8
    $region85: #{tpu_custom_call.1} parent=1 // pred_fallthru
      _
    // Predicated region
    $region86: #{tpu_custom_call.1} parent=1 // pred_check
      _
    $region87: #{tpu_custom_call.1} parent=1 // pred_check_branch
      %3065 = sbr.rel (0) target = $region89
    $region88: #{tpu_custom_call.1} parent=1 // pred_region
      %3066 = dma.done [#allocation5], 2048
    $region89: #{tpu_custom_call.1} parent=1 // pred_fallthru
      _
    %3067 = vsyncpa [#allocation4], 1
    %3068 = vsyncpa [#allocation7], 1
    %3069 = vsyncpa [#allocation10], 1
    %3070 = vsyncpa [#allocation13], 1
    %3071 = vsyncpa [#allocation5], 1

</llo_original>
